<compile_context>
chip_gen: v6e
topology: v6e:2x2x1
jax: 0.10.0
libtpu: 0.0.40
codegen_flags: <defaults>
</compile_context>

<pallas_src>
import functools

import numpy as np
import jax
import jax.numpy as jnp
from jax import lax
from jax.experimental import pallas as pl
from jax.experimental.pallas import tpu as pltpu

EPS = 1e-5


# ----------------------------------------------------------------------------
# Pallas kernel: the whole ResEncoder forward, fused.
#
# Activation layout: (R, L) = (N*D, H*W*C)   (channels-last, folded into lanes)
#   row r = n*D + d,   col j = (h*W + w)*C + c
# ----------------------------------------------------------------------------
def _make_res_encoder_kernel(R, inv_count):
    f32 = jnp.float32
    bf16 = jnp.bfloat16

    def kernel(x_ref, w1_ref, w2_ref, wr_ref, dmask_ref, proj_ref, projt_ref,
               ch_ref, out_ref):
        x = x_ref[...]                         # (R, K1) f32 input slab
        mneg = dmask_ref[0]                    # (R, 1) f32: 0 on rows with d == 0
        mpos = dmask_ref[1]                    # (R, 1) f32: 0 on rows with d == D-1
        proj = proj_ref[...]                   # (L, C)  f32 0/1 lane -> channel
        projt = projt_ref[...]                 # (C, L)  f32 0/1 channel -> lane

        def conv3x3x3(act, w_ref):
            # act: (R, K) f32.  One bf16 MXU matmul per depth tap; the (kh, kw, cin)
            # taps are folded into K by block-Toeplitz weights (H/W zero-padding is
            # baked in host-side).  The depth halo is a row roll (XLU) + a 0/1 row
            # mask (VPU) -- no MXU shift matmuls, no (R,R) operands.
            acc = jnp.dot(act.astype(bf16), w_ref[1], preferred_element_type=f32)
            a_dn = pltpu.roll(act, shift=1, axis=0) * mneg          # row r -> act[r-1]
            acc = acc + jnp.dot(a_dn.astype(bf16), w_ref[0],
                                preferred_element_type=f32)
            a_up = pltpu.roll(act, shift=R - 1, axis=0) * mpos      # row r -> act[r+1]
            acc = acc + jnp.dot(a_up.astype(bf16), w_ref[2],
                                preferred_element_type=f32)
            return acc

        def bn_relu(acc, gamma_c, beta_c):
            # Training-mode BatchNorm3d (biased variance) over all N*D*H*W positions.
            # Reduce rows first, project lanes->channels with a tiny 0/1 matmul,
            # then broadcast the per-channel affine back to lanes.  All in f32.
            s1 = jnp.sum(acc, axis=0, keepdims=True)                 # (1, L)
            s2 = jnp.sum(acc * acc, axis=0, keepdims=True)           # (1, L)
            s1c = jnp.dot(s1, proj, preferred_element_type=f32)      # (1, C)
            s2c = jnp.dot(s2, proj, preferred_element_type=f32)      # (1, C)
            mean_c = s1c * inv_count
            var_c = s2c * inv_count - mean_c * mean_c
            scale_c = gamma_c * lax.rsqrt(var_c + EPS)               # (1, C)
            shift_c = beta_c - mean_c * scale_c                      # (1, C)
            scale_l = jnp.dot(scale_c, projt, preferred_element_type=f32)   # (1, L)
            shift_l = jnp.dot(shift_c, projt, preferred_element_type=f32)   # (1, L)
            return jnp.maximum(acc * scale_l + shift_l, 0.0)

        # conv1 + bn1 + relu   (conv bias b1 dropped: cancelled by BN centering)
        y1 = bn_relu(conv3x3x3(x, w1_ref), ch_ref[0:1, :], ch_ref[1:2, :])
        # conv2 + bn2 + relu   (conv bias b2 dropped likewise)
        y2 = bn_relu(conv3x3x3(y1, w2_ref), ch_ref[2:3, :], ch_ref[3:4, :])

        # 1x1 residual conv — computed last so only the small x slab (not an (R,L)
        # residual slab) stays live through conv2 / BN2.
        br_l = jnp.dot(ch_ref[4:5, :], projt, preferred_element_type=f32)    # (1, L)
        res = jnp.dot(x.astype(bf16), wr_ref[...], preferred_element_type=f32) + br_l

        out_ref[...] = jnp.maximum(y2 + res, 0.0)

    return kernel


# ----------------------------------------------------------------------------
# Host-side operand packing (numpy), memoized so it runs once per parameter set
# ----------------------------------------------------------------------------
def _toeplitz_hw(w_dhwio, H, W):
    """(3,3,3,Ci,Co) weight -> (3, H*W*Ci, H*W*Co) block-Toeplitz (one per kd).
    H/W zero-padding is baked in by omitting out-of-bounds taps."""
    w = np.asarray(w_dhwio, np.float32)
    Ci, Co = w.shape[3], w.shape[4]
    t = np.zeros((3, H * W * Ci, H * W * Co), np.float32)
    for kd in range(3):
        for kh in range(3):
            for kw in range(3):
                for ho in range(H):
                    hi = ho + kh - 1
                    if not (0 <= hi < H):
                        continue
                    for wo in range(W):
                        wi = wo + kw - 1
                        if not (0 <= wi < W):
                            continue
                        r0 = (hi * W + wi) * Ci
                        c0 = (ho * W + wo) * Co
                        t[kd, r0:r0 + Ci, c0:c0 + Co] = w[kd, kh, kw]
    return t


def _toeplitz_1x1(wr_io, H, W):
    """(Ci, Co) 1x1 conv weight -> (H*W*Ci, H*W*Co) block-diagonal matrix."""
    w = np.asarray(wr_io, np.float32)
    Ci, Co = w.shape
    t = np.zeros((H * W * Ci, H * W * Co), np.float32)
    for p in range(H * W):
        t[p * Ci:(p + 1) * Ci, p * Co:(p + 1) * Co] = w
    return t


@functools.lru_cache(maxsize=16)
def _packed_weights(w1_b, w2_b, wr_b, cin, cout, H, W):
    w1 = np.frombuffer(w1_b, np.float32).reshape(3, 3, 3, cin, cout)
    w2 = np.frombuffer(w2_b, np.float32).reshape(3, 3, 3, cout, cout)
    wr = np.frombuffer(wr_b, np.float32).reshape(cin, cout)
    # bf16 weights: half the HBM traffic / VMEM footprint, native MXU dtype.
    return (jnp.asarray(_toeplitz_hw(w1, H, W), jnp.bfloat16),
            jnp.asarray(_toeplitz_hw(w2, H, W), jnp.bfloat16),
            jnp.asarray(_toeplitz_1x1(wr, H, W), jnp.bfloat16))


@functools.lru_cache(maxsize=16)
def _structural_operands(N, D, H, W, Cout):
    R, L = N * D, H * W * Cout
    d = np.arange(R) % D
    dmask = np.zeros((2, R, 1), np.float32)
    dmask[0, :, 0] = (d != 0).astype(np.float32)        # valid rows for the d-1 tap
    dmask[1, :, 0] = (d != D - 1).astype(np.float32)    # valid rows for the d+1 tap
    lane_ch = np.arange(L) % Cout
    proj = (lane_ch[:, None] == np.arange(Cout)[None, :]).astype(np.float32)  # (L, C)
    return (jnp.asarray(dmask), jnp.asarray(proj),
            jnp.asarray(np.ascontiguousarray(proj.T)))


@functools.lru_cache(maxsize=16)
def _packed_channel_params(ch_b, cout):
    ch = np.frombuffer(ch_b, np.float32).reshape(5, cout)   # g1, be1, g2, be2, br
    out = np.zeros((8, cout), np.float32)                   # one (8, C) VMEM tile
    out[:5] = ch
    return jnp.asarray(out)


def _vmem_plan(R, K1, L, Cout):
    def padded(shape, itemsize):
        s = tuple(shape)
        lead = int(np.prod(s[:-2])) if len(s) > 2 else 1
        sub = -(-s[-2] // 8) * 8
        lane = -(-s[-1] // 128) * 128
        return lead * sub * lane * itemsize

    operand_bytes = (padded((R, K1), 4)             # x slab (f32)
                     + padded((3, K1, L), 2)        # conv1 block-Toeplitz (bf16)
                     + padded((3, L, L), 2)         # conv2 block-Toeplitz (bf16)
                     + padded((K1, L), 2)           # 1x1 residual Toeplitz (bf16)
                     + padded((2, R, 1), 4)         # depth-boundary masks
                     + padded((L, Cout), 4)         # lane -> channel projection
                     + padded((Cout, L), 4)         # channel -> lane broadcast
                     + padded((8, Cout), 4)         # per-channel params
                     + padded((R, L), 4))           # output slab
    # ~6 live (R, L)-f32 temporaries (acc / y / rolled / cast slabs) + scratch
    working_bytes = 6 * padded((R, L), 4) + (4 << 20)
    return operand_bytes, working_bytes


# ----------------------------------------------------------------------------
# Wrapper (not jit-compatible on purpose: weight packing is host-side + cached)
# ----------------------------------------------------------------------------
def res_encoder_forward(x_ncdhw, params):
    """x_ncdhw: (N, Cin, D, H, W) float32 -> (N, Cout, D, H, W) float32."""
    N, Cin, D, H, W = x_ncdhw.shape
    Cout = params["w1"].shape[-1]
    R, K1, L = N * D, H * W * Cin, H * W * Cout

    # ---- packed operands (memoized: numpy loops + upload run once per params)
    w1s, w2s, wrm = _packed_weights(
        np.asarray(params["w1"], np.float32).tobytes(),
        np.asarray(params["w2"], np.float32).tobytes(),
        np.asarray(params["wr"], np.float32).tobytes(), Cin, Cout, H, W)
    dmask, proj, projt = _structural_operands(N, D, H, W, Cout)
    ch = _packed_channel_params(
        np.stack([np.asarray(params[k], np.float32)
                  for k in ("g1", "be1", "g2", "be2", "br")]).tobytes(), Cout)

    # ---- VMEM budget (generation-aware: stay well under v7x's 64 MiB) --------
    operand_bytes, working_bytes = _vmem_plan(R, K1, L, Cout)
    need = operand_bytes + working_bytes
    VMEM_CEILING = 48 << 20
    if need > VMEM_CEILING:
        # TODO(synk): switch to the H-folded / gridded two-pass-BN variant here.
        raise ValueError(
            f"Fully VMEM-resident ResEncoder kernel needs ~{need >> 20} MiB "
            f"(> {VMEM_CEILING >> 20} MiB budget) at N*D={R}, H*W={H * W}, C={Cout}; "
            "use the gridded variant for this size.")
    vmem_limit = int(min(VMEM_CEILING, need + (16 << 20)))

    # ---- cost estimate (post-optimization op mix) ---------------------------
    macs = (3 * R * K1 * L            # conv1 (3 depth taps)
            + 3 * R * L * L           # conv2
            + R * K1 * L              # 1x1 residual
            + 2 * (2 * L * Cout + 2 * Cout * L)   # BN reduce/broadcast matmuls
            + Cout * L)               # residual-bias broadcast
    bytes_accessed = (R * K1 * 4 + R * L * 4
                      + (3 * K1 * L + 3 * L * L + K1 * L) * 2
                      + (L * Cout + Cout * L + 8 * Cout + 2 * R) * 4)
    cost = pl.CostEstimate(flops=2 * macs, transcendentals=2 * Cout,
                           bytes_accessed=int(bytes_accessed))

    # NCDHW -> (N*D, H*W*Cin) lane-dense slab (layout plumbing stays in XLA/HBM)
    x2d = jnp.transpose(x_ncdhw, (0, 2, 3, 4, 1)).reshape(R, K1).astype(jnp.float32)

    vmem = pl.BlockSpec(memory_space=pltpu.MemorySpace.VMEM)
    kernel = _make_res_encoder_kernel(R, 1.0 / float(N * D * H * W))

    out2d = pl.pallas_call(
        kernel,
        out_shape=jax.ShapeDtypeStruct((R, L), jnp.float32),
        in_specs=[vmem] * 8,
        out_specs=vmem,
        compiler_params=pltpu.CompilerParams(vmem_limit_bytes=vmem_limit),
        cost_estimate=cost,
    )(x2d, w1s, w2s, wrm, dmask, proj, projt, ch)

    out = out2d.reshape(N, D, H, W, Cout)
    return jnp.transpose(out, (0, 4, 1, 2, 3))      # back to NCDHW


# ----------------------------------------------------------------------------
# Parameters (shapes match the PyTorch module) and a pure-JAX reference
# ----------------------------------------------------------------------------
def make_params(key, in_channels, out_channels):
    ks = jax.random.split(key, 6)
    return dict(
        w1=0.1 * jax.random.normal(ks[0], (3, 3, 3, in_channels, out_channels), jnp.float32),
        w2=0.1 * jax.random.normal(ks[1], (3, 3, 3, out_channels, out_channels), jnp.float32),
        wr=0.1 * jax.random.normal(ks[2], (in_channels, out_channels), jnp.float32),
        # b1/b2 are consumed only by the reference: training-mode BN cancels the
        # conv bias exactly, so the fused kernel drops them (zero numerical effect).
        b1=0.05 * jax.random.normal(ks[3], (out_channels,), jnp.float32),
        b2=0.05 * jax.random.normal(ks[4], (out_channels,), jnp.float32),
        br=0.05 * jax.random.normal(ks[5], (out_channels,), jnp.float32),
        g1=jnp.ones((out_channels,), jnp.float32),
        be1=jnp.zeros((out_channels,), jnp.float32),
        g2=jnp.ones((out_channels,), jnp.float32),
        be2=jnp.zeros((out_channels,), jnp.float32),
    )


def reference_forward(x_ncdhw, params):
    x = jnp.transpose(x_ncdhw, (0, 2, 3, 4, 1)).astype(jnp.float32)
    hp = lax.Precision.HIGHEST

    def bn_relu(y, g, b):
        mean = jnp.mean(y, axis=(0, 1, 2, 3), keepdims=True)
        var = jnp.mean((y - mean) ** 2, axis=(0, 1, 2, 3), keepdims=True)
        return jnp.maximum((y - mean) * lax.rsqrt(var + EPS) * g + b, 0.0)

    residual = jnp.einsum("ndhwc,co->ndhwo", x, params["wr"], precision=hp) + params["br"]
    dn1 = lax.conv_dimension_numbers(x.shape, params["w1"].shape, ("NDHWC", "DHWIO", "NDHWC"))
    y = lax.conv_general_dilated(x, params["w1"], (1, 1, 1), "SAME",
                                 dimension_numbers=dn1, precision=hp)
    y = bn_relu(y + params["b1"], params["g1"], params["be1"])
    dn2 = lax.conv_dimension_numbers(y.shape, params["w2"].shape, ("NDHWC", "DHWIO", "NDHWC"))
    y = lax.conv_general_dilated(y, params["w2"], (1, 1, 1), "SAME",
                                 dimension_numbers=dn2, precision=hp)
    y = bn_relu(y + params["b2"], params["g2"], params["be2"])
    out = jnp.maximum(y + residual, 0.0)
    return jnp.transpose(out, (0, 4, 1, 2, 3))


if __name__ == "__main__":
    N, Cin, Cout, D, H, W = 2, 4, 8, 8, 8, 8
    key = jax.random.PRNGKey(0)
    kx, kp = jax.random.split(key)
    x = jax.random.normal(kx, (N, Cin, D, H, W), jnp.float32)   # NCDHW, like PyTorch
    params = make_params(kp, Cin, Cout)

    out = jax.block_until_ready(res_encoder_forward(x, params))
    ref = jax.block_until_ready(reference_forward(x, params))

    assert out.shape == (N, Cout, D, H, W), out.shape
    err_max = float(jnp.max(jnp.abs(out - ref)))
    err_mean = float(jnp.mean(jnp.abs(out - ref)))
    # bf16 MXU operands (f32 accumulation, f32 BN/rsqrt math) across two conv+BN
    # stages on O(1) activations: expect roughly ~5e-3 mean / a few 1e-2 max abs
    # deviation from the f32 (Precision.HIGHEST) reference.
    assert err_max < 8e-2 and err_mean < 1.5e-2, (err_max, err_mean)

    print("KERNEL_OK")
</pallas_src>

<mosaic_0001>
module attributes {stable_mosaic.version = 11 : i64} {
  func.func @kernel(%arg0: memref<16x256xf32, #tpu.memory_space<vmem>>, %arg1: memref<3x256x512xbf16, #tpu.memory_space<vmem>>, %arg2: memref<3x512x512xbf16, #tpu.memory_space<vmem>>, %arg3: memref<256x512xbf16, #tpu.memory_space<vmem>>, %arg4: memref<2x16x1xf32, #tpu.memory_space<vmem>>, %arg5: memref<512x8xf32, #tpu.memory_space<vmem>>, %arg6: memref<8x512xf32, #tpu.memory_space<vmem>>, %arg7: memref<8x8xf32, #tpu.memory_space<vmem>>, %arg8: memref<16x512xf32, #tpu.memory_space<vmem>>) attributes {dimension_semantics = [], scalar_prefetch = 0 : i64, scratch_operands = 0 : i64, tpu.core_type = #tpu.core_type<tc>} {
    %c0 = arith.constant 0 : index
    %c0_0 = arith.constant 0 : index
    %0 = vector.load %arg0[%c0, %c0_0] : memref<16x256xf32, #tpu.memory_space<vmem>>, vector<16x256xf32>
    %c0_1 = arith.constant 0 : index
    %c0_2 = arith.constant 0 : index
    %c0_3 = arith.constant 0 : index
    %1 = vector.load %arg4[%c0_1, %c0_2, %c0_3] : memref<2x16x1xf32, #tpu.memory_space<vmem>>, vector<1x16x1xf32>
    %2 = vector.shape_cast %1 : vector<1x16x1xf32> to vector<16x1xf32>
    %c1 = arith.constant 1 : index
    %c0_4 = arith.constant 0 : index
    %c0_5 = arith.constant 0 : index
    %3 = vector.load %arg4[%c1, %c0_4, %c0_5] : memref<2x16x1xf32, #tpu.memory_space<vmem>>, vector<1x16x1xf32>
    %4 = vector.shape_cast %3 : vector<1x16x1xf32> to vector<16x1xf32>
    %c0_6 = arith.constant 0 : index
    %c0_7 = arith.constant 0 : index
    %5 = vector.load %arg5[%c0_6, %c0_7] : memref<512x8xf32, #tpu.memory_space<vmem>>, vector<512x8xf32>
    %c0_8 = arith.constant 0 : index
    %c0_9 = arith.constant 0 : index
    %6 = vector.load %arg6[%c0_8, %c0_9] : memref<8x512xf32, #tpu.memory_space<vmem>>, vector<8x512xf32>
    %7 = arith.truncf %0 : vector<16x256xf32> to vector<16x256xbf16>
    %c1_10 = arith.constant 1 : index
    %c0_11 = arith.constant 0 : index
    %c0_12 = arith.constant 0 : index
    %8 = vector.load %arg1[%c1_10, %c0_11, %c0_12] : memref<3x256x512xbf16, #tpu.memory_space<vmem>>, vector<1x256x512xbf16>
    %9 = vector.shape_cast %8 : vector<1x256x512xbf16> to vector<256x512xbf16>
    %cst = arith.constant dense<0.000000e+00> : vector<16x512xf32>
    %10 = tpu.matmul %7, %9, %cst {dimension_numbers = #tpu.dot_dimension_numbers<[1], [0], [0], [1], [0, 0, 1, 1], [], []>} : vector<16x256xbf16>, vector<256x512xbf16>, vector<16x512xf32> -> vector<16x512xf32>
    %c1_i32 = arith.constant 1 : i32
    %11 = tpu.dynamic_rotate %0 by %c1_i32 dim 0 : vector<16x256xf32>, i32 -> vector<16x256xf32>
    %12 = vector.broadcast %2 : vector<16x1xf32> to vector<16x256xf32>
    %13 = arith.mulf %11, %12 : vector<16x256xf32>
    %14 = arith.truncf %13 : vector<16x256xf32> to vector<16x256xbf16>
    %c0_13 = arith.constant 0 : index
    %c0_14 = arith.constant 0 : index
    %c0_15 = arith.constant 0 : index
    %15 = vector.load %arg1[%c0_13, %c0_14, %c0_15] : memref<3x256x512xbf16, #tpu.memory_space<vmem>>, vector<1x256x512xbf16>
    %16 = vector.shape_cast %15 : vector<1x256x512xbf16> to vector<256x512xbf16>
    %cst_16 = arith.constant dense<0.000000e+00> : vector<16x512xf32>
    %17 = tpu.matmul %14, %16, %cst_16 {dimension_numbers = #tpu.dot_dimension_numbers<[1], [0], [0], [1], [0, 0, 1, 1], [], []>} : vector<16x256xbf16>, vector<256x512xbf16>, vector<16x512xf32> -> vector<16x512xf32>
    %18 = arith.addf %10, %17 : vector<16x512xf32>
    %c15_i32 = arith.constant 15 : i32
    %19 = tpu.dynamic_rotate %0 by %c15_i32 dim 0 : vector<16x256xf32>, i32 -> vector<16x256xf32>
    %20 = vector.broadcast %4 : vector<16x1xf32> to vector<16x256xf32>
    %21 = arith.mulf %19, %20 : vector<16x256xf32>
    %22 = arith.truncf %21 : vector<16x256xf32> to vector<16x256xbf16>
    %c2 = arith.constant 2 : index
    %c0_17 = arith.constant 0 : index
    %c0_18 = arith.constant 0 : index
    %23 = vector.load %arg1[%c2, %c0_17, %c0_18] : memref<3x256x512xbf16, #tpu.memory_space<vmem>>, vector<1x256x512xbf16>
    %24 = vector.shape_cast %23 : vector<1x256x512xbf16> to vector<256x512xbf16>
    %cst_19 = arith.constant dense<0.000000e+00> : vector<16x512xf32>
    %25 = tpu.matmul %22, %24, %cst_19 {dimension_numbers = #tpu.dot_dimension_numbers<[1], [0], [0], [1], [0, 0, 1, 1], [], []>} : vector<16x256xbf16>, vector<256x512xbf16>, vector<16x512xf32> -> vector<16x512xf32>
    %26 = arith.addf %18, %25 : vector<16x512xf32>
    %c0_20 = arith.constant 0 : index
    %c0_21 = arith.constant 0 : index
    %27 = vector.load %arg7[%c0_20, %c0_21] : memref<8x8xf32, #tpu.memory_space<vmem>>, vector<1x8xf32>
    %c1_22 = arith.constant 1 : index
    %c0_23 = arith.constant 0 : index
    %28 = vector.load %arg7[%c1_22, %c0_23] : memref<8x8xf32, #tpu.memory_space<vmem>>, vector<1x8xf32>
    %cst_24 = arith.constant dense<0.000000e+00> : vector<512xf32>
    %29 = vector.multi_reduction <add>, %26, %cst_24 [0] : vector<16x512xf32> to vector<512xf32>
    %30 = vector.shape_cast %29 : vector<512xf32> to vector<1x512xf32>
    %31 = arith.mulf %26, %26 : vector<16x512xf32>
    %cst_25 = arith.constant dense<0.000000e+00> : vector<512xf32>
    %32 = vector.multi_reduction <add>, %31, %cst_25 [0] : vector<16x512xf32> to vector<512xf32>
    %33 = vector.shape_cast %32 : vector<512xf32> to vector<1x512xf32>
    %cst_26 = arith.constant dense<0.000000e+00> : vector<1x8xf32>
    %34 = tpu.matmul %30, %5, %cst_26 {dimension_numbers = #tpu.dot_dimension_numbers<[1], [0], [0], [1], [0, 0, 1, 1], [], []>} : vector<1x512xf32>, vector<512x8xf32>, vector<1x8xf32> -> vector<1x8xf32>
    %cst_27 = arith.constant dense<0.000000e+00> : vector<1x8xf32>
    %35 = tpu.matmul %33, %5, %cst_27 {dimension_numbers = #tpu.dot_dimension_numbers<[1], [0], [0], [1], [0, 0, 1, 1], [], []>} : vector<1x512xf32>, vector<512x8xf32>, vector<1x8xf32> -> vector<1x8xf32>
    %cst_28 = arith.constant 9.765625E-4 : f32
    %36 = vector.broadcast %cst_28 : f32 to vector<1x8xf32>
    %37 = arith.mulf %34, %36 : vector<1x8xf32>
    %cst_29 = arith.constant 9.765625E-4 : f32
    %38 = vector.broadcast %cst_29 : f32 to vector<1x8xf32>
    %39 = arith.mulf %35, %38 : vector<1x8xf32>
    %40 = arith.mulf %37, %37 : vector<1x8xf32>
    %41 = arith.subf %39, %40 : vector<1x8xf32>
    %cst_30 = arith.constant 9.99999974E-6 : f32
    %42 = vector.broadcast %cst_30 : f32 to vector<1x8xf32>
    %43 = arith.addf %41, %42 : vector<1x8xf32>
    %44 = math.rsqrt %43 : vector<1x8xf32>
    %45 = arith.mulf %27, %44 : vector<1x8xf32>
    %46 = arith.mulf %37, %45 : vector<1x8xf32>
    %47 = arith.subf %28, %46 : vector<1x8xf32>
    %cst_31 = arith.constant dense<0.000000e+00> : vector<1x512xf32>
    %48 = tpu.matmul %45, %6, %cst_31 {dimension_numbers = #tpu.dot_dimension_numbers<[1], [0], [0], [1], [0, 0, 1, 1], [], []>} : vector<1x8xf32>, vector<8x512xf32>, vector<1x512xf32> -> vector<1x512xf32>
    %cst_32 = arith.constant dense<0.000000e+00> : vector<1x512xf32>
    %49 = tpu.matmul %47, %6, %cst_32 {dimension_numbers = #tpu.dot_dimension_numbers<[1], [0], [0], [1], [0, 0, 1, 1], [], []>} : vector<1x8xf32>, vector<8x512xf32>, vector<1x512xf32> -> vector<1x512xf32>
    %50 = vector.broadcast %48 : vector<1x512xf32> to vector<16x512xf32>
    %51 = arith.mulf %26, %50 : vector<16x512xf32>
    %52 = vector.broadcast %49 : vector<1x512xf32> to vector<16x512xf32>
    %53 = arith.addf %51, %52 : vector<16x512xf32>
    %cst_33 = arith.constant 0.000000e+00 : f32
    %54 = vector.broadcast %cst_33 : f32 to vector<16x512xf32>
    %55 = arith.maximumf %53, %54 : vector<16x512xf32>
    %56 = arith.truncf %55 : vector<16x512xf32> to vector<16x512xbf16>
    %c1_34 = arith.constant 1 : index
    %c0_35 = arith.constant 0 : index
    %c0_36 = arith.constant 0 : index
    %57 = vector.load %arg2[%c1_34, %c0_35, %c0_36] : memref<3x512x512xbf16, #tpu.memory_space<vmem>>, vector<1x512x512xbf16>
    %58 = vector.shape_cast %57 : vector<1x512x512xbf16> to vector<512x512xbf16>
    %cst_37 = arith.constant dense<0.000000e+00> : vector<16x512xf32>
    %59 = tpu.matmul %56, %58, %cst_37 {dimension_numbers = #tpu.dot_dimension_numbers<[1], [0], [0], [1], [0, 0, 1, 1], [], []>} : vector<16x512xbf16>, vector<512x512xbf16>, vector<16x512xf32> -> vector<16x512xf32>
    %c1_i32_38 = arith.constant 1 : i32
    %60 = tpu.dynamic_rotate %55 by %c1_i32_38 dim 0 : vector<16x512xf32>, i32 -> vector<16x512xf32>
    %61 = vector.broadcast %2 : vector<16x1xf32> to vector<16x512xf32>
    %62 = arith.mulf %60, %61 : vector<16x512xf32>
    %63 = arith.truncf %62 : vector<16x512xf32> to vector<16x512xbf16>
    %c0_39 = arith.constant 0 : index
    %c0_40 = arith.constant 0 : index
    %c0_41 = arith.constant 0 : index
    %64 = vector.load %arg2[%c0_39, %c0_40, %c0_41] : memref<3x512x512xbf16, #tpu.memory_space<vmem>>, vector<1x512x512xbf16>
    %65 = vector.shape_cast %64 : vector<1x512x512xbf16> to vector<512x512xbf16>
    %cst_42 = arith.constant dense<0.000000e+00> : vector<16x512xf32>
    %66 = tpu.matmul %63, %65, %cst_42 {dimension_numbers = #tpu.dot_dimension_numbers<[1], [0], [0], [1], [0, 0, 1, 1], [], []>} : vector<16x512xbf16>, vector<512x512xbf16>, vector<16x512xf32> -> vector<16x512xf32>
    %67 = arith.addf %59, %66 : vector<16x512xf32>
    %c15_i32_43 = arith.constant 15 : i32
    %68 = tpu.dynamic_rotate %55 by %c15_i32_43 dim 0 : vector<16x512xf32>, i32 -> vector<16x512xf32>
    %69 = vector.broadcast %4 : vector<16x1xf32> to vector<16x512xf32>
    %70 = arith.mulf %68, %69 : vector<16x512xf32>
    %71 = arith.truncf %70 : vector<16x512xf32> to vector<16x512xbf16>
    %c2_44 = arith.constant 2 : index
    %c0_45 = arith.constant 0 : index
    %c0_46 = arith.constant 0 : index
    %72 = vector.load %arg2[%c2_44, %c0_45, %c0_46] : memref<3x512x512xbf16, #tpu.memory_space<vmem>>, vector<1x512x512xbf16>
    %73 = vector.shape_cast %72 : vector<1x512x512xbf16> to vector<512x512xbf16>
    %cst_47 = arith.constant dense<0.000000e+00> : vector<16x512xf32>
    %74 = tpu.matmul %71, %73, %cst_47 {dimension_numbers = #tpu.dot_dimension_numbers<[1], [0], [0], [1], [0, 0, 1, 1], [], []>} : vector<16x512xbf16>, vector<512x512xbf16>, vector<16x512xf32> -> vector<16x512xf32>
    %75 = arith.addf %67, %74 : vector<16x512xf32>
    %c2_48 = arith.constant 2 : index
    %c0_49 = arith.constant 0 : index
    %76 = vector.load %arg7[%c2_48, %c0_49] : memref<8x8xf32, #tpu.memory_space<vmem>>, vector<1x8xf32>
    %c3 = arith.constant 3 : index
    %c0_50 = arith.constant 0 : index
    %77 = vector.load %arg7[%c3, %c0_50] : memref<8x8xf32, #tpu.memory_space<vmem>>, vector<1x8xf32>
    %cst_51 = arith.constant dense<0.000000e+00> : vector<512xf32>
    %78 = vector.multi_reduction <add>, %75, %cst_51 [0] : vector<16x512xf32> to vector<512xf32>
    %79 = vector.shape_cast %78 : vector<512xf32> to vector<1x512xf32>
    %80 = arith.mulf %75, %75 : vector<16x512xf32>
    %cst_52 = arith.constant dense<0.000000e+00> : vector<512xf32>
    %81 = vector.multi_reduction <add>, %80, %cst_52 [0] : vector<16x512xf32> to vector<512xf32>
    %82 = vector.shape_cast %81 : vector<512xf32> to vector<1x512xf32>
    %cst_53 = arith.constant dense<0.000000e+00> : vector<1x8xf32>
    %83 = tpu.matmul %79, %5, %cst_53 {dimension_numbers = #tpu.dot_dimension_numbers<[1], [0], [0], [1], [0, 0, 1, 1], [], []>} : vector<1x512xf32>, vector<512x8xf32>, vector<1x8xf32> -> vector<1x8xf32>
    %cst_54 = arith.constant dense<0.000000e+00> : vector<1x8xf32>
    %84 = tpu.matmul %82, %5, %cst_54 {dimension_numbers = #tpu.dot_dimension_numbers<[1], [0], [0], [1], [0, 0, 1, 1], [], []>} : vector<1x512xf32>, vector<512x8xf32>, vector<1x8xf32> -> vector<1x8xf32>
    %cst_55 = arith.constant 9.765625E-4 : f32
    %85 = vector.broadcast %cst_55 : f32 to vector<1x8xf32>
    %86 = arith.mulf %83, %85 : vector<1x8xf32>
    %cst_56 = arith.constant 9.765625E-4 : f32
    %87 = vector.broadcast %cst_56 : f32 to vector<1x8xf32>
    %88 = arith.mulf %84, %87 : vector<1x8xf32>
    %89 = arith.mulf %86, %86 : vector<1x8xf32>
    %90 = arith.subf %88, %89 : vector<1x8xf32>
    %cst_57 = arith.constant 9.99999974E-6 : f32
    %91 = vector.broadcast %cst_57 : f32 to vector<1x8xf32>
    %92 = arith.addf %90, %91 : vector<1x8xf32>
    %93 = math.rsqrt %92 : vector<1x8xf32>
    %94 = arith.mulf %76, %93 : vector<1x8xf32>
    %95 = arith.mulf %86, %94 : vector<1x8xf32>
    %96 = arith.subf %77, %95 : vector<1x8xf32>
    %cst_58 = arith.constant dense<0.000000e+00> : vector<1x512xf32>
    %97 = tpu.matmul %94, %6, %cst_58 {dimension_numbers = #tpu.dot_dimension_numbers<[1], [0], [0], [1], [0, 0, 1, 1], [], []>} : vector<1x8xf32>, vector<8x512xf32>, vector<1x512xf32> -> vector<1x512xf32>
    %cst_59 = arith.constant dense<0.000000e+00> : vector<1x512xf32>
    %98 = tpu.matmul %96, %6, %cst_59 {dimension_numbers = #tpu.dot_dimension_numbers<[1], [0], [0], [1], [0, 0, 1, 1], [], []>} : vector<1x8xf32>, vector<8x512xf32>, vector<1x512xf32> -> vector<1x512xf32>
    %99 = vector.broadcast %97 : vector<1x512xf32> to vector<16x512xf32>
    %100 = arith.mulf %75, %99 : vector<16x512xf32>
    %101 = vector.broadcast %98 : vector<1x512xf32> to vector<16x512xf32>
    %102 = arith.addf %100, %101 : vector<16x512xf32>
    %cst_60 = arith.constant 0.000000e+00 : f32
    %103 = vector.broadcast %cst_60 : f32 to vector<16x512xf32>
    %104 = arith.maximumf %102, %103 : vector<16x512xf32>
    %c4 = arith.constant 4 : index
    %c0_61 = arith.constant 0 : index
    %105 = vector.load %arg7[%c4, %c0_61] : memref<8x8xf32, #tpu.memory_space<vmem>>, vector<1x8xf32>
    %cst_62 = arith.constant dense<0.000000e+00> : vector<1x512xf32>
    %106 = tpu.matmul %105, %6, %cst_62 {dimension_numbers = #tpu.dot_dimension_numbers<[1], [0], [0], [1], [0, 0, 1, 1], [], []>} : vector<1x8xf32>, vector<8x512xf32>, vector<1x512xf32> -> vector<1x512xf32>
    %107 = arith.truncf %0 : vector<16x256xf32> to vector<16x256xbf16>
    %c0_63 = arith.constant 0 : index
    %c0_64 = arith.constant 0 : index
    %108 = vector.load %arg3[%c0_63, %c0_64] : memref<256x512xbf16, #tpu.memory_space<vmem>>, vector<256x512xbf16>
    %cst_65 = arith.constant dense<0.000000e+00> : vector<16x512xf32>
    %109 = tpu.matmul %107, %108, %cst_65 {dimension_numbers = #tpu.dot_dimension_numbers<[1], [0], [0], [1], [0, 0, 1, 1], [], []>} : vector<16x256xbf16>, vector<256x512xbf16>, vector<16x512xf32> -> vector<16x512xf32>
    %110 = vector.broadcast %106 : vector<1x512xf32> to vector<16x512xf32>
    %111 = arith.addf %109, %110 : vector<16x512xf32>
    %112 = arith.addf %104, %111 : vector<16x512xf32>
    %cst_66 = arith.constant 0.000000e+00 : f32
    %113 = vector.broadcast %cst_66 : f32 to vector<16x512xf32>
    %114 = arith.maximumf %112, %113 : vector<16x512xf32>
    %c0_67 = arith.constant 0 : index
    %c0_68 = arith.constant 0 : index
    %115 = vector.load %arg8[%c0_67, %c0_68] : memref<16x512xf32, #tpu.memory_space<vmem>>, vector<16x512xf32>
    tpu.vector_store %arg8[%c0_67, %c0_68], %114 {strides = array<i32>} : memref<16x512xf32, #tpu.memory_space<vmem>>, vector<16x512xf32>,
    return
  }
}

</mosaic_0001>

<llo_original>
// kernel: tpu_custom_call.1
$region0: #{tpu_custom_call.1}
  #allocation0 [shape = 'u32[]', space=smem, size = 0x4, offset = 0x4, fixed_abs, tag = 'smem constant byte address 0x4 - core index']
  #allocation1 [shape = 'u32[144,128]{1,0:T(1,128)}', space=vmem, size = 0x12000, scoped, tag = 'internal scratch']
  %s0 = inlined_call_operand.hbm [shape: f32[16,256], index: 0, kind: input, shape index: {}]
  %s1 = inlined_call_operand.hbm [shape: bf16[3,256,512], index: 1, kind: input, shape index: {}]
  %s2 = inlined_call_operand.hbm [shape: bf16[3,512,512], index: 2, kind: input, shape index: {}]
  %s3 = inlined_call_operand.hbm [shape: bf16[256,512], index: 3, kind: input, shape index: {}]
  %s4 = inlined_call_operand.vmem [shape: f32[2,16,1], index: 4, kind: input, shape index: {}]
  %s5 = inlined_call_operand.vmem [shape: f32[512,8], index: 5, kind: input, shape index: {}]
  %s6 = inlined_call_operand.hbm [shape: f32[8,512], index: 6, kind: input, shape index: {}]
  %s7 = inlined_call_operand.hbm [shape: f32[8,8], index: 7, kind: input, shape index: {}]
  %s8 = inlined_call_operand.hbm [shape: f32[16,512], index: 8, kind: output, shape index: {}]
  %s9 = sld [smem:[#allocation0]]
  $region66: #{tpu_custom_call.1} parent=0
    _
  %s11 = ssub.s32 1, %s9
  %s12 = scalar_select 0, %s11, %s9
  $region1: #{tpu_custom_call.1} parent=0
    #allocation2 [shape = 'u8[16384]{0}', space=vmem, size = 0x4000, scoped, tag = 'input window, operand 0, single buffered']
    #allocation3 [shape = 's32[1]{0}', space=sflag, size = 0x4, scoped, tag = 'scoped memory for tpu_custom_call.1']
    #allocation4 [shape = 's32[1]{0}', space=sflag, size = 0x4, scoped, tag = 'scoped memory for tpu_custom_call.1']
    #allocation5 [shape = 'u8[786432]{0}', space=vmem, size = 0xc0000, scoped, tag = 'input window, operand 1, single buffered']
    #allocation6 [shape = 's32[1]{0}', space=sflag, size = 0x4, scoped, tag = 'scoped memory for tpu_custom_call.1']
    #allocation7 [shape = 'u8[1572864]{0}', space=vmem, size = 0x180000, scoped, tag = 'input window, operand 2, single buffered']
    #allocation8 [shape = 'u8[262144]{0}', space=vmem, size = 0x40000, scoped, tag = 'input window, operand 3, single buffered']
    #allocation9 [shape = 's32[1]{0}', space=sflag, size = 0x4, scoped, tag = 'scoped memory for tpu_custom_call.1']
    #allocation10 [shape = 'u8[16384]{0}', space=vmem, size = 0x4000, scoped, tag = 'input window, operand 6, single buffered']
    #allocation11 [shape = 'u8[4096]{0}', space=vmem, size = 0x1000, scoped, tag = 'input window, operand 7, single buffered']
    #allocation12 [shape = 's32[1]{0}', space=sflag, size = 0x4, scoped, tag = 'scoped memory for tpu_custom_call.1']
    #allocation13 [shape = 'u8[32768]{0}', space=vmem, size = 0x8000, scoped, tag = 'output window, operand 0, single buffered']
    %13 = vsyncpa [#allocation3], 0
    %14 = vsyncpa [#allocation6], 0
    %15 = vsyncpa [#allocation9], 0
    %16 = vsyncpa [#allocation12], 0
    %17 = vsyncpa [#allocation4], 0
    // Predicated region
    $region2: #{tpu_custom_call.1} parent=1 // pred_check
      _
    $region3: #{tpu_custom_call.1} parent=1 // pred_check_branch
      %19 = sbr.rel (0) target = $region5
    $region4: #{tpu_custom_call.1} parent=1 // pred_region
      %s21 = ssub.s32 512, 512
      %22 = vsyncadd [#allocation3], %s21
      %s23 = sshll.u32 [#allocation2], 4
      %s24 = int_to_ptr.vmem [resolvable:$true] %s23
      %29 = dma.hbm_to_vmem [thread:$0]  %s0, 512, %s24, [#allocation3], 256, 256, 16
    $region5: #{tpu_custom_call.1} parent=1 // pred_fallthru
      _
    // Predicated region
    $region6: #{tpu_custom_call.1} parent=1 // pred_check
      _
    $region7: #{tpu_custom_call.1} parent=1 // pred_check_branch
      %31 = sbr.rel (0) target = $region9
    $region8: #{tpu_custom_call.1} parent=1 // pred_region
      %s33 = ssub.s32 24576, 24576
      %34 = vsyncadd [#allocation6], %s33
      %s35 = sshll.u32 [#allocation5], 4
      %s36 = int_to_ptr.vmem [resolvable:$true] %s35
      %41 = dma.hbm_to_vmem [thread:$0]  %s1, 24576, %s36, [#allocation6], 256, 256, 16
    $region9: #{tpu_custom_call.1} parent=1 // pred_fallthru
      _
    // Predicated region
    $region10: #{tpu_custom_call.1} parent=1 // pred_check
      _
    $region11: #{tpu_custom_call.1} parent=1 // pred_check_branch
      %43 = sbr.rel (0) target = $region13
    $region12: #{tpu_custom_call.1} parent=1 // pred_region
      %s45 = ssub.s32 49152, 49152
      %46 = vsyncadd [#allocation6], %s45
      %s47 = sshll.u32 [#allocation7], 4
      %s48 = int_to_ptr.vmem [resolvable:$true] %s47
      %53 = dma.hbm_to_vmem [thread:$0]  %s2, 49152, %s48, [#allocation6], 256, 256, 16
    $region13: #{tpu_custom_call.1} parent=1 // pred_fallthru
      _
    // Predicated region
    $region14: #{tpu_custom_call.1} parent=1 // pred_check
      _
    $region15: #{tpu_custom_call.1} parent=1 // pred_check_branch
      %55 = sbr.rel (0) target = $region17
    $region16: #{tpu_custom_call.1} parent=1 // pred_region
      %s57 = ssub.s32 8192, 8192
      %58 = vsyncadd [#allocation9], %s57
      %s59 = sshll.u32 [#allocation8], 4
      %s60 = int_to_ptr.vmem [resolvable:$true] %s59
      %65 = dma.hbm_to_vmem [thread:$0]  %s3, 8192, %s60, [#allocation9], 256, 256, 16
    $region17: #{tpu_custom_call.1} parent=1 // pred_fallthru
      _
    // Predicated region
    $region18: #{tpu_custom_call.1} parent=1 // pred_check
      _
    $region19: #{tpu_custom_call.1} parent=1 // pred_check_branch
      %67 = sbr.rel (0) target = $region21
    $region20: #{tpu_custom_call.1} parent=1 // pred_region
      _
    $region21: #{tpu_custom_call.1} parent=1 // pred_fallthru
      _
    // Predicated region
    $region22: #{tpu_custom_call.1} parent=1 // pred_check
      _
    $region23: #{tpu_custom_call.1} parent=1 // pred_check_branch
      %69 = sbr.rel (0) target = $region25
    $region24: #{tpu_custom_call.1} parent=1 // pred_region
      _
    $region25: #{tpu_custom_call.1} parent=1 // pred_fallthru
      _
    // Predicated region
    $region26: #{tpu_custom_call.1} parent=1 // pred_check
      _
    $region27: #{tpu_custom_call.1} parent=1 // pred_check_branch
      %71 = sbr.rel (0) target = $region29
    $region28: #{tpu_custom_call.1} parent=1 // pred_region
      %s73 = ssub.s32 512, 512
      %74 = vsyncadd [#allocation9], %s73
      %s76 = sshll.u32 [#allocation10], 4
      %s77 = int_to_ptr.vmem [resolvable:$true] %s76
      %79 = dma.hbm_to_vmem [thread:$0]  %s6, 512, %s77, [#allocation9]
    $region29: #{tpu_custom_call.1} parent=1 // pred_fallthru
      _
    // Predicated region
    $region30: #{tpu_custom_call.1} parent=1 // pred_check
      _
    $region31: #{tpu_custom_call.1} parent=1 // pred_check_branch
      %81 = sbr.rel (0) target = $region33
    $region32: #{tpu_custom_call.1} parent=1 // pred_region
      %s83 = ssub.s32 128, 128
      %84 = vsyncadd [#allocation12], %s83
      %s86 = sshll.u32 [#allocation11], 4
      %s87 = int_to_ptr.vmem [resolvable:$true] %s86
      %89 = dma.hbm_to_vmem [thread:$0]  %s7, 128, %s87, [#allocation12]
    $region33: #{tpu_custom_call.1} parent=1 // pred_fallthru
      _
    // Predicated region
    $region34: #{tpu_custom_call.1} parent=1 // pred_check
      _
    $region35: #{tpu_custom_call.1} parent=1 // pred_check_branch
      %91 = sbr.rel (0) target = $region37
    $region36: #{tpu_custom_call.1} parent=1 // pred_region
      %92 = dma.done [#allocation3], 512
    $region37: #{tpu_custom_call.1} parent=1 // pred_fallthru
      _
    // Predicated region
    $region38: #{tpu_custom_call.1} parent=1 // pred_check
      _
    $region39: #{tpu_custom_call.1} parent=1 // pred_check_branch
      %94 = sbr.rel (0) target = $region41
    $region40: #{tpu_custom_call.1} parent=1 // pred_region
      %95 = dma.done [#allocation6], 24576
    $region41: #{tpu_custom_call.1} parent=1 // pred_fallthru
      _
    // Predicated region
    $region42: #{tpu_custom_call.1} parent=1 // pred_check
      _
    $region43: #{tpu_custom_call.1} parent=1 // pred_check_branch
      %97 = sbr.rel (0) target = $region45
    $region44: #{tpu_custom_call.1} parent=1 // pred_region
      %98 = dma.done [#allocation6], 49152
    $region45: #{tpu_custom_call.1} parent=1 // pred_fallthru
      _
    // Predicated region
    $region46: #{tpu_custom_call.1} parent=1 // pred_check
      _
    $region47: #{tpu_custom_call.1} parent=1 // pred_check_branch
      %100 = sbr.rel (0) target = $region49
    $region48: #{tpu_custom_call.1} parent=1 // pred_region
      %101 = dma.done [#allocation9], 8192
    $region49: #{tpu_custom_call.1} parent=1 // pred_fallthru
      _
    // Predicated region
    $region50: #{tpu_custom_call.1} parent=1 // pred_check
      _
    $region51: #{tpu_custom_call.1} parent=1 // pred_check_branch
      %103 = sbr.rel (0) target = $region53
    $region52: #{tpu_custom_call.1} parent=1 // pred_region
      %104 = dma.done [#allocation9], 512
    $region53: #{tpu_custom_call.1} parent=1 // pred_fallthru
      _
    // Predicated region
    $region54: #{tpu_custom_call.1} parent=1 // pred_check
      _
    $region55: #{tpu_custom_call.1} parent=1 // pred_check_branch
      %106 = sbr.rel (0) target = $region57
    $region56: #{tpu_custom_call.1} parent=1 // pred_region
      %107 = dma.done [#allocation12], 128
    $region57: #{tpu_custom_call.1} parent=1 // pred_fallthru
      _
    %v108 = vld [vmem:[#allocation2] sm:$0xff]
    %v109 = vld [vmem:[#allocation2 + $0x8] sm:$0xff]
    %v110 = vld [vmem:[#allocation2 + $0x10] sm:$0xff]
    %v111 = vld [vmem:[#allocation2 + $0x18] sm:$0xff]
    %v112 = vld [vmem:[%s4] sm:$0xff]
    %v113 = vld [vmem:[%s4 + $0x8] sm:$0xff]
    %s114 = scalar_lea.vmem %s4, 16
    %v115 = vld [vmem:[%s114] sm:$0xff]
    %v116 = vld [vmem:[%s114 + $0x8] sm:$0xff]
    %v117 = vld [vmem:[%s5] sm:$0xff]
    %v118 = vld [vmem:[%s5 + $0x8] sm:$0xff]
    %v119 = vld [vmem:[%s5 + $0x10] sm:$0xff]
    %v120 = vld [vmem:[%s5 + $0x18] sm:$0xff]
    %v121 = vld [vmem:[%s5 + $0x20] sm:$0xff]
    %v122 = vld [vmem:[%s5 + $0x28] sm:$0xff]
    %v123 = vld [vmem:[%s5 + $0x30] sm:$0xff]
    %v124 = vld [vmem:[%s5 + $0x38] sm:$0xff]
    %v125 = vld [vmem:[%s5 + $0x40] sm:$0xff]
    %v126 = vld [vmem:[%s5 + $0x48] sm:$0xff]
    %v127 = vld [vmem:[%s5 + $0x50] sm:$0xff]
    %v128 = vld [vmem:[%s5 + $0x58] sm:$0xff]
    %v129 = vld [vmem:[%s5 + $0x60] sm:$0xff]
    %v130 = vld [vmem:[%s5 + $0x68] sm:$0xff]
    %v131 = vld [vmem:[%s5 + $0x70] sm:$0xff]
    %v132 = vld [vmem:[%s5 + $0x78] sm:$0xff]
    %v133 = vld [vmem:[%s5 + $0x80] sm:$0xff]
    %v134 = vld [vmem:[%s5 + $0x88] sm:$0xff]
    %v135 = vld [vmem:[%s5 + $0x90] sm:$0xff]
    %v136 = vld [vmem:[%s5 + $0x98] sm:$0xff]
    %v137 = vld [vmem:[%s5 + $0xa0] sm:$0xff]
    %v138 = vld [vmem:[%s5 + $0xa8] sm:$0xff]
    %v139 = vld [vmem:[%s5 + $0xb0] sm:$0xff]
    %v140 = vld [vmem:[%s5 + $0xb8] sm:$0xff]
    %v141 = vld [vmem:[%s5 + $0xc0] sm:$0xff]
    %v142 = vld [vmem:[%s5 + $0xc8] sm:$0xff]
    %v143 = vld [vmem:[%s5 + $0xd0] sm:$0xff]
    %v144 = vld [vmem:[%s5 + $0xd8] sm:$0xff]
    %v145 = vld [vmem:[%s5 + $0xe0] sm:$0xff]
    %v146 = vld [vmem:[%s5 + $0xe8] sm:$0xff]
    %v147 = vld [vmem:[%s5 + $0xf0] sm:$0xff]
    %v148 = vld [vmem:[%s5 + $0xf8] sm:$0xff]
    %v149 = vld [vmem:[%s5 + $0x100] sm:$0xff]
    %v150 = vld [vmem:[%s5 + $0x108] sm:$0xff]
    %v151 = vld [vmem:[%s5 + $0x110] sm:$0xff]
    %v152 = vld [vmem:[%s5 + $0x118] sm:$0xff]
    %v153 = vld [vmem:[%s5 + $0x120] sm:$0xff]
    %v154 = vld [vmem:[%s5 + $0x128] sm:$0xff]
    %v155 = vld [vmem:[%s5 + $0x130] sm:$0xff]
    %v156 = vld [vmem:[%s5 + $0x138] sm:$0xff]
    %v157 = vld [vmem:[%s5 + $0x140] sm:$0xff]
    %v158 = vld [vmem:[%s5 + $0x148] sm:$0xff]
    %v159 = vld [vmem:[%s5 + $0x150] sm:$0xff]
    %v160 = vld [vmem:[%s5 + $0x158] sm:$0xff]
    %v161 = vld [vmem:[%s5 + $0x160] sm:$0xff]
    %v162 = vld [vmem:[%s5 + $0x168] sm:$0xff]
    %v163 = vld [vmem:[%s5 + $0x170] sm:$0xff]
    %v164 = vld [vmem:[%s5 + $0x178] sm:$0xff]
    %v165 = vld [vmem:[%s5 + $0x180] sm:$0xff]
    %v166 = vld [vmem:[%s5 + $0x188] sm:$0xff]
    %v167 = vld [vmem:[%s5 + $0x190] sm:$0xff]
    %v168 = vld [vmem:[%s5 + $0x198] sm:$0xff]
    %v169 = vld [vmem:[%s5 + $0x1a0] sm:$0xff]
    %v170 = vld [vmem:[%s5 + $0x1a8] sm:$0xff]
    %v171 = vld [vmem:[%s5 + $0x1b0] sm:$0xff]
    %v172 = vld [vmem:[%s5 + $0x1b8] sm:$0xff]
    %v173 = vld [vmem:[%s5 + $0x1c0] sm:$0xff]
    %v174 = vld [vmem:[%s5 + $0x1c8] sm:$0xff]
    %v175 = vld [vmem:[%s5 + $0x1d0] sm:$0xff]
    %v176 = vld [vmem:[%s5 + $0x1d8] sm:$0xff]
    %v177 = vld [vmem:[%s5 + $0x1e0] sm:$0xff]
    %v178 = vld [vmem:[%s5 + $0x1e8] sm:$0xff]
    %v179 = vld [vmem:[%s5 + $0x1f0] sm:$0xff]
    %v180 = vld [vmem:[%s5 + $0x1f8] sm:$0xff]
    %v181 = vld [vmem:[#allocation10] sm:$0xff]
    %v182 = vld [vmem:[#allocation10 + $0x8] sm:$0xff]
    %v183 = vld [vmem:[#allocation10 + $0x10] sm:$0xff]
    %v184 = vld [vmem:[#allocation10 + $0x18] sm:$0xff]
    %v185 = vpack.c.bf16 %v110, %v108
    %v186 = vpack.c.bf16 %v111, %v109
    %s187 = scalar_lea.vmem [#allocation5], 512
    %v188 = vld [vmem:[%s187] sm:$0xff]
    %v189 = vld [vmem:[%s187 + $0x8] sm:$0xff]
    %v190 = vld [vmem:[%s187 + $0x10] sm:$0xff]
    %v191 = vld [vmem:[%s187 + $0x18] sm:$0xff]
    %v192 = vld [vmem:[%s187 + $0x20] sm:$0xff]
    %v193 = vld [vmem:[%s187 + $0x28] sm:$0xff]
    %v194 = vld [vmem:[%s187 + $0x30] sm:$0xff]
    %v195 = vld [vmem:[%s187 + $0x38] sm:$0xff]
    %v196 = vld [vmem:[%s187 + $0x40] sm:$0xff]
    %v197 = vld [vmem:[%s187 + $0x48] sm:$0xff]
    %v198 = vld [vmem:[%s187 + $0x50] sm:$0xff]
    %v199 = vld [vmem:[%s187 + $0x58] sm:$0xff]
    %v200 = vld [vmem:[%s187 + $0x60] sm:$0xff]
    %v201 = vld [vmem:[%s187 + $0x68] sm:$0xff]
    %v202 = vld [vmem:[%s187 + $0x70] sm:$0xff]
    %v203 = vld [vmem:[%s187 + $0x78] sm:$0xff]
    %v204 = vld [vmem:[%s187 + $0x80] sm:$0xff]
    %v205 = vld [vmem:[%s187 + $0x88] sm:$0xff]
    %v206 = vld [vmem:[%s187 + $0x90] sm:$0xff]
    %v207 = vld [vmem:[%s187 + $0x98] sm:$0xff]
    %v208 = vld [vmem:[%s187 + $0xa0] sm:$0xff]
    %v209 = vld [vmem:[%s187 + $0xa8] sm:$0xff]
    %v210 = vld [vmem:[%s187 + $0xb0] sm:$0xff]
    %v211 = vld [vmem:[%s187 + $0xb8] sm:$0xff]
    %v212 = vld [vmem:[%s187 + $0xc0] sm:$0xff]
    %v213 = vld [vmem:[%s187 + $0xc8] sm:$0xff]
    %v214 = vld [vmem:[%s187 + $0xd0] sm:$0xff]
    %v215 = vld [vmem:[%s187 + $0xd8] sm:$0xff]
    %v216 = vld [vmem:[%s187 + $0xe0] sm:$0xff]
    %v217 = vld [vmem:[%s187 + $0xe8] sm:$0xff]
    %v218 = vld [vmem:[%s187 + $0xf0] sm:$0xff]
    %v219 = vld [vmem:[%s187 + $0xf8] sm:$0xff]
    %v220 = vld [vmem:[%s187 + $0x100] sm:$0xff]
    %v221 = vld [vmem:[%s187 + $0x108] sm:$0xff]
    %v222 = vld [vmem:[%s187 + $0x110] sm:$0xff]
    %v223 = vld [vmem:[%s187 + $0x118] sm:$0xff]
    %v224 = vld [vmem:[%s187 + $0x120] sm:$0xff]
    %v225 = vld [vmem:[%s187 + $0x128] sm:$0xff]
    %v226 = vld [vmem:[%s187 + $0x130] sm:$0xff]
    %v227 = vld [vmem:[%s187 + $0x138] sm:$0xff]
    %v228 = vld [vmem:[%s187 + $0x140] sm:$0xff]
    %v229 = vld [vmem:[%s187 + $0x148] sm:$0xff]
    %v230 = vld [vmem:[%s187 + $0x150] sm:$0xff]
    %v231 = vld [vmem:[%s187 + $0x158] sm:$0xff]
    %v232 = vld [vmem:[%s187 + $0x160] sm:$0xff]
    %v233 = vld [vmem:[%s187 + $0x168] sm:$0xff]
    %v234 = vld [vmem:[%s187 + $0x170] sm:$0xff]
    %v235 = vld [vmem:[%s187 + $0x178] sm:$0xff]
    %v236 = vld [vmem:[%s187 + $0x180] sm:$0xff]
    %v237 = vld [vmem:[%s187 + $0x188] sm:$0xff]
    %v238 = vld [vmem:[%s187 + $0x190] sm:$0xff]
    %v239 = vld [vmem:[%s187 + $0x198] sm:$0xff]
    %v240 = vld [vmem:[%s187 + $0x1a0] sm:$0xff]
    %v241 = vld [vmem:[%s187 + $0x1a8] sm:$0xff]
    %v242 = vld [vmem:[%s187 + $0x1b0] sm:$0xff]
    %v243 = vld [vmem:[%s187 + $0x1b8] sm:$0xff]
    %v244 = vld [vmem:[%s187 + $0x1c0] sm:$0xff]
    %v245 = vld [vmem:[%s187 + $0x1c8] sm:$0xff]
    %v246 = vld [vmem:[%s187 + $0x1d0] sm:$0xff]
    %v247 = vld [vmem:[%s187 + $0x1d8] sm:$0xff]
    %v248 = vld [vmem:[%s187 + $0x1e0] sm:$0xff]
    %v249 = vld [vmem:[%s187 + $0x1e8] sm:$0xff]
    %v250 = vld [vmem:[%s187 + $0x1f0] sm:$0xff]
    %v251 = vld [vmem:[%s187 + $0x1f8] sm:$0xff]
    %v252 = vrot.slane %v108, 7
    %v253 = vrot.slane %v109, 7
    %v254 = vrot.slane %v110, 7
    %v255 = vrot.slane %v111, 7
    %v256 = vlaneseq
    %v257 = vshrl.u32 %v256, 7
    %vm258 = vcmp.lt.s32.totalorder %v257, 1
    %v259 = vsel %vm258, %v252, %v254
    %v260 = vsel %vm258, %v253, %v255
    %v261 = vsel %vm258, %v254, %v252
    %v262 = vsel %vm258, %v255, %v253
    %264 = vset.pattern.permute.xlu0 0
    %265 = vperm.xlu0 %264, %v112
    %v266 = vpop.permute.xlu0 %265
    %269 = vset.pattern.permute.xlu0 0
    %270 = vperm.xlu0 %269, %v113
    %v271 = vpop.permute.xlu0 %270
    %v273 = vmul.f32 %v261, %v266
    %v274 = vmul.f32 %v262, %v266
    %v275 = vmul.f32 %v259, %v271
    %v276 = vmul.f32 %v260, %v271
    %v277 = vpack.c.bf16 %v275, %v273
    %v278 = vpack.c.bf16 %v276, %v274
    %v279 = vld [vmem:[#allocation5] sm:$0xff]
    %v280 = vld [vmem:[#allocation5 + $0x8] sm:$0xff]
    %v281 = vld [vmem:[#allocation5 + $0x10] sm:$0xff]
    %v282 = vld [vmem:[#allocation5 + $0x18] sm:$0xff]
    %v283 = vld [vmem:[#allocation5 + $0x20] sm:$0xff]
    %v284 = vld [vmem:[#allocation5 + $0x28] sm:$0xff]
    %v285 = vld [vmem:[#allocation5 + $0x30] sm:$0xff]
    %v286 = vld [vmem:[#allocation5 + $0x38] sm:$0xff]
    %v287 = vld [vmem:[#allocation5 + $0x40] sm:$0xff]
    %v288 = vld [vmem:[#allocation5 + $0x48] sm:$0xff]
    %v289 = vld [vmem:[#allocation5 + $0x50] sm:$0xff]
    %v290 = vld [vmem:[#allocation5 + $0x58] sm:$0xff]
    %v291 = vld [vmem:[#allocation5 + $0x60] sm:$0xff]
    %v292 = vld [vmem:[#allocation5 + $0x68] sm:$0xff]
    %v293 = vld [vmem:[#allocation5 + $0x70] sm:$0xff]
    %v294 = vld [vmem:[#allocation5 + $0x78] sm:$0xff]
    %v295 = vld [vmem:[#allocation5 + $0x80] sm:$0xff]
    %v296 = vld [vmem:[#allocation5 + $0x88] sm:$0xff]
    %v297 = vld [vmem:[#allocation5 + $0x90] sm:$0xff]
    %v298 = vld [vmem:[#allocation5 + $0x98] sm:$0xff]
    %v299 = vld [vmem:[#allocation5 + $0xa0] sm:$0xff]
    %v300 = vld [vmem:[#allocation5 + $0xa8] sm:$0xff]
    %v301 = vld [vmem:[#allocation5 + $0xb0] sm:$0xff]
    %v302 = vld [vmem:[#allocation5 + $0xb8] sm:$0xff]
    %v303 = vld [vmem:[#allocation5 + $0xc0] sm:$0xff]
    %v304 = vld [vmem:[#allocation5 + $0xc8] sm:$0xff]
    %v305 = vld [vmem:[#allocation5 + $0xd0] sm:$0xff]
    %v306 = vld [vmem:[#allocation5 + $0xd8] sm:$0xff]
    %v307 = vld [vmem:[#allocation5 + $0xe0] sm:$0xff]
    %v308 = vld [vmem:[#allocation5 + $0xe8] sm:$0xff]
    %v309 = vld [vmem:[#allocation5 + $0xf0] sm:$0xff]
    %v310 = vld [vmem:[#allocation5 + $0xf8] sm:$0xff]
    %v311 = vld [vmem:[#allocation5 + $0x100] sm:$0xff]
    %v312 = vld [vmem:[#allocation5 + $0x108] sm:$0xff]
    %v313 = vld [vmem:[#allocation5 + $0x110] sm:$0xff]
    %v314 = vld [vmem:[#allocation5 + $0x118] sm:$0xff]
    %v315 = vld [vmem:[#allocation5 + $0x120] sm:$0xff]
    %v316 = vld [vmem:[#allocation5 + $0x128] sm:$0xff]
    %v317 = vld [vmem:[#allocation5 + $0x130] sm:$0xff]
    %v318 = vld [vmem:[#allocation5 + $0x138] sm:$0xff]
    %v319 = vld [vmem:[#allocation5 + $0x140] sm:$0xff]
    %v320 = vld [vmem:[#allocation5 + $0x148] sm:$0xff]
    %v321 = vld [vmem:[#allocation5 + $0x150] sm:$0xff]
    %v322 = vld [vmem:[#allocation5 + $0x158] sm:$0xff]
    %v323 = vld [vmem:[#allocation5 + $0x160] sm:$0xff]
    %v324 = vld [vmem:[#allocation5 + $0x168] sm:$0xff]
    %v325 = vld [vmem:[#allocation5 + $0x170] sm:$0xff]
    %v326 = vld [vmem:[#allocation5 + $0x178] sm:$0xff]
    %v327 = vld [vmem:[#allocation5 + $0x180] sm:$0xff]
    %v328 = vld [vmem:[#allocation5 + $0x188] sm:$0xff]
    %v329 = vld [vmem:[#allocation5 + $0x190] sm:$0xff]
    %v330 = vld [vmem:[#allocation5 + $0x198] sm:$0xff]
    %v331 = vld [vmem:[#allocation5 + $0x1a0] sm:$0xff]
    %v332 = vld [vmem:[#allocation5 + $0x1a8] sm:$0xff]
    %v333 = vld [vmem:[#allocation5 + $0x1b0] sm:$0xff]
    %v334 = vld [vmem:[#allocation5 + $0x1b8] sm:$0xff]
    %v335 = vld [vmem:[#allocation5 + $0x1c0] sm:$0xff]
    %v336 = vld [vmem:[#allocation5 + $0x1c8] sm:$0xff]
    %v337 = vld [vmem:[#allocation5 + $0x1d0] sm:$0xff]
    %v338 = vld [vmem:[#allocation5 + $0x1d8] sm:$0xff]
    %v339 = vld [vmem:[#allocation5 + $0x1e0] sm:$0xff]
    %v340 = vld [vmem:[#allocation5 + $0x1e8] sm:$0xff]
    %v341 = vld [vmem:[#allocation5 + $0x1f0] sm:$0xff]
    %v342 = vld [vmem:[#allocation5 + $0x1f8] sm:$0xff]
    %v407 = vunpack.c.l.b16 %v279
    %v408 = vunpack.c.h.b16 %v279
    %v409 = vunpack.c.l.b16 %v280
    %v410 = vunpack.c.h.b16 %v280
    %v411 = vunpack.c.l.b16 %v281
    %v412 = vunpack.c.h.b16 %v281
    %v413 = vunpack.c.l.b16 %v282
    %v414 = vunpack.c.h.b16 %v282
    %v415 = vunpack.c.l.b16 %v283
    %v416 = vunpack.c.h.b16 %v283
    %v417 = vunpack.c.l.b16 %v284
    %v418 = vunpack.c.h.b16 %v284
    %v419 = vunpack.c.l.b16 %v285
    %v420 = vunpack.c.h.b16 %v285
    %v421 = vunpack.c.l.b16 %v286
    %v422 = vunpack.c.h.b16 %v286
    %v423 = vunpack.c.l.b16 %v287
    %v424 = vunpack.c.h.b16 %v287
    %v425 = vunpack.c.l.b16 %v288
    %v426 = vunpack.c.h.b16 %v288
    %v427 = vunpack.c.l.b16 %v289
    %v428 = vunpack.c.h.b16 %v289
    %v429 = vunpack.c.l.b16 %v290
    %v430 = vunpack.c.h.b16 %v290
    %v431 = vunpack.c.l.b16 %v291
    %v432 = vunpack.c.h.b16 %v291
    %v433 = vunpack.c.l.b16 %v292
    %v434 = vunpack.c.h.b16 %v292
    %v435 = vunpack.c.l.b16 %v293
    %v436 = vunpack.c.h.b16 %v293
    %v437 = vunpack.c.l.b16 %v294
    %v438 = vunpack.c.h.b16 %v294
    %v439 = vunpack.c.l.b16 %v295
    %v440 = vunpack.c.h.b16 %v295
    %v441 = vunpack.c.l.b16 %v296
    %v442 = vunpack.c.h.b16 %v296
    %v443 = vunpack.c.l.b16 %v297
    %v444 = vunpack.c.h.b16 %v297
    %v445 = vunpack.c.l.b16 %v298
    %v446 = vunpack.c.h.b16 %v298
    %v447 = vunpack.c.l.b16 %v299
    %v448 = vunpack.c.h.b16 %v299
    %v449 = vunpack.c.l.b16 %v300
    %v450 = vunpack.c.h.b16 %v300
    %v451 = vunpack.c.l.b16 %v301
    %v452 = vunpack.c.h.b16 %v301
    %v453 = vunpack.c.l.b16 %v302
    %v454 = vunpack.c.h.b16 %v302
    %v455 = vunpack.c.l.b16 %v303
    %v456 = vunpack.c.h.b16 %v303
    %v457 = vunpack.c.l.b16 %v304
    %v458 = vunpack.c.h.b16 %v304
    %v459 = vunpack.c.l.b16 %v305
    %v460 = vunpack.c.h.b16 %v305
    %v461 = vunpack.c.l.b16 %v306
    %v462 = vunpack.c.h.b16 %v306
    %v463 = vunpack.c.l.b16 %v307
    %v464 = vunpack.c.h.b16 %v307
    %v465 = vunpack.c.l.b16 %v308
    %v466 = vunpack.c.h.b16 %v308
    %v467 = vunpack.c.l.b16 %v309
    %v468 = vunpack.c.h.b16 %v309
    %v469 = vunpack.c.l.b16 %v310
    %v470 = vunpack.c.h.b16 %v310
    %v471 = vunpack.c.l.b16 %v311
    %v472 = vunpack.c.h.b16 %v311
    %v473 = vunpack.c.l.b16 %v312
    %v474 = vunpack.c.h.b16 %v312
    %v475 = vunpack.c.l.b16 %v313
    %v476 = vunpack.c.h.b16 %v313
    %v477 = vunpack.c.l.b16 %v314
    %v478 = vunpack.c.h.b16 %v314
    %v479 = vunpack.c.l.b16 %v315
    %v480 = vunpack.c.h.b16 %v315
    %v481 = vunpack.c.l.b16 %v316
    %v482 = vunpack.c.h.b16 %v316
    %v483 = vunpack.c.l.b16 %v317
    %v484 = vunpack.c.h.b16 %v317
    %v485 = vunpack.c.l.b16 %v318
    %v486 = vunpack.c.h.b16 %v318
    %v487 = vunpack.c.l.b16 %v319
    %v488 = vunpack.c.h.b16 %v319
    %v489 = vunpack.c.l.b16 %v320
    %v490 = vunpack.c.h.b16 %v320
    %v491 = vunpack.c.l.b16 %v321
    %v492 = vunpack.c.h.b16 %v321
    %v493 = vunpack.c.l.b16 %v322
    %v494 = vunpack.c.h.b16 %v322
    %v495 = vunpack.c.l.b16 %v323
    %v496 = vunpack.c.h.b16 %v323
    %v497 = vunpack.c.l.b16 %v324
    %v498 = vunpack.c.h.b16 %v324
    %v499 = vunpack.c.l.b16 %v325
    %v500 = vunpack.c.h.b16 %v325
    %v501 = vunpack.c.l.b16 %v326
    %v502 = vunpack.c.h.b16 %v326
    %v503 = vunpack.c.l.b16 %v327
    %v504 = vunpack.c.h.b16 %v327
    %v505 = vunpack.c.l.b16 %v328
    %v506 = vunpack.c.h.b16 %v328
    %v507 = vunpack.c.l.b16 %v329
    %v508 = vunpack.c.h.b16 %v329
    %v509 = vunpack.c.l.b16 %v330
    %v510 = vunpack.c.h.b16 %v330
    %v511 = vunpack.c.l.b16 %v331
    %v512 = vunpack.c.h.b16 %v331
    %v513 = vunpack.c.l.b16 %v332
    %v514 = vunpack.c.h.b16 %v332
    %v515 = vunpack.c.l.b16 %v333
    %v516 = vunpack.c.h.b16 %v333
    %v517 = vunpack.c.l.b16 %v334
    %v518 = vunpack.c.h.b16 %v334
    %v519 = vunpack.c.l.b16 %v335
    %v520 = vunpack.c.h.b16 %v335
    %v521 = vunpack.c.l.b16 %v336
    %v522 = vunpack.c.h.b16 %v336
    %v523 = vunpack.c.l.b16 %v337
    %v524 = vunpack.c.h.b16 %v337
    %v525 = vunpack.c.l.b16 %v338
    %v526 = vunpack.c.h.b16 %v338
    %v527 = vunpack.c.l.b16 %v339
    %v528 = vunpack.c.h.b16 %v339
    %v529 = vunpack.c.l.b16 %v340
    %v530 = vunpack.c.h.b16 %v340
    %v531 = vunpack.c.l.b16 %v341
    %v532 = vunpack.c.h.b16 %v341
    %v533 = vunpack.c.l.b16 %v342
    %v534 = vunpack.c.h.b16 %v342
    %v535 = vpack.c.b16 %v411, %v407
    %v536 = vpack.c.b16 %v412, %v408
    %v537 = vpack.c.b16 %v413, %v409
    %v538 = vpack.c.b16 %v414, %v410
    %v539 = vpack.c.b16 %v419, %v415
    %v540 = vpack.c.b16 %v420, %v416
    %v541 = vpack.c.b16 %v421, %v417
    %v542 = vpack.c.b16 %v422, %v418
    %v543 = vpack.c.b16 %v427, %v423
    %v544 = vpack.c.b16 %v428, %v424
    %v545 = vpack.c.b16 %v429, %v425
    %v546 = vpack.c.b16 %v430, %v426
    %v547 = vpack.c.b16 %v435, %v431
    %v548 = vpack.c.b16 %v436, %v432
    %v549 = vpack.c.b16 %v437, %v433
    %v550 = vpack.c.b16 %v438, %v434
    %v551 = vpack.c.b16 %v443, %v439
    %v552 = vpack.c.b16 %v444, %v440
    %v553 = vpack.c.b16 %v445, %v441
    %v554 = vpack.c.b16 %v446, %v442
    %v555 = vpack.c.b16 %v451, %v447
    %v556 = vpack.c.b16 %v452, %v448
    %v557 = vpack.c.b16 %v453, %v449
    %v558 = vpack.c.b16 %v454, %v450
    %v559 = vpack.c.b16 %v459, %v455
    %v560 = vpack.c.b16 %v460, %v456
    %v561 = vpack.c.b16 %v461, %v457
    %v562 = vpack.c.b16 %v462, %v458
    %v563 = vpack.c.b16 %v467, %v463
    %v564 = vpack.c.b16 %v468, %v464
    %v565 = vpack.c.b16 %v469, %v465
    %v566 = vpack.c.b16 %v470, %v466
    %v567 = vpack.c.b16 %v475, %v471
    %v568 = vpack.c.b16 %v476, %v472
    %v569 = vpack.c.b16 %v477, %v473
    %v570 = vpack.c.b16 %v478, %v474
    %v571 = vpack.c.b16 %v483, %v479
    %v572 = vpack.c.b16 %v484, %v480
    %v573 = vpack.c.b16 %v485, %v481
    %v574 = vpack.c.b16 %v486, %v482
    %v575 = vpack.c.b16 %v491, %v487
    %v576 = vpack.c.b16 %v492, %v488
    %v577 = vpack.c.b16 %v493, %v489
    %v578 = vpack.c.b16 %v494, %v490
    %v579 = vpack.c.b16 %v499, %v495
    %v580 = vpack.c.b16 %v500, %v496
    %v581 = vpack.c.b16 %v501, %v497
    %v582 = vpack.c.b16 %v502, %v498
    %v583 = vpack.c.b16 %v507, %v503
    %v584 = vpack.c.b16 %v508, %v504
    %v585 = vpack.c.b16 %v509, %v505
    %v586 = vpack.c.b16 %v510, %v506
    %v587 = vpack.c.b16 %v515, %v511
    %v588 = vpack.c.b16 %v516, %v512
    %v589 = vpack.c.b16 %v517, %v513
    %v590 = vpack.c.b16 %v518, %v514
    %v591 = vpack.c.b16 %v523, %v519
    %v592 = vpack.c.b16 %v524, %v520
    %v593 = vpack.c.b16 %v525, %v521
    %v594 = vpack.c.b16 %v526, %v522
    %v595 = vpack.c.b16 %v531, %v527
    %v596 = vpack.c.b16 %v532, %v528
    %v597 = vpack.c.b16 %v533, %v529
    %v598 = vpack.c.b16 %v534, %v530
    %663 = vmatprep.subr.bf16.mxu0 %v564
    %664 = vmatpush1.bf16.msra.mxu0 %v563
    %665 = vmatprep.subr.bf16.mxu0 %v560
    %666 = vmatpush1.bf16.msra.mxu0 %v559
    %667 = vmatprep.subr.bf16.mxu0 %v556
    %668 = vmatpush1.bf16.msra.mxu0 %v555
    %669 = vmatprep.subr.bf16.mxu0 %v552
    %670 = vmatpush1.bf16.msra.mxu0 %v551
    %671 = vmatprep.subr.bf16.mxu0 %v548
    %672 = vmatpush1.bf16.msra.mxu0 %v547
    %673 = vmatprep.subr.bf16.mxu0 %v544
    %674 = vmatpush1.bf16.msra.mxu0 %v543
    %675 = vmatprep.subr.bf16.mxu0 %v540
    %676 = vmatpush1.bf16.msra.mxu0 %v539
    %677 = vmatprep.subr.bf16.mxu0 %v536
    %678 = vmatpush1.bf16.msra.mxu0 %v535
    %679 = vmatprep.subr.bf16.mxu0 %v596
    %680 = vmatpush2.bf16.msra.mxu0 %v595
    %681 = vmatprep.subr.bf16.mxu0 %v592
    %682 = vmatpush2.bf16.msra.mxu0 %v591
    %683 = vmatprep.subr.bf16.mxu0 %v588
    %684 = vmatpush2.bf16.msra.mxu0 %v587
    %685 = vmatprep.subr.bf16.mxu0 %v584
    %686 = vmatpush2.bf16.msra.mxu0 %v583
    %687 = vmatprep.subr.bf16.mxu0 %v580
    %688 = vmatpush2.bf16.msra.mxu0 %v579
    %689 = vmatprep.subr.bf16.mxu0 %v576
    %690 = vmatpush2.bf16.msra.mxu0 %v575
    %691 = vmatprep.subr.bf16.mxu0 %v572
    %692 = vmatpush2.bf16.msra.mxu0 %v571
    %693 = vmatprep.subr.bf16.mxu0 %v568
    %694 = vmatpush2.bf16.msra.mxu0 %v567
    %695 = vmatprep.mubr.bf16.mxu0 %v278
    %696 = vmatmul.mubr.bf16.gmra.mxu0 %v277
    %v697 = vpop.f32.mrf.mxu0
    %v698 = vadd.f32 0.0, %v697
    %v699 = vpop.f32.mrf.mxu0
    %v700 = vadd.f32 0.0, %v699
    %v701 = vpop.f32.mrf.mxu0
    %v702 = vadd.f32 0.0, %v701
    %v703 = vpop.f32.mrf.mxu0
    %v704 = vadd.f32 0.0, %v703
    %705 = vdwg.mxu0
    %706 = vmatprep.subr.bf16.mxu0 %v566
    %707 = vmatpush1.bf16.msra.mxu0 %v565
    %708 = vmatprep.subr.bf16.mxu0 %v562
    %709 = vmatpush1.bf16.msra.mxu0 %v561
    %710 = vmatprep.subr.bf16.mxu0 %v558
    %711 = vmatpush1.bf16.msra.mxu0 %v557
    %712 = vmatprep.subr.bf16.mxu0 %v554
    %713 = vmatpush1.bf16.msra.mxu0 %v553
    %714 = vmatprep.subr.bf16.mxu0 %v550
    %715 = vmatpush1.bf16.msra.mxu0 %v549
    %716 = vmatprep.subr.bf16.mxu0 %v546
    %717 = vmatpush1.bf16.msra.mxu0 %v545
    %718 = vmatprep.subr.bf16.mxu0 %v542
    %719 = vmatpush1.bf16.msra.mxu0 %v541
    %720 = vmatprep.subr.bf16.mxu0 %v538
    %721 = vmatpush1.bf16.msra.mxu0 %v537
    %722 = vmatprep.subr.bf16.mxu0 %v598
    %723 = vmatpush2.bf16.msra.mxu0 %v597
    %724 = vmatprep.subr.bf16.mxu0 %v594
    %725 = vmatpush2.bf16.msra.mxu0 %v593
    %726 = vmatprep.subr.bf16.mxu0 %v590
    %727 = vmatpush2.bf16.msra.mxu0 %v589
    %728 = vmatprep.subr.bf16.mxu0 %v586
    %729 = vmatpush2.bf16.msra.mxu0 %v585
    %730 = vmatprep.subr.bf16.mxu0 %v582
    %731 = vmatpush2.bf16.msra.mxu0 %v581
    %732 = vmatprep.subr.bf16.mxu0 %v578
    %733 = vmatpush2.bf16.msra.mxu0 %v577
    %734 = vmatprep.subr.bf16.mxu0 %v574
    %735 = vmatpush2.bf16.msra.mxu0 %v573
    %736 = vmatprep.subr.bf16.mxu0 %v570
    %737 = vmatpush2.bf16.msra.mxu0 %v569
    %738 = vmatprep.mubr.bf16.mxu0 %v278
    %739 = vmatmul.mubr.bf16.gmra.mxu0 %v277
    %v740 = vpop.f32.mrf.mxu0
    %v741 = vadd.f32 0.0, %v740
    %v742 = vpop.f32.mrf.mxu0
    %v743 = vadd.f32 0.0, %v742
    %v744 = vpop.f32.mrf.mxu0
    %v745 = vadd.f32 0.0, %v744
    %v746 = vpop.f32.mrf.mxu0
    %v747 = vadd.f32 0.0, %v746
    %748 = vdwg.mxu0
    %v813 = vunpack.c.l.b16 %v188
    %v814 = vunpack.c.h.b16 %v188
    %v815 = vunpack.c.l.b16 %v189
    %v816 = vunpack.c.h.b16 %v189
    %v817 = vunpack.c.l.b16 %v190
    %v818 = vunpack.c.h.b16 %v190
    %v819 = vunpack.c.l.b16 %v191
    %v820 = vunpack.c.h.b16 %v191
    %v821 = vunpack.c.l.b16 %v192
    %v822 = vunpack.c.h.b16 %v192
    %v823 = vunpack.c.l.b16 %v193
    %v824 = vunpack.c.h.b16 %v193
    %v825 = vunpack.c.l.b16 %v194
    %v826 = vunpack.c.h.b16 %v194
    %v827 = vunpack.c.l.b16 %v195
    %v828 = vunpack.c.h.b16 %v195
    %v829 = vunpack.c.l.b16 %v196
    %v830 = vunpack.c.h.b16 %v196
    %v831 = vunpack.c.l.b16 %v197
    %v832 = vunpack.c.h.b16 %v197
    %v833 = vunpack.c.l.b16 %v198
    %v834 = vunpack.c.h.b16 %v198
    %v835 = vunpack.c.l.b16 %v199
    %v836 = vunpack.c.h.b16 %v199
    %v837 = vunpack.c.l.b16 %v200
    %v838 = vunpack.c.h.b16 %v200
    %v839 = vunpack.c.l.b16 %v201
    %v840 = vunpack.c.h.b16 %v201
    %v841 = vunpack.c.l.b16 %v202
    %v842 = vunpack.c.h.b16 %v202
    %v843 = vunpack.c.l.b16 %v203
    %v844 = vunpack.c.h.b16 %v203
    %v845 = vunpack.c.l.b16 %v204
    %v846 = vunpack.c.h.b16 %v204
    %v847 = vunpack.c.l.b16 %v205
    %v848 = vunpack.c.h.b16 %v205
    %v849 = vunpack.c.l.b16 %v206
    %v850 = vunpack.c.h.b16 %v206
    %v851 = vunpack.c.l.b16 %v207
    %v852 = vunpack.c.h.b16 %v207
    %v853 = vunpack.c.l.b16 %v208
    %v854 = vunpack.c.h.b16 %v208
    %v855 = vunpack.c.l.b16 %v209
    %v856 = vunpack.c.h.b16 %v209
    %v857 = vunpack.c.l.b16 %v210
    %v858 = vunpack.c.h.b16 %v210
    %v859 = vunpack.c.l.b16 %v211
    %v860 = vunpack.c.h.b16 %v211
    %v861 = vunpack.c.l.b16 %v212
    %v862 = vunpack.c.h.b16 %v212
    %v863 = vunpack.c.l.b16 %v213
    %v864 = vunpack.c.h.b16 %v213
    %v865 = vunpack.c.l.b16 %v214
    %v866 = vunpack.c.h.b16 %v214
    %v867 = vunpack.c.l.b16 %v215
    %v868 = vunpack.c.h.b16 %v215
    %v869 = vunpack.c.l.b16 %v216
    %v870 = vunpack.c.h.b16 %v216
    %v871 = vunpack.c.l.b16 %v217
    %v872 = vunpack.c.h.b16 %v217
    %v873 = vunpack.c.l.b16 %v218
    %v874 = vunpack.c.h.b16 %v218
    %v875 = vunpack.c.l.b16 %v219
    %v876 = vunpack.c.h.b16 %v219
    %v877 = vunpack.c.l.b16 %v220
    %v878 = vunpack.c.h.b16 %v220
    %v879 = vunpack.c.l.b16 %v221
    %v880 = vunpack.c.h.b16 %v221
    %v881 = vunpack.c.l.b16 %v222
    %v882 = vunpack.c.h.b16 %v222
    %v883 = vunpack.c.l.b16 %v223
    %v884 = vunpack.c.h.b16 %v223
    %v885 = vunpack.c.l.b16 %v224
    %v886 = vunpack.c.h.b16 %v224
    %v887 = vunpack.c.l.b16 %v225
    %v888 = vunpack.c.h.b16 %v225
    %v889 = vunpack.c.l.b16 %v226
    %v890 = vunpack.c.h.b16 %v226
    %v891 = vunpack.c.l.b16 %v227
    %v892 = vunpack.c.h.b16 %v227
    %v893 = vunpack.c.l.b16 %v228
    %v894 = vunpack.c.h.b16 %v228
    %v895 = vunpack.c.l.b16 %v229
    %v896 = vunpack.c.h.b16 %v229
    %v897 = vunpack.c.l.b16 %v230
    %v898 = vunpack.c.h.b16 %v230
    %v899 = vunpack.c.l.b16 %v231
    %v900 = vunpack.c.h.b16 %v231
    %v901 = vunpack.c.l.b16 %v232
    %v902 = vunpack.c.h.b16 %v232
    %v903 = vunpack.c.l.b16 %v233
    %v904 = vunpack.c.h.b16 %v233
    %v905 = vunpack.c.l.b16 %v234
    %v906 = vunpack.c.h.b16 %v234
    %v907 = vunpack.c.l.b16 %v235
    %v908 = vunpack.c.h.b16 %v235
    %v909 = vunpack.c.l.b16 %v236
    %v910 = vunpack.c.h.b16 %v236
    %v911 = vunpack.c.l.b16 %v237
    %v912 = vunpack.c.h.b16 %v237
    %v913 = vunpack.c.l.b16 %v238
    %v914 = vunpack.c.h.b16 %v238
    %v915 = vunpack.c.l.b16 %v239
    %v916 = vunpack.c.h.b16 %v239
    %v917 = vunpack.c.l.b16 %v240
    %v918 = vunpack.c.h.b16 %v240
    %v919 = vunpack.c.l.b16 %v241
    %v920 = vunpack.c.h.b16 %v241
    %v921 = vunpack.c.l.b16 %v242
    %v922 = vunpack.c.h.b16 %v242
    %v923 = vunpack.c.l.b16 %v243
    %v924 = vunpack.c.h.b16 %v243
    %v925 = vunpack.c.l.b16 %v244
    %v926 = vunpack.c.h.b16 %v244
    %v927 = vunpack.c.l.b16 %v245
    %v928 = vunpack.c.h.b16 %v245
    %v929 = vunpack.c.l.b16 %v246
    %v930 = vunpack.c.h.b16 %v246
    %v931 = vunpack.c.l.b16 %v247
    %v932 = vunpack.c.h.b16 %v247
    %v933 = vunpack.c.l.b16 %v248
    %v934 = vunpack.c.h.b16 %v248
    %v935 = vunpack.c.l.b16 %v249
    %v936 = vunpack.c.h.b16 %v249
    %v937 = vunpack.c.l.b16 %v250
    %v938 = vunpack.c.h.b16 %v250
    %v939 = vunpack.c.l.b16 %v251
    %v940 = vunpack.c.h.b16 %v251
    %v941 = vpack.c.b16 %v817, %v813
    %v942 = vpack.c.b16 %v818, %v814
    %v943 = vpack.c.b16 %v819, %v815
    %v944 = vpack.c.b16 %v820, %v816
    %v945 = vpack.c.b16 %v825, %v821
    %v946 = vpack.c.b16 %v826, %v822
    %v947 = vpack.c.b16 %v827, %v823
    %v948 = vpack.c.b16 %v828, %v824
    %v949 = vpack.c.b16 %v833, %v829
    %v950 = vpack.c.b16 %v834, %v830
    %v951 = vpack.c.b16 %v835, %v831
    %v952 = vpack.c.b16 %v836, %v832
    %v953 = vpack.c.b16 %v841, %v837
    %v954 = vpack.c.b16 %v842, %v838
    %v955 = vpack.c.b16 %v843, %v839
    %v956 = vpack.c.b16 %v844, %v840
    %v957 = vpack.c.b16 %v849, %v845
    %v958 = vpack.c.b16 %v850, %v846
    %v959 = vpack.c.b16 %v851, %v847
    %v960 = vpack.c.b16 %v852, %v848
    %v961 = vpack.c.b16 %v857, %v853
    %v962 = vpack.c.b16 %v858, %v854
    %v963 = vpack.c.b16 %v859, %v855
    %v964 = vpack.c.b16 %v860, %v856
    %v965 = vpack.c.b16 %v865, %v861
    %v966 = vpack.c.b16 %v866, %v862
    %v967 = vpack.c.b16 %v867, %v863
    %v968 = vpack.c.b16 %v868, %v864
    %v969 = vpack.c.b16 %v873, %v869
    %v970 = vpack.c.b16 %v874, %v870
    %v971 = vpack.c.b16 %v875, %v871
    %v972 = vpack.c.b16 %v876, %v872
    %v973 = vpack.c.b16 %v881, %v877
    %v974 = vpack.c.b16 %v882, %v878
    %v975 = vpack.c.b16 %v883, %v879
    %v976 = vpack.c.b16 %v884, %v880
    %v977 = vpack.c.b16 %v889, %v885
    %v978 = vpack.c.b16 %v890, %v886
    %v979 = vpack.c.b16 %v891, %v887
    %v980 = vpack.c.b16 %v892, %v888
    %v981 = vpack.c.b16 %v897, %v893
    %v982 = vpack.c.b16 %v898, %v894
    %v983 = vpack.c.b16 %v899, %v895
    %v984 = vpack.c.b16 %v900, %v896
    %v985 = vpack.c.b16 %v905, %v901
    %v986 = vpack.c.b16 %v906, %v902
    %v987 = vpack.c.b16 %v907, %v903
    %v988 = vpack.c.b16 %v908, %v904
    %v989 = vpack.c.b16 %v913, %v909
    %v990 = vpack.c.b16 %v914, %v910
    %v991 = vpack.c.b16 %v915, %v911
    %v992 = vpack.c.b16 %v916, %v912
    %v993 = vpack.c.b16 %v921, %v917
    %v994 = vpack.c.b16 %v922, %v918
    %v995 = vpack.c.b16 %v923, %v919
    %v996 = vpack.c.b16 %v924, %v920
    %v997 = vpack.c.b16 %v929, %v925
    %v998 = vpack.c.b16 %v930, %v926
    %v999 = vpack.c.b16 %v931, %v927
    %v1000 = vpack.c.b16 %v932, %v928
    %v1001 = vpack.c.b16 %v937, %v933
    %v1002 = vpack.c.b16 %v938, %v934
    %v1003 = vpack.c.b16 %v939, %v935
    %v1004 = vpack.c.b16 %v940, %v936
    %1069 = vmatprep.subr.bf16.mxu0 %v970
    %1070 = vmatpush1.bf16.msra.mxu0 %v969
    %1071 = vmatprep.subr.bf16.mxu0 %v966
    %1072 = vmatpush1.bf16.msra.mxu0 %v965
    %1073 = vmatprep.subr.bf16.mxu0 %v962
    %1074 = vmatpush1.bf16.msra.mxu0 %v961
    %1075 = vmatprep.subr.bf16.mxu0 %v958
    %1076 = vmatpush1.bf16.msra.mxu0 %v957
    %1077 = vmatprep.subr.bf16.mxu0 %v954
    %1078 = vmatpush1.bf16.msra.mxu0 %v953
    %1079 = vmatprep.subr.bf16.mxu0 %v950
    %1080 = vmatpush1.bf16.msra.mxu0 %v949
    %1081 = vmatprep.subr.bf16.mxu0 %v946
    %1082 = vmatpush1.bf16.msra.mxu0 %v945
    %1083 = vmatprep.subr.bf16.mxu0 %v942
    %1084 = vmatpush1.bf16.msra.mxu0 %v941
    %1085 = vmatprep.subr.bf16.mxu0 %v1002
    %1086 = vmatpush2.bf16.msra.mxu0 %v1001
    %1087 = vmatprep.subr.bf16.mxu0 %v998
    %1088 = vmatpush2.bf16.msra.mxu0 %v997
    %1089 = vmatprep.subr.bf16.mxu0 %v994
    %1090 = vmatpush2.bf16.msra.mxu0 %v993
    %1091 = vmatprep.subr.bf16.mxu0 %v990
    %1092 = vmatpush2.bf16.msra.mxu0 %v989
    %1093 = vmatprep.subr.bf16.mxu0 %v986
    %1094 = vmatpush2.bf16.msra.mxu0 %v985
    %1095 = vmatprep.subr.bf16.mxu0 %v982
    %1096 = vmatpush2.bf16.msra.mxu0 %v981
    %1097 = vmatprep.subr.bf16.mxu0 %v978
    %1098 = vmatpush2.bf16.msra.mxu0 %v977
    %1099 = vmatprep.subr.bf16.mxu0 %v974
    %1100 = vmatpush2.bf16.msra.mxu0 %v973
    %1101 = vmatprep.mubr.bf16.mxu0 %v186
    %1102 = vmatmul.mubr.bf16.gmra.mxu0 %v185
    %v1103 = vpop.f32.mrf.mxu0
    %v1104 = vadd.f32 %v698, %v1103
    %v1105 = vpop.f32.mrf.mxu0
    %v1106 = vadd.f32 %v700, %v1105
    %v1107 = vpop.f32.mrf.mxu0
    %v1108 = vadd.f32 %v702, %v1107
    %v1109 = vpop.f32.mrf.mxu0
    %v1110 = vadd.f32 %v704, %v1109
    %1111 = vdwg.mxu0
    %1112 = vmatprep.subr.bf16.mxu0 %v972
    %1113 = vmatpush1.bf16.msra.mxu0 %v971
    %1114 = vmatprep.subr.bf16.mxu0 %v968
    %1115 = vmatpush1.bf16.msra.mxu0 %v967
    %1116 = vmatprep.subr.bf16.mxu0 %v964
    %1117 = vmatpush1.bf16.msra.mxu0 %v963
    %1118 = vmatprep.subr.bf16.mxu0 %v960
    %1119 = vmatpush1.bf16.msra.mxu0 %v959
    %1120 = vmatprep.subr.bf16.mxu0 %v956
    %1121 = vmatpush1.bf16.msra.mxu0 %v955
    %1122 = vmatprep.subr.bf16.mxu0 %v952
    %1123 = vmatpush1.bf16.msra.mxu0 %v951
    %1124 = vmatprep.subr.bf16.mxu0 %v948
    %1125 = vmatpush1.bf16.msra.mxu0 %v947
    %1126 = vmatprep.subr.bf16.mxu0 %v944
    %1127 = vmatpush1.bf16.msra.mxu0 %v943
    %1128 = vmatprep.subr.bf16.mxu0 %v1004
    %1129 = vmatpush2.bf16.msra.mxu0 %v1003
    %1130 = vmatprep.subr.bf16.mxu0 %v1000
    %1131 = vmatpush2.bf16.msra.mxu0 %v999
    %1132 = vmatprep.subr.bf16.mxu0 %v996
    %1133 = vmatpush2.bf16.msra.mxu0 %v995
    %1134 = vmatprep.subr.bf16.mxu0 %v992
    %1135 = vmatpush2.bf16.msra.mxu0 %v991
    %1136 = vmatprep.subr.bf16.mxu0 %v988
    %1137 = vmatpush2.bf16.msra.mxu0 %v987
    %1138 = vmatprep.subr.bf16.mxu0 %v984
    %1139 = vmatpush2.bf16.msra.mxu0 %v983
    %1140 = vmatprep.subr.bf16.mxu0 %v980
    %1141 = vmatpush2.bf16.msra.mxu0 %v979
    %1142 = vmatprep.subr.bf16.mxu0 %v976
    %1143 = vmatpush2.bf16.msra.mxu0 %v975
    %1144 = vmatprep.mubr.bf16.mxu0 %v186
    %1145 = vmatmul.mubr.bf16.gmra.mxu0 %v185
    %v1146 = vpop.f32.mrf.mxu0
    %v1147 = vadd.f32 %v741, %v1146
    %v1148 = vpop.f32.mrf.mxu0
    %v1149 = vadd.f32 %v743, %v1148
    %v1150 = vpop.f32.mrf.mxu0
    %v1151 = vadd.f32 %v745, %v1150
    %v1152 = vpop.f32.mrf.mxu0
    %v1153 = vadd.f32 %v747, %v1152
    %1154 = vdwg.mxu0
    %v1155 = vrot.slane %v108, 1
    %v1156 = vrot.slane %v109, 1
    %v1157 = vrot.slane %v110, 1
    %v1158 = vrot.slane %v111, 1
    %vm1159 = vcmp.lt.s32.totalorder %v257, 7
    %v1160 = vsel %vm1159, %v1155, %v1157
    %v1161 = vsel %vm1159, %v1156, %v1158
    %v1162 = vsel %vm1159, %v1157, %v1155
    %v1163 = vsel %vm1159, %v1158, %v1156
    %1165 = vset.pattern.permute.xlu0 0
    %1166 = vperm.xlu0 %1165, %v115
    %v1167 = vpop.permute.xlu0 %1166
    %1170 = vset.pattern.permute.xlu0 0
    %1171 = vperm.xlu0 %1170, %v116
    %v1172 = vpop.permute.xlu0 %1171
    %v1174 = vmul.f32 %v1160, %v1167
    %v1175 = vmul.f32 %v1161, %v1167
    %v1176 = vmul.f32 %v1162, %v1172
    %v1177 = vmul.f32 %v1163, %v1172
    %v1178 = vpack.c.bf16 %v1176, %v1174
    %v1179 = vpack.c.bf16 %v1177, %v1175
    %s1180 = scalar_lea.vmem [#allocation5], 1024
    %v1181 = vld [vmem:[%s1180] sm:$0xff]
    %v1182 = vld [vmem:[%s1180 + $0x8] sm:$0xff]
    %v1183 = vld [vmem:[%s1180 + $0x10] sm:$0xff]
    %v1184 = vld [vmem:[%s1180 + $0x18] sm:$0xff]
    %v1185 = vld [vmem:[%s1180 + $0x20] sm:$0xff]
    %v1186 = vld [vmem:[%s1180 + $0x28] sm:$0xff]
    %v1187 = vld [vmem:[%s1180 + $0x30] sm:$0xff]
    %v1188 = vld [vmem:[%s1180 + $0x38] sm:$0xff]
    %v1189 = vld [vmem:[%s1180 + $0x40] sm:$0xff]
    %v1190 = vld [vmem:[%s1180 + $0x48] sm:$0xff]
    %v1191 = vld [vmem:[%s1180 + $0x50] sm:$0xff]
    %v1192 = vld [vmem:[%s1180 + $0x58] sm:$0xff]
    %v1193 = vld [vmem:[%s1180 + $0x60] sm:$0xff]
    %v1194 = vld [vmem:[%s1180 + $0x68] sm:$0xff]
    %v1195 = vld [vmem:[%s1180 + $0x70] sm:$0xff]
    %v1196 = vld [vmem:[%s1180 + $0x78] sm:$0xff]
    %v1197 = vld [vmem:[%s1180 + $0x80] sm:$0xff]
    %v1198 = vld [vmem:[%s1180 + $0x88] sm:$0xff]
    %v1199 = vld [vmem:[%s1180 + $0x90] sm:$0xff]
    %v1200 = vld [vmem:[%s1180 + $0x98] sm:$0xff]
    %v1201 = vld [vmem:[%s1180 + $0xa0] sm:$0xff]
    %v1202 = vld [vmem:[%s1180 + $0xa8] sm:$0xff]
    %v1203 = vld [vmem:[%s1180 + $0xb0] sm:$0xff]
    %v1204 = vld [vmem:[%s1180 + $0xb8] sm:$0xff]
    %v1205 = vld [vmem:[%s1180 + $0xc0] sm:$0xff]
    %v1206 = vld [vmem:[%s1180 + $0xc8] sm:$0xff]
    %v1207 = vld [vmem:[%s1180 + $0xd0] sm:$0xff]
    %v1208 = vld [vmem:[%s1180 + $0xd8] sm:$0xff]
    %v1209 = vld [vmem:[%s1180 + $0xe0] sm:$0xff]
    %v1210 = vld [vmem:[%s1180 + $0xe8] sm:$0xff]
    %v1211 = vld [vmem:[%s1180 + $0xf0] sm:$0xff]
    %v1212 = vld [vmem:[%s1180 + $0xf8] sm:$0xff]
    %v1213 = vld [vmem:[%s1180 + $0x100] sm:$0xff]
    %v1214 = vld [vmem:[%s1180 + $0x108] sm:$0xff]
    %v1215 = vld [vmem:[%s1180 + $0x110] sm:$0xff]
    %v1216 = vld [vmem:[%s1180 + $0x118] sm:$0xff]
    %v1217 = vld [vmem:[%s1180 + $0x120] sm:$0xff]
    %v1218 = vld [vmem:[%s1180 + $0x128] sm:$0xff]
    %v1219 = vld [vmem:[%s1180 + $0x130] sm:$0xff]
    %v1220 = vld [vmem:[%s1180 + $0x138] sm:$0xff]
    %v1221 = vld [vmem:[%s1180 + $0x140] sm:$0xff]
    %v1222 = vld [vmem:[%s1180 + $0x148] sm:$0xff]
    %v1223 = vld [vmem:[%s1180 + $0x150] sm:$0xff]
    %v1224 = vld [vmem:[%s1180 + $0x158] sm:$0xff]
    %v1225 = vld [vmem:[%s1180 + $0x160] sm:$0xff]
    %v1226 = vld [vmem:[%s1180 + $0x168] sm:$0xff]
    %v1227 = vld [vmem:[%s1180 + $0x170] sm:$0xff]
    %v1228 = vld [vmem:[%s1180 + $0x178] sm:$0xff]
    %v1229 = vld [vmem:[%s1180 + $0x180] sm:$0xff]
    %v1230 = vld [vmem:[%s1180 + $0x188] sm:$0xff]
    %v1231 = vld [vmem:[%s1180 + $0x190] sm:$0xff]
    %v1232 = vld [vmem:[%s1180 + $0x198] sm:$0xff]
    %v1233 = vld [vmem:[%s1180 + $0x1a0] sm:$0xff]
    %v1234 = vld [vmem:[%s1180 + $0x1a8] sm:$0xff]
    %v1235 = vld [vmem:[%s1180 + $0x1b0] sm:$0xff]
    %v1236 = vld [vmem:[%s1180 + $0x1b8] sm:$0xff]
    %v1237 = vld [vmem:[%s1180 + $0x1c0] sm:$0xff]
    %v1238 = vld [vmem:[%s1180 + $0x1c8] sm:$0xff]
    %v1239 = vld [vmem:[%s1180 + $0x1d0] sm:$0xff]
    %v1240 = vld [vmem:[%s1180 + $0x1d8] sm:$0xff]
    %v1241 = vld [vmem:[%s1180 + $0x1e0] sm:$0xff]
    %v1242 = vld [vmem:[%s1180 + $0x1e8] sm:$0xff]
    %v1243 = vld [vmem:[%s1180 + $0x1f0] sm:$0xff]
    %v1244 = vld [vmem:[%s1180 + $0x1f8] sm:$0xff]
    %v1309 = vunpack.c.l.b16 %v1181
    %v1310 = vunpack.c.h.b16 %v1181
    %v1311 = vunpack.c.l.b16 %v1182
    %v1312 = vunpack.c.h.b16 %v1182
    %v1313 = vunpack.c.l.b16 %v1183
    %v1314 = vunpack.c.h.b16 %v1183
    %v1315 = vunpack.c.l.b16 %v1184
    %v1316 = vunpack.c.h.b16 %v1184
    %v1317 = vunpack.c.l.b16 %v1185
    %v1318 = vunpack.c.h.b16 %v1185
    %v1319 = vunpack.c.l.b16 %v1186
    %v1320 = vunpack.c.h.b16 %v1186
    %v1321 = vunpack.c.l.b16 %v1187
    %v1322 = vunpack.c.h.b16 %v1187
    %v1323 = vunpack.c.l.b16 %v1188
    %v1324 = vunpack.c.h.b16 %v1188
    %v1325 = vunpack.c.l.b16 %v1189
    %v1326 = vunpack.c.h.b16 %v1189
    %v1327 = vunpack.c.l.b16 %v1190
    %v1328 = vunpack.c.h.b16 %v1190
    %v1329 = vunpack.c.l.b16 %v1191
    %v1330 = vunpack.c.h.b16 %v1191
    %v1331 = vunpack.c.l.b16 %v1192
    %v1332 = vunpack.c.h.b16 %v1192
    %v1333 = vunpack.c.l.b16 %v1193
    %v1334 = vunpack.c.h.b16 %v1193
    %v1335 = vunpack.c.l.b16 %v1194
    %v1336 = vunpack.c.h.b16 %v1194
    %v1337 = vunpack.c.l.b16 %v1195
    %v1338 = vunpack.c.h.b16 %v1195
    %v1339 = vunpack.c.l.b16 %v1196
    %v1340 = vunpack.c.h.b16 %v1196
    %v1341 = vunpack.c.l.b16 %v1197
    %v1342 = vunpack.c.h.b16 %v1197
    %v1343 = vunpack.c.l.b16 %v1198
    %v1344 = vunpack.c.h.b16 %v1198
    %v1345 = vunpack.c.l.b16 %v1199
    %v1346 = vunpack.c.h.b16 %v1199
    %v1347 = vunpack.c.l.b16 %v1200
    %v1348 = vunpack.c.h.b16 %v1200
    %v1349 = vunpack.c.l.b16 %v1201
    %v1350 = vunpack.c.h.b16 %v1201
    %v1351 = vunpack.c.l.b16 %v1202
    %v1352 = vunpack.c.h.b16 %v1202
    %v1353 = vunpack.c.l.b16 %v1203
    %v1354 = vunpack.c.h.b16 %v1203
    %v1355 = vunpack.c.l.b16 %v1204
    %v1356 = vunpack.c.h.b16 %v1204
    %v1357 = vunpack.c.l.b16 %v1205
    %v1358 = vunpack.c.h.b16 %v1205
    %v1359 = vunpack.c.l.b16 %v1206
    %v1360 = vunpack.c.h.b16 %v1206
    %v1361 = vunpack.c.l.b16 %v1207
    %v1362 = vunpack.c.h.b16 %v1207
    %v1363 = vunpack.c.l.b16 %v1208
    %v1364 = vunpack.c.h.b16 %v1208
    %v1365 = vunpack.c.l.b16 %v1209
    %v1366 = vunpack.c.h.b16 %v1209
    %v1367 = vunpack.c.l.b16 %v1210
    %v1368 = vunpack.c.h.b16 %v1210
    %v1369 = vunpack.c.l.b16 %v1211
    %v1370 = vunpack.c.h.b16 %v1211
    %v1371 = vunpack.c.l.b16 %v1212
    %v1372 = vunpack.c.h.b16 %v1212
    %v1373 = vunpack.c.l.b16 %v1213
    %v1374 = vunpack.c.h.b16 %v1213
    %v1375 = vunpack.c.l.b16 %v1214
    %v1376 = vunpack.c.h.b16 %v1214
    %v1377 = vunpack.c.l.b16 %v1215
    %v1378 = vunpack.c.h.b16 %v1215
    %v1379 = vunpack.c.l.b16 %v1216
    %v1380 = vunpack.c.h.b16 %v1216
    %v1381 = vunpack.c.l.b16 %v1217
    %v1382 = vunpack.c.h.b16 %v1217
    %v1383 = vunpack.c.l.b16 %v1218
    %v1384 = vunpack.c.h.b16 %v1218
    %v1385 = vunpack.c.l.b16 %v1219
    %v1386 = vunpack.c.h.b16 %v1219
    %v1387 = vunpack.c.l.b16 %v1220
    %v1388 = vunpack.c.h.b16 %v1220
    %v1389 = vunpack.c.l.b16 %v1221
    %v1390 = vunpack.c.h.b16 %v1221
    %v1391 = vunpack.c.l.b16 %v1222
    %v1392 = vunpack.c.h.b16 %v1222
    %v1393 = vunpack.c.l.b16 %v1223
    %v1394 = vunpack.c.h.b16 %v1223
    %v1395 = vunpack.c.l.b16 %v1224
    %v1396 = vunpack.c.h.b16 %v1224
    %v1397 = vunpack.c.l.b16 %v1225
    %v1398 = vunpack.c.h.b16 %v1225
    %v1399 = vunpack.c.l.b16 %v1226
    %v1400 = vunpack.c.h.b16 %v1226
    %v1401 = vunpack.c.l.b16 %v1227
    %v1402 = vunpack.c.h.b16 %v1227
    %v1403 = vunpack.c.l.b16 %v1228
    %v1404 = vunpack.c.h.b16 %v1228
    %v1405 = vunpack.c.l.b16 %v1229
    %v1406 = vunpack.c.h.b16 %v1229
    %v1407 = vunpack.c.l.b16 %v1230
    %v1408 = vunpack.c.h.b16 %v1230
    %v1409 = vunpack.c.l.b16 %v1231
    %v1410 = vunpack.c.h.b16 %v1231
    %v1411 = vunpack.c.l.b16 %v1232
    %v1412 = vunpack.c.h.b16 %v1232
    %v1413 = vunpack.c.l.b16 %v1233
    %v1414 = vunpack.c.h.b16 %v1233
    %v1415 = vunpack.c.l.b16 %v1234
    %v1416 = vunpack.c.h.b16 %v1234
    %v1417 = vunpack.c.l.b16 %v1235
    %v1418 = vunpack.c.h.b16 %v1235
    %v1419 = vunpack.c.l.b16 %v1236
    %v1420 = vunpack.c.h.b16 %v1236
    %v1421 = vunpack.c.l.b16 %v1237
    %v1422 = vunpack.c.h.b16 %v1237
    %v1423 = vunpack.c.l.b16 %v1238
    %v1424 = vunpack.c.h.b16 %v1238
    %v1425 = vunpack.c.l.b16 %v1239
    %v1426 = vunpack.c.h.b16 %v1239
    %v1427 = vunpack.c.l.b16 %v1240
    %v1428 = vunpack.c.h.b16 %v1240
    %v1429 = vunpack.c.l.b16 %v1241
    %v1430 = vunpack.c.h.b16 %v1241
    %v1431 = vunpack.c.l.b16 %v1242
    %v1432 = vunpack.c.h.b16 %v1242
    %v1433 = vunpack.c.l.b16 %v1243
    %v1434 = vunpack.c.h.b16 %v1243
    %v1435 = vunpack.c.l.b16 %v1244
    %v1436 = vunpack.c.h.b16 %v1244
    %v1437 = vpack.c.b16 %v1313, %v1309
    %v1438 = vpack.c.b16 %v1314, %v1310
    %v1439 = vpack.c.b16 %v1315, %v1311
    %v1440 = vpack.c.b16 %v1316, %v1312
    %v1441 = vpack.c.b16 %v1321, %v1317
    %v1442 = vpack.c.b16 %v1322, %v1318
    %v1443 = vpack.c.b16 %v1323, %v1319
    %v1444 = vpack.c.b16 %v1324, %v1320
    %v1445 = vpack.c.b16 %v1329, %v1325
    %v1446 = vpack.c.b16 %v1330, %v1326
    %v1447 = vpack.c.b16 %v1331, %v1327
    %v1448 = vpack.c.b16 %v1332, %v1328
    %v1449 = vpack.c.b16 %v1337, %v1333
    %v1450 = vpack.c.b16 %v1338, %v1334
    %v1451 = vpack.c.b16 %v1339, %v1335
    %v1452 = vpack.c.b16 %v1340, %v1336
    %v1453 = vpack.c.b16 %v1345, %v1341
    %v1454 = vpack.c.b16 %v1346, %v1342
    %v1455 = vpack.c.b16 %v1347, %v1343
    %v1456 = vpack.c.b16 %v1348, %v1344
    %v1457 = vpack.c.b16 %v1353, %v1349
    %v1458 = vpack.c.b16 %v1354, %v1350
    %v1459 = vpack.c.b16 %v1355, %v1351
    %v1460 = vpack.c.b16 %v1356, %v1352
    %v1461 = vpack.c.b16 %v1361, %v1357
    %v1462 = vpack.c.b16 %v1362, %v1358
    %v1463 = vpack.c.b16 %v1363, %v1359
    %v1464 = vpack.c.b16 %v1364, %v1360
    %v1465 = vpack.c.b16 %v1369, %v1365
    %v1466 = vpack.c.b16 %v1370, %v1366
    %v1467 = vpack.c.b16 %v1371, %v1367
    %v1468 = vpack.c.b16 %v1372, %v1368
    %v1469 = vpack.c.b16 %v1377, %v1373
    %v1470 = vpack.c.b16 %v1378, %v1374
    %v1471 = vpack.c.b16 %v1379, %v1375
    %v1472 = vpack.c.b16 %v1380, %v1376
    %v1473 = vpack.c.b16 %v1385, %v1381
    %v1474 = vpack.c.b16 %v1386, %v1382
    %v1475 = vpack.c.b16 %v1387, %v1383
    %v1476 = vpack.c.b16 %v1388, %v1384
    %v1477 = vpack.c.b16 %v1393, %v1389
    %v1478 = vpack.c.b16 %v1394, %v1390
    %v1479 = vpack.c.b16 %v1395, %v1391
    %v1480 = vpack.c.b16 %v1396, %v1392
    %v1481 = vpack.c.b16 %v1401, %v1397
    %v1482 = vpack.c.b16 %v1402, %v1398
    %v1483 = vpack.c.b16 %v1403, %v1399
    %v1484 = vpack.c.b16 %v1404, %v1400
    %v1485 = vpack.c.b16 %v1409, %v1405
    %v1486 = vpack.c.b16 %v1410, %v1406
    %v1487 = vpack.c.b16 %v1411, %v1407
    %v1488 = vpack.c.b16 %v1412, %v1408
    %v1489 = vpack.c.b16 %v1417, %v1413
    %v1490 = vpack.c.b16 %v1418, %v1414
    %v1491 = vpack.c.b16 %v1419, %v1415
    %v1492 = vpack.c.b16 %v1420, %v1416
    %v1493 = vpack.c.b16 %v1425, %v1421
    %v1494 = vpack.c.b16 %v1426, %v1422
    %v1495 = vpack.c.b16 %v1427, %v1423
    %v1496 = vpack.c.b16 %v1428, %v1424
    %v1497 = vpack.c.b16 %v1433, %v1429
    %v1498 = vpack.c.b16 %v1434, %v1430
    %v1499 = vpack.c.b16 %v1435, %v1431
    %v1500 = vpack.c.b16 %v1436, %v1432
    %1565 = vmatprep.subr.bf16.mxu0 %v1466
    %1566 = vmatpush1.bf16.msra.mxu0 %v1465
    %1567 = vmatprep.subr.bf16.mxu0 %v1462
    %1568 = vmatpush1.bf16.msra.mxu0 %v1461
    %1569 = vmatprep.subr.bf16.mxu0 %v1458
    %1570 = vmatpush1.bf16.msra.mxu0 %v1457
    %1571 = vmatprep.subr.bf16.mxu0 %v1454
    %1572 = vmatpush1.bf16.msra.mxu0 %v1453
    %1573 = vmatprep.subr.bf16.mxu0 %v1450
    %1574 = vmatpush1.bf16.msra.mxu0 %v1449
    %1575 = vmatprep.subr.bf16.mxu0 %v1446
    %1576 = vmatpush1.bf16.msra.mxu0 %v1445
    %1577 = vmatprep.subr.bf16.mxu0 %v1442
    %1578 = vmatpush1.bf16.msra.mxu0 %v1441
    %1579 = vmatprep.subr.bf16.mxu0 %v1438
    %1580 = vmatpush1.bf16.msra.mxu0 %v1437
    %1581 = vmatprep.subr.bf16.mxu0 %v1498
    %1582 = vmatpush2.bf16.msra.mxu0 %v1497
    %1583 = vmatprep.subr.bf16.mxu0 %v1494
    %1584 = vmatpush2.bf16.msra.mxu0 %v1493
    %1585 = vmatprep.subr.bf16.mxu0 %v1490
    %1586 = vmatpush2.bf16.msra.mxu0 %v1489
    %1587 = vmatprep.subr.bf16.mxu0 %v1486
    %1588 = vmatpush2.bf16.msra.mxu0 %v1485
    %1589 = vmatprep.subr.bf16.mxu0 %v1482
    %1590 = vmatpush2.bf16.msra.mxu0 %v1481
    %1591 = vmatprep.subr.bf16.mxu0 %v1478
    %1592 = vmatpush2.bf16.msra.mxu0 %v1477
    %1593 = vmatprep.subr.bf16.mxu0 %v1474
    %1594 = vmatpush2.bf16.msra.mxu0 %v1473
    %1595 = vmatprep.subr.bf16.mxu0 %v1470
    %1596 = vmatpush2.bf16.msra.mxu0 %v1469
    %1597 = vmatprep.mubr.bf16.mxu0 %v1179
    %1598 = vmatmul.mubr.bf16.gmra.mxu0 %v1178
    %v1599 = vpop.f32.mrf.mxu0
    %v1600 = vadd.f32 0.0, %v1599
    %v1601 = vpop.f32.mrf.mxu0
    %v1602 = vadd.f32 0.0, %v1601
    %v1603 = vpop.f32.mrf.mxu0
    %v1604 = vadd.f32 0.0, %v1603
    %v1605 = vpop.f32.mrf.mxu0
    %v1606 = vadd.f32 0.0, %v1605
    %1607 = vdwg.mxu0
    %1608 = vmatprep.subr.bf16.mxu0 %v1468
    %1609 = vmatpush1.bf16.msra.mxu0 %v1467
    %1610 = vmatprep.subr.bf16.mxu0 %v1464
    %1611 = vmatpush1.bf16.msra.mxu0 %v1463
    %1612 = vmatprep.subr.bf16.mxu0 %v1460
    %1613 = vmatpush1.bf16.msra.mxu0 %v1459
    %1614 = vmatprep.subr.bf16.mxu0 %v1456
    %1615 = vmatpush1.bf16.msra.mxu0 %v1455
    %1616 = vmatprep.subr.bf16.mxu0 %v1452
    %1617 = vmatpush1.bf16.msra.mxu0 %v1451
    %1618 = vmatprep.subr.bf16.mxu0 %v1448
    %1619 = vmatpush1.bf16.msra.mxu0 %v1447
    %1620 = vmatprep.subr.bf16.mxu0 %v1444
    %1621 = vmatpush1.bf16.msra.mxu0 %v1443
    %1622 = vmatprep.subr.bf16.mxu0 %v1440
    %1623 = vmatpush1.bf16.msra.mxu0 %v1439
    %1624 = vmatprep.subr.bf16.mxu0 %v1500
    %1625 = vmatpush2.bf16.msra.mxu0 %v1499
    %1626 = vmatprep.subr.bf16.mxu0 %v1496
    %1627 = vmatpush2.bf16.msra.mxu0 %v1495
    %1628 = vmatprep.subr.bf16.mxu0 %v1492
    %1629 = vmatpush2.bf16.msra.mxu0 %v1491
    %1630 = vmatprep.subr.bf16.mxu0 %v1488
    %1631 = vmatpush2.bf16.msra.mxu0 %v1487
    %1632 = vmatprep.subr.bf16.mxu0 %v1484
    %1633 = vmatpush2.bf16.msra.mxu0 %v1483
    %1634 = vmatprep.subr.bf16.mxu0 %v1480
    %1635 = vmatpush2.bf16.msra.mxu0 %v1479
    %1636 = vmatprep.subr.bf16.mxu0 %v1476
    %1637 = vmatpush2.bf16.msra.mxu0 %v1475
    %1638 = vmatprep.subr.bf16.mxu0 %v1472
    %1639 = vmatpush2.bf16.msra.mxu0 %v1471
    %1640 = vmatprep.mubr.bf16.mxu0 %v1179
    %1641 = vmatmul.mubr.bf16.gmra.mxu0 %v1178
    %v1642 = vpop.f32.mrf.mxu0
    %v1643 = vadd.f32 0.0, %v1642
    %v1644 = vpop.f32.mrf.mxu0
    %v1645 = vadd.f32 0.0, %v1644
    %v1646 = vpop.f32.mrf.mxu0
    %v1647 = vadd.f32 0.0, %v1646
    %v1648 = vpop.f32.mrf.mxu0
    %v1649 = vadd.f32 0.0, %v1648
    %1650 = vdwg.mxu0
    %v1651 = vadd.f32 %v1104, %v1600
    %v1652 = vadd.f32 %v1106, %v1602
    %v1653 = vadd.f32 %v1147, %v1643
    %v1654 = vadd.f32 %v1149, %v1645
    %v1655 = vadd.f32 %v1108, %v1604
    %v1656 = vadd.f32 %v1110, %v1606
    %v1657 = vadd.f32 %v1151, %v1647
    %v1658 = vadd.f32 %v1153, %v1649
    %v1659 = vld [vmem:[#allocation11] sm:$0x1]
    %v1660 = vld [vmem:[#allocation11 + $0x1] sm:$0x1]
    %v1661 = vadd.f32 %v1651, %v1655
    %v1662 = vrot.slane %v1661, 4
    %v1663 = vadd.f32 %v1661, %v1662
    %v1664 = vrot.slane %v1663, 2
    %v1665 = vadd.f32 %v1663, %v1664
    %v1666 = vrot.slane %v1665, 1
    %v1667 = vadd.f32 %v1665, %v1666
    %v1668 = vadd.f32 %v1652, %v1656
    %v1669 = vrot.slane %v1668, 4
    %v1670 = vadd.f32 %v1668, %v1669
    %v1671 = vrot.slane %v1670, 2
    %v1672 = vadd.f32 %v1670, %v1671
    %v1673 = vrot.slane %v1672, 1
    %v1674 = vadd.f32 %v1672, %v1673
    %v1675 = vadd.f32 %v1653, %v1657
    %v1676 = vrot.slane %v1675, 4
    %v1677 = vadd.f32 %v1675, %v1676
    %v1678 = vrot.slane %v1677, 2
    %v1679 = vadd.f32 %v1677, %v1678
    %v1680 = vrot.slane %v1679, 1
    %v1681 = vadd.f32 %v1679, %v1680
    %v1682 = vadd.f32 %v1654, %v1658
    %v1683 = vrot.slane %v1682, 4
    %v1684 = vadd.f32 %v1682, %v1683
    %v1685 = vrot.slane %v1684, 2
    %v1686 = vadd.f32 %v1684, %v1685
    %v1687 = vrot.slane %v1686, 1
    %v1688 = vadd.f32 %v1686, %v1687
    %v1689 = vmul.f32 %v1651, %v1651
    %v1690 = vmul.f32 %v1652, %v1652
    %v1691 = vmul.f32 %v1653, %v1653
    %v1692 = vmul.f32 %v1654, %v1654
    %v1693 = vmul.f32 %v1655, %v1655
    %v1694 = vmul.f32 %v1656, %v1656
    %v1695 = vmul.f32 %v1657, %v1657
    %v1696 = vmul.f32 %v1658, %v1658
    %v1697 = vadd.f32 %v1689, %v1693
    %v1698 = vrot.slane %v1697, 4
    %v1699 = vadd.f32 %v1697, %v1698
    %v1700 = vrot.slane %v1699, 2
    %v1701 = vadd.f32 %v1699, %v1700
    %v1702 = vrot.slane %v1701, 1
    %v1703 = vadd.f32 %v1701, %v1702
    %v1704 = vadd.f32 %v1690, %v1694
    %v1705 = vrot.slane %v1704, 4
    %v1706 = vadd.f32 %v1704, %v1705
    %v1707 = vrot.slane %v1706, 2
    %v1708 = vadd.f32 %v1706, %v1707
    %v1709 = vrot.slane %v1708, 1
    %v1710 = vadd.f32 %v1708, %v1709
    %v1711 = vadd.f32 %v1691, %v1695
    %v1712 = vrot.slane %v1711, 4
    %v1713 = vadd.f32 %v1711, %v1712
    %v1714 = vrot.slane %v1713, 2
    %v1715 = vadd.f32 %v1713, %v1714
    %v1716 = vrot.slane %v1715, 1
    %v1717 = vadd.f32 %v1715, %v1716
    %v1718 = vadd.f32 %v1692, %v1696
    %v1719 = vrot.slane %v1718, 4
    %v1720 = vadd.f32 %v1718, %v1719
    %v1721 = vrot.slane %v1720, 2
    %v1722 = vadd.f32 %v1720, %v1721
    %v1723 = vrot.slane %v1722, 1
    %v1724 = vadd.f32 %v1722, %v1723
    %1725 = vmatprep.subr.mxu0 0.0
    %1726 = vmatpush1.msra.mxu0 %v132
    %1727 = vmatprep.subr.mxu0 0.0
    %1728 = vmatpush1.msra.mxu0 %v131
    %1729 = vmatprep.subr.mxu0 0.0
    %1730 = vmatpush1.msra.mxu0 %v130
    %1731 = vmatprep.subr.mxu0 0.0
    %1732 = vmatpush1.msra.mxu0 %v129
    %1733 = vmatprep.subr.mxu0 0.0
    %1734 = vmatpush1.msra.mxu0 %v128
    %1735 = vmatprep.subr.mxu0 0.0
    %1736 = vmatpush1.msra.mxu0 %v127
    %1737 = vmatprep.subr.mxu0 0.0
    %1738 = vmatpush1.msra.mxu0 %v126
    %1739 = vmatprep.subr.mxu0 0.0
    %1740 = vmatpush1.msra.mxu0 %v125
    %1741 = vmatprep.subr.mxu0 0.0
    %1742 = vmatpush1.msra.mxu0 %v124
    %1743 = vmatprep.subr.mxu0 0.0
    %1744 = vmatpush1.msra.mxu0 %v123
    %1745 = vmatprep.subr.mxu0 0.0
    %1746 = vmatpush1.msra.mxu0 %v122
    %1747 = vmatprep.subr.mxu0 0.0
    %1748 = vmatpush1.msra.mxu0 %v121
    %1749 = vmatprep.subr.mxu0 0.0
    %1750 = vmatpush1.msra.mxu0 %v120
    %1751 = vmatprep.subr.mxu0 0.0
    %1752 = vmatpush1.msra.mxu0 %v119
    %1753 = vmatprep.subr.mxu0 0.0
    %1754 = vmatpush1.msra.mxu0 %v118
    %1755 = vmatprep.subr.mxu0 0.0
    %1756 = vmatpush1.msra.mxu0 %v117
    %1757 = vmatprep.subr.mxu0 0.0
    %1758 = vmatpush2.msra.mxu0 %v148
    %1759 = vmatprep.subr.mxu0 0.0
    %1760 = vmatpush2.msra.mxu0 %v147
    %1761 = vmatprep.subr.mxu0 0.0
    %1762 = vmatpush2.msra.mxu0 %v146
    %1763 = vmatprep.subr.mxu0 0.0
    %1764 = vmatpush2.msra.mxu0 %v145
    %1765 = vmatprep.subr.mxu0 0.0
    %1766 = vmatpush2.msra.mxu0 %v144
    %1767 = vmatprep.subr.mxu0 0.0
    %1768 = vmatpush2.msra.mxu0 %v143
    %1769 = vmatprep.subr.mxu0 0.0
    %1770 = vmatpush2.msra.mxu0 %v142
    %1771 = vmatprep.subr.mxu0 0.0
    %1772 = vmatpush2.msra.mxu0 %v141
    %1773 = vmatprep.subr.mxu0 0.0
    %1774 = vmatpush2.msra.mxu0 %v140
    %1775 = vmatprep.subr.mxu0 0.0
    %1776 = vmatpush2.msra.mxu0 %v139
    %1777 = vmatprep.subr.mxu0 0.0
    %1778 = vmatpush2.msra.mxu0 %v138
    %1779 = vmatprep.subr.mxu0 0.0
    %1780 = vmatpush2.msra.mxu0 %v137
    %1781 = vmatprep.subr.mxu0 0.0
    %1782 = vmatpush2.msra.mxu0 %v136
    %1783 = vmatprep.subr.mxu0 0.0
    %1784 = vmatpush2.msra.mxu0 %v135
    %1785 = vmatprep.subr.mxu0 0.0
    %1786 = vmatpush2.msra.mxu0 %v134
    %1787 = vmatprep.subr.mxu0 0.0
    %1788 = vmatpush2.msra.mxu0 %v133
    %1789 = vmatprep.mubr.f32.mxu0 %v1674
    %1790 = vmatmul.mubr.f32.gmra.mxu0 %v1667
    %v1791 = vpop.f32.mrf.mxu0
    %v1792 = vadd.f32 0.0, %v1791
    %v1793 = vpop.f32.mrf.mxu0
    %1794 = vdwg.mxu0
    %1795 = vmatprep.subr.mxu0 0.0
    %1796 = vmatpush1.msra.mxu0 %v164
    %1797 = vmatprep.subr.mxu0 0.0
    %1798 = vmatpush1.msra.mxu0 %v163
    %1799 = vmatprep.subr.mxu0 0.0
    %1800 = vmatpush1.msra.mxu0 %v162
    %1801 = vmatprep.subr.mxu0 0.0
    %1802 = vmatpush1.msra.mxu0 %v161
    %1803 = vmatprep.subr.mxu0 0.0
    %1804 = vmatpush1.msra.mxu0 %v160
    %1805 = vmatprep.subr.mxu0 0.0
    %1806 = vmatpush1.msra.mxu0 %v159
    %1807 = vmatprep.subr.mxu0 0.0
    %1808 = vmatpush1.msra.mxu0 %v158
    %1809 = vmatprep.subr.mxu0 0.0
    %1810 = vmatpush1.msra.mxu0 %v157
    %1811 = vmatprep.subr.mxu0 0.0
    %1812 = vmatpush1.msra.mxu0 %v156
    %1813 = vmatprep.subr.mxu0 0.0
    %1814 = vmatpush1.msra.mxu0 %v155
    %1815 = vmatprep.subr.mxu0 0.0
    %1816 = vmatpush1.msra.mxu0 %v154
    %1817 = vmatprep.subr.mxu0 0.0
    %1818 = vmatpush1.msra.mxu0 %v153
    %1819 = vmatprep.subr.mxu0 0.0
    %1820 = vmatpush1.msra.mxu0 %v152
    %1821 = vmatprep.subr.mxu0 0.0
    %1822 = vmatpush1.msra.mxu0 %v151
    %1823 = vmatprep.subr.mxu0 0.0
    %1824 = vmatpush1.msra.mxu0 %v150
    %1825 = vmatprep.subr.mxu0 0.0
    %1826 = vmatpush1.msra.mxu0 %v149
    %1827 = vmatprep.subr.mxu0 0.0
    %1828 = vmatpush2.msra.mxu0 %v180
    %1829 = vmatprep.subr.mxu0 0.0
    %1830 = vmatpush2.msra.mxu0 %v179
    %1831 = vmatprep.subr.mxu0 0.0
    %1832 = vmatpush2.msra.mxu0 %v178
    %1833 = vmatprep.subr.mxu0 0.0
    %1834 = vmatpush2.msra.mxu0 %v177
    %1835 = vmatprep.subr.mxu0 0.0
    %1836 = vmatpush2.msra.mxu0 %v176
    %1837 = vmatprep.subr.mxu0 0.0
    %1838 = vmatpush2.msra.mxu0 %v175
    %1839 = vmatprep.subr.mxu0 0.0
    %1840 = vmatpush2.msra.mxu0 %v174
    %1841 = vmatprep.subr.mxu0 0.0
    %1842 = vmatpush2.msra.mxu0 %v173
    %1843 = vmatprep.subr.mxu0 0.0
    %1844 = vmatpush2.msra.mxu0 %v172
    %1845 = vmatprep.subr.mxu0 0.0
    %1846 = vmatpush2.msra.mxu0 %v171
    %1847 = vmatprep.subr.mxu0 0.0
    %1848 = vmatpush2.msra.mxu0 %v170
    %1849 = vmatprep.subr.mxu0 0.0
    %1850 = vmatpush2.msra.mxu0 %v169
    %1851 = vmatprep.subr.mxu0 0.0
    %1852 = vmatpush2.msra.mxu0 %v168
    %1853 = vmatprep.subr.mxu0 0.0
    %1854 = vmatpush2.msra.mxu0 %v167
    %1855 = vmatprep.subr.mxu0 0.0
    %1856 = vmatpush2.msra.mxu0 %v166
    %1857 = vmatprep.subr.mxu0 0.0
    %1858 = vmatpush2.msra.mxu0 %v165
    %1859 = vmatprep.mubr.f32.mxu0 %v1688
    %1860 = vmatmul.mubr.f32.gmra.mxu0 %v1681
    %v1861 = vpop.f32.mrf.mxu0
    %v1862 = vadd.f32 %v1792, %v1861
    %v1863 = vpop.f32.mrf.mxu0
    %1864 = vdwg.mxu0
    %1865 = vmatprep.subr.mxu0 0.0
    %1866 = vmatpush1.msra.mxu0 %v132
    %1867 = vmatprep.subr.mxu0 0.0
    %1868 = vmatpush1.msra.mxu0 %v131
    %1869 = vmatprep.subr.mxu0 0.0
    %1870 = vmatpush1.msra.mxu0 %v130
    %1871 = vmatprep.subr.mxu0 0.0
    %1872 = vmatpush1.msra.mxu0 %v129
    %1873 = vmatprep.subr.mxu0 0.0
    %1874 = vmatpush1.msra.mxu0 %v128
    %1875 = vmatprep.subr.mxu0 0.0
    %1876 = vmatpush1.msra.mxu0 %v127
    %1877 = vmatprep.subr.mxu0 0.0
    %1878 = vmatpush1.msra.mxu0 %v126
    %1879 = vmatprep.subr.mxu0 0.0
    %1880 = vmatpush1.msra.mxu0 %v125
    %1881 = vmatprep.subr.mxu0 0.0
    %1882 = vmatpush1.msra.mxu0 %v124
    %1883 = vmatprep.subr.mxu0 0.0
    %1884 = vmatpush1.msra.mxu0 %v123
    %1885 = vmatprep.subr.mxu0 0.0
    %1886 = vmatpush1.msra.mxu0 %v122
    %1887 = vmatprep.subr.mxu0 0.0
    %1888 = vmatpush1.msra.mxu0 %v121
    %1889 = vmatprep.subr.mxu0 0.0
    %1890 = vmatpush1.msra.mxu0 %v120
    %1891 = vmatprep.subr.mxu0 0.0
    %1892 = vmatpush1.msra.mxu0 %v119
    %1893 = vmatprep.subr.mxu0 0.0
    %1894 = vmatpush1.msra.mxu0 %v118
    %1895 = vmatprep.subr.mxu0 0.0
    %1896 = vmatpush1.msra.mxu0 %v117
    %1897 = vmatprep.subr.mxu0 0.0
    %1898 = vmatpush2.msra.mxu0 %v148
    %1899 = vmatprep.subr.mxu0 0.0
    %1900 = vmatpush2.msra.mxu0 %v147
    %1901 = vmatprep.subr.mxu0 0.0
    %1902 = vmatpush2.msra.mxu0 %v146
    %1903 = vmatprep.subr.mxu0 0.0
    %1904 = vmatpush2.msra.mxu0 %v145
    %1905 = vmatprep.subr.mxu0 0.0
    %1906 = vmatpush2.msra.mxu0 %v144
    %1907 = vmatprep.subr.mxu0 0.0
    %1908 = vmatpush2.msra.mxu0 %v143
    %1909 = vmatprep.subr.mxu0 0.0
    %1910 = vmatpush2.msra.mxu0 %v142
    %1911 = vmatprep.subr.mxu0 0.0
    %1912 = vmatpush2.msra.mxu0 %v141
    %1913 = vmatprep.subr.mxu0 0.0
    %1914 = vmatpush2.msra.mxu0 %v140
    %1915 = vmatprep.subr.mxu0 0.0
    %1916 = vmatpush2.msra.mxu0 %v139
    %1917 = vmatprep.subr.mxu0 0.0
    %1918 = vmatpush2.msra.mxu0 %v138
    %1919 = vmatprep.subr.mxu0 0.0
    %1920 = vmatpush2.msra.mxu0 %v137
    %1921 = vmatprep.subr.mxu0 0.0
    %1922 = vmatpush2.msra.mxu0 %v136
    %1923 = vmatprep.subr.mxu0 0.0
    %1924 = vmatpush2.msra.mxu0 %v135
    %1925 = vmatprep.subr.mxu0 0.0
    %1926 = vmatpush2.msra.mxu0 %v134
    %1927 = vmatprep.subr.mxu0 0.0
    %1928 = vmatpush2.msra.mxu0 %v133
    %1929 = vmatprep.mubr.f32.mxu0 %v1710
    %1930 = vmatmul.mubr.f32.gmra.mxu0 %v1703
    %v1931 = vpop.f32.mrf.mxu0
    %v1932 = vadd.f32 0.0, %v1931
    %v1933 = vpop.f32.mrf.mxu0
    %1934 = vdwg.mxu0
    %1935 = vmatprep.subr.mxu0 0.0
    %1936 = vmatpush1.msra.mxu0 %v164
    %1937 = vmatprep.subr.mxu0 0.0
    %1938 = vmatpush1.msra.mxu0 %v163
    %1939 = vmatprep.subr.mxu0 0.0
    %1940 = vmatpush1.msra.mxu0 %v162
    %1941 = vmatprep.subr.mxu0 0.0
    %1942 = vmatpush1.msra.mxu0 %v161
    %1943 = vmatprep.subr.mxu0 0.0
    %1944 = vmatpush1.msra.mxu0 %v160
    %1945 = vmatprep.subr.mxu0 0.0
    %1946 = vmatpush1.msra.mxu0 %v159
    %1947 = vmatprep.subr.mxu0 0.0
    %1948 = vmatpush1.msra.mxu0 %v158
    %1949 = vmatprep.subr.mxu0 0.0
    %1950 = vmatpush1.msra.mxu0 %v157
    %1951 = vmatprep.subr.mxu0 0.0
    %1952 = vmatpush1.msra.mxu0 %v156
    %1953 = vmatprep.subr.mxu0 0.0
    %1954 = vmatpush1.msra.mxu0 %v155
    %1955 = vmatprep.subr.mxu0 0.0
    %1956 = vmatpush1.msra.mxu0 %v154
    %1957 = vmatprep.subr.mxu0 0.0
    %1958 = vmatpush1.msra.mxu0 %v153
    %1959 = vmatprep.subr.mxu0 0.0
    %1960 = vmatpush1.msra.mxu0 %v152
    %1961 = vmatprep.subr.mxu0 0.0
    %1962 = vmatpush1.msra.mxu0 %v151
    %1963 = vmatprep.subr.mxu0 0.0
    %1964 = vmatpush1.msra.mxu0 %v150
    %1965 = vmatprep.subr.mxu0 0.0
    %1966 = vmatpush1.msra.mxu0 %v149
    %1967 = vmatprep.subr.mxu0 0.0
    %1968 = vmatpush2.msra.mxu0 %v180
    %1969 = vmatprep.subr.mxu0 0.0
    %1970 = vmatpush2.msra.mxu0 %v179
    %1971 = vmatprep.subr.mxu0 0.0
    %1972 = vmatpush2.msra.mxu0 %v178
    %1973 = vmatprep.subr.mxu0 0.0
    %1974 = vmatpush2.msra.mxu0 %v177
    %1975 = vmatprep.subr.mxu0 0.0
    %1976 = vmatpush2.msra.mxu0 %v176
    %1977 = vmatprep.subr.mxu0 0.0
    %1978 = vmatpush2.msra.mxu0 %v175
    %1979 = vmatprep.subr.mxu0 0.0
    %1980 = vmatpush2.msra.mxu0 %v174
    %1981 = vmatprep.subr.mxu0 0.0
    %1982 = vmatpush2.msra.mxu0 %v173
    %1983 = vmatprep.subr.mxu0 0.0
    %1984 = vmatpush2.msra.mxu0 %v172
    %1985 = vmatprep.subr.mxu0 0.0
    %1986 = vmatpush2.msra.mxu0 %v171
    %1987 = vmatprep.subr.mxu0 0.0
    %1988 = vmatpush2.msra.mxu0 %v170
    %1989 = vmatprep.subr.mxu0 0.0
    %1990 = vmatpush2.msra.mxu0 %v169
    %1991 = vmatprep.subr.mxu0 0.0
    %1992 = vmatpush2.msra.mxu0 %v168
    %1993 = vmatprep.subr.mxu0 0.0
    %1994 = vmatpush2.msra.mxu0 %v167
    %1995 = vmatprep.subr.mxu0 0.0
    %1996 = vmatpush2.msra.mxu0 %v166
    %1997 = vmatprep.subr.mxu0 0.0
    %1998 = vmatpush2.msra.mxu0 %v165
    %1999 = vmatprep.mubr.f32.mxu0 %v1724
    %2000 = vmatmul.mubr.f32.gmra.mxu0 %v1717
    %v2001 = vpop.f32.mrf.mxu0
    %v2002 = vadd.f32 %v1932, %v2001
    %v2003 = vpop.f32.mrf.mxu0
    %2004 = vdwg.mxu0
    %v2005 = vmul.f32 %v1862, 0.0009765625
    %v2006 = vmul.f32 %v2002, 0.0009765625
    %v2007 = vmul.f32 %v2005, %v2005
    %v2008 = vsub.f32 %v2006, %v2007
    %v2009 = vadd.f32 %v2008, 1e-05
    %v2010 = vrsqrt.pop %v2009
    %v2011 = vmul.f32 %v1659, %v2010
    %v2012 = vmul.f32 %v2005, %v2011
    %v2013 = vsub.f32 %v1660, %v2012
    %vm2014 = vcmask 64512
    %v2016 = vsel %vm2014, %v2011, 0
    %2018 = vmatprep.subr.mxu0 0.0
    %2019 = vmatpush1.msra.mxu0 0.0
    %2020 = vmatprep.subr.mxu0 0.0
    %2021 = vmatpush1.msra.mxu0 0.0
    %2022 = vmatprep.subr.mxu0 0.0
    %2023 = vmatpush1.msra.mxu0 0.0
    %2024 = vmatprep.subr.mxu0 0.0
    %2025 = vmatpush1.msra.mxu0 0.0
    %2026 = vmatprep.subr.mxu0 0.0
    %2027 = vmatpush1.msra.mxu0 0.0
    %2028 = vmatprep.subr.mxu0 0.0
    %2029 = vmatpush1.msra.mxu0 0.0
    %2030 = vmatprep.subr.mxu0 0.0
    %2031 = vmatpush1.msra.mxu0 0.0
    %2032 = vmatprep.subr.mxu0 0.0
    %2033 = vmatpush1.msra.mxu0 0.0
    %2034 = vmatprep.subr.mxu0 0.0
    %2035 = vmatpush1.msra.mxu0 0.0
    %2036 = vmatprep.subr.mxu0 0.0
    %2037 = vmatpush1.msra.mxu0 0.0
    %2038 = vmatprep.subr.mxu0 0.0
    %2039 = vmatpush1.msra.mxu0 0.0
    %2040 = vmatprep.subr.mxu0 0.0
    %2041 = vmatpush1.msra.mxu0 0.0
    %2042 = vmatprep.subr.mxu0 0.0
    %2043 = vmatpush1.msra.mxu0 0.0
    %2044 = vmatprep.subr.mxu0 0.0
    %2045 = vmatpush1.msra.mxu0 0.0
    %2046 = vmatprep.subr.mxu0 0.0
    %2047 = vmatpush1.msra.mxu0 0.0
    %2048 = vmatprep.subr.mxu0 %v182
    %2049 = vmatpush1.msra.mxu0 %v181
    %2050 = vmatprep.subr.mxu0 0.0
    %2051 = vmatpush2.msra.mxu0 0.0
    %2052 = vmatprep.subr.mxu0 0.0
    %2053 = vmatpush2.msra.mxu0 0.0
    %2054 = vmatprep.subr.mxu0 0.0
    %2055 = vmatpush2.msra.mxu0 0.0
    %2056 = vmatprep.subr.mxu0 0.0
    %2057 = vmatpush2.msra.mxu0 0.0
    %2058 = vmatprep.subr.mxu0 0.0
    %2059 = vmatpush2.msra.mxu0 0.0
    %2060 = vmatprep.subr.mxu0 0.0
    %2061 = vmatpush2.msra.mxu0 0.0
    %2062 = vmatprep.subr.mxu0 0.0
    %2063 = vmatpush2.msra.mxu0 0.0
    %2064 = vmatprep.subr.mxu0 0.0
    %2065 = vmatpush2.msra.mxu0 0.0
    %2066 = vmatprep.subr.mxu0 0.0
    %2067 = vmatpush2.msra.mxu0 0.0
    %2068 = vmatprep.subr.mxu0 0.0
    %2069 = vmatpush2.msra.mxu0 0.0
    %2070 = vmatprep.subr.mxu0 0.0
    %2071 = vmatpush2.msra.mxu0 0.0
    %2072 = vmatprep.subr.mxu0 0.0
    %2073 = vmatpush2.msra.mxu0 0.0
    %2074 = vmatprep.subr.mxu0 0.0
    %2075 = vmatpush2.msra.mxu0 0.0
    %2076 = vmatprep.subr.mxu0 0.0
    %2077 = vmatpush2.msra.mxu0 0.0
    %2078 = vmatprep.subr.mxu0 0.0
    %2079 = vmatpush2.msra.mxu0 0.0
    %2080 = vmatprep.subr.mxu0 0.0
    %2081 = vmatpush2.msra.mxu0 0.0
    %2082 = vmatprep.mubr.f32.mxu0 0.0
    %2083 = vmatmul.mubr.f32.gmra.mxu0 %v2016
    %v2084 = vpop.f32.mrf.mxu0
    %v2085 = vadd.f32 0.0, %v2084
    %v2086 = vpop.f32.mrf.mxu0
    %v2087 = vadd.f32 0.0, %v2086
    %2088 = vdwg.mxu0
    %2089 = vmatprep.subr.mxu0 0.0
    %2090 = vmatpush1.msra.mxu0 0.0
    %2091 = vmatprep.subr.mxu0 0.0
    %2092 = vmatpush1.msra.mxu0 0.0
    %2093 = vmatprep.subr.mxu0 0.0
    %2094 = vmatpush1.msra.mxu0 0.0
    %2095 = vmatprep.subr.mxu0 0.0
    %2096 = vmatpush1.msra.mxu0 0.0
    %2097 = vmatprep.subr.mxu0 0.0
    %2098 = vmatpush1.msra.mxu0 0.0
    %2099 = vmatprep.subr.mxu0 0.0
    %2100 = vmatpush1.msra.mxu0 0.0
    %2101 = vmatprep.subr.mxu0 0.0
    %2102 = vmatpush1.msra.mxu0 0.0
    %2103 = vmatprep.subr.mxu0 0.0
    %2104 = vmatpush1.msra.mxu0 0.0
    %2105 = vmatprep.subr.mxu0 0.0
    %2106 = vmatpush1.msra.mxu0 0.0
    %2107 = vmatprep.subr.mxu0 0.0
    %2108 = vmatpush1.msra.mxu0 0.0
    %2109 = vmatprep.subr.mxu0 0.0
    %2110 = vmatpush1.msra.mxu0 0.0
    %2111 = vmatprep.subr.mxu0 0.0
    %2112 = vmatpush1.msra.mxu0 0.0
    %2113 = vmatprep.subr.mxu0 0.0
    %2114 = vmatpush1.msra.mxu0 0.0
    %2115 = vmatprep.subr.mxu0 0.0
    %2116 = vmatpush1.msra.mxu0 0.0
    %2117 = vmatprep.subr.mxu0 0.0
    %2118 = vmatpush1.msra.mxu0 0.0
    %2119 = vmatprep.subr.mxu0 %v184
    %2120 = vmatpush1.msra.mxu0 %v183
    %2121 = vmatprep.subr.mxu0 0.0
    %2122 = vmatpush2.msra.mxu0 0.0
    %2123 = vmatprep.subr.mxu0 0.0
    %2124 = vmatpush2.msra.mxu0 0.0
    %2125 = vmatprep.subr.mxu0 0.0
    %2126 = vmatpush2.msra.mxu0 0.0
    %2127 = vmatprep.subr.mxu0 0.0
    %2128 = vmatpush2.msra.mxu0 0.0
    %2129 = vmatprep.subr.mxu0 0.0
    %2130 = vmatpush2.msra.mxu0 0.0
    %2131 = vmatprep.subr.mxu0 0.0
    %2132 = vmatpush2.msra.mxu0 0.0
    %2133 = vmatprep.subr.mxu0 0.0
    %2134 = vmatpush2.msra.mxu0 0.0
    %2135 = vmatprep.subr.mxu0 0.0
    %2136 = vmatpush2.msra.mxu0 0.0
    %2137 = vmatprep.subr.mxu0 0.0
    %2138 = vmatpush2.msra.mxu0 0.0
    %2139 = vmatprep.subr.mxu0 0.0
    %2140 = vmatpush2.msra.mxu0 0.0
    %2141 = vmatprep.subr.mxu0 0.0
    %2142 = vmatpush2.msra.mxu0 0.0
    %2143 = vmatprep.subr.mxu0 0.0
    %2144 = vmatpush2.msra.mxu0 0.0
    %2145 = vmatprep.subr.mxu0 0.0
    %2146 = vmatpush2.msra.mxu0 0.0
    %2147 = vmatprep.subr.mxu0 0.0
    %2148 = vmatpush2.msra.mxu0 0.0
    %2149 = vmatprep.subr.mxu0 0.0
    %2150 = vmatpush2.msra.mxu0 0.0
    %2151 = vmatprep.subr.mxu0 0.0
    %2152 = vmatpush2.msra.mxu0 0.0
    %2153 = vmatprep.mubr.f32.mxu0 0.0
    %2154 = vmatmul.mubr.f32.gmra.mxu0 %v2016
    %v2155 = vpop.f32.mrf.mxu0
    %v2156 = vadd.f32 0.0, %v2155
    %v2157 = vpop.f32.mrf.mxu0
    %v2158 = vadd.f32 0.0, %v2157
    %2159 = vdwg.mxu0
    %v2161 = vsel %vm2014, %v2013, 0
    %2163 = vmatprep.subr.mxu0 0.0
    %2164 = vmatpush1.msra.mxu0 0.0
    %2165 = vmatprep.subr.mxu0 0.0
    %2166 = vmatpush1.msra.mxu0 0.0
    %2167 = vmatprep.subr.mxu0 0.0
    %2168 = vmatpush1.msra.mxu0 0.0
    %2169 = vmatprep.subr.mxu0 0.0
    %2170 = vmatpush1.msra.mxu0 0.0
    %2171 = vmatprep.subr.mxu0 0.0
    %2172 = vmatpush1.msra.mxu0 0.0
    %2173 = vmatprep.subr.mxu0 0.0
    %2174 = vmatpush1.msra.mxu0 0.0
    %2175 = vmatprep.subr.mxu0 0.0
    %2176 = vmatpush1.msra.mxu0 0.0
    %2177 = vmatprep.subr.mxu0 0.0
    %2178 = vmatpush1.msra.mxu0 0.0
    %2179 = vmatprep.subr.mxu0 0.0
    %2180 = vmatpush1.msra.mxu0 0.0
    %2181 = vmatprep.subr.mxu0 0.0
    %2182 = vmatpush1.msra.mxu0 0.0
    %2183 = vmatprep.subr.mxu0 0.0
    %2184 = vmatpush1.msra.mxu0 0.0
    %2185 = vmatprep.subr.mxu0 0.0
    %2186 = vmatpush1.msra.mxu0 0.0
    %2187 = vmatprep.subr.mxu0 0.0
    %2188 = vmatpush1.msra.mxu0 0.0
    %2189 = vmatprep.subr.mxu0 0.0
    %2190 = vmatpush1.msra.mxu0 0.0
    %2191 = vmatprep.subr.mxu0 0.0
    %2192 = vmatpush1.msra.mxu0 0.0
    %2193 = vmatprep.subr.mxu0 %v182
    %2194 = vmatpush1.msra.mxu0 %v181
    %2195 = vmatprep.subr.mxu0 0.0
    %2196 = vmatpush2.msra.mxu0 0.0
    %2197 = vmatprep.subr.mxu0 0.0
    %2198 = vmatpush2.msra.mxu0 0.0
    %2199 = vmatprep.subr.mxu0 0.0
    %2200 = vmatpush2.msra.mxu0 0.0
    %2201 = vmatprep.subr.mxu0 0.0
    %2202 = vmatpush2.msra.mxu0 0.0
    %2203 = vmatprep.subr.mxu0 0.0
    %2204 = vmatpush2.msra.mxu0 0.0
    %2205 = vmatprep.subr.mxu0 0.0
    %2206 = vmatpush2.msra.mxu0 0.0
    %2207 = vmatprep.subr.mxu0 0.0
    %2208 = vmatpush2.msra.mxu0 0.0
    %2209 = vmatprep.subr.mxu0 0.0
    %2210 = vmatpush2.msra.mxu0 0.0
    %2211 = vmatprep.subr.mxu0 0.0
    %2212 = vmatpush2.msra.mxu0 0.0
    %2213 = vmatprep.subr.mxu0 0.0
    %2214 = vmatpush2.msra.mxu0 0.0
    %2215 = vmatprep.subr.mxu0 0.0
    %2216 = vmatpush2.msra.mxu0 0.0
    %2217 = vmatprep.subr.mxu0 0.0
    %2218 = vmatpush2.msra.mxu0 0.0
    %2219 = vmatprep.subr.mxu0 0.0
    %2220 = vmatpush2.msra.mxu0 0.0
    %2221 = vmatprep.subr.mxu0 0.0
    %2222 = vmatpush2.msra.mxu0 0.0
    %2223 = vmatprep.subr.mxu0 0.0
    %2224 = vmatpush2.msra.mxu0 0.0
    %2225 = vmatprep.subr.mxu0 0.0
    %2226 = vmatpush2.msra.mxu0 0.0
    %2227 = vmatprep.mubr.f32.mxu0 0.0
    %2228 = vmatmul.mubr.f32.gmra.mxu0 %v2161
    %v2229 = vpop.f32.mrf.mxu0
    %v2230 = vadd.f32 0.0, %v2229
    %v2231 = vpop.f32.mrf.mxu0
    %v2232 = vadd.f32 0.0, %v2231
    %2233 = vdwg.mxu0
    %2234 = vmatprep.subr.mxu0 0.0
    %2235 = vmatpush1.msra.mxu0 0.0
    %2236 = vmatprep.subr.mxu0 0.0
    %2237 = vmatpush1.msra.mxu0 0.0
    %2238 = vmatprep.subr.mxu0 0.0
    %2239 = vmatpush1.msra.mxu0 0.0
    %2240 = vmatprep.subr.mxu0 0.0
    %2241 = vmatpush1.msra.mxu0 0.0
    %2242 = vmatprep.subr.mxu0 0.0
    %2243 = vmatpush1.msra.mxu0 0.0
    %2244 = vmatprep.subr.mxu0 0.0
    %2245 = vmatpush1.msra.mxu0 0.0
    %2246 = vmatprep.subr.mxu0 0.0
    %2247 = vmatpush1.msra.mxu0 0.0
    %2248 = vmatprep.subr.mxu0 0.0
    %2249 = vmatpush1.msra.mxu0 0.0
    %2250 = vmatprep.subr.mxu0 0.0
    %2251 = vmatpush1.msra.mxu0 0.0
    %2252 = vmatprep.subr.mxu0 0.0
    %2253 = vmatpush1.msra.mxu0 0.0
    %2254 = vmatprep.subr.mxu0 0.0
    %2255 = vmatpush1.msra.mxu0 0.0
    %2256 = vmatprep.subr.mxu0 0.0
    %2257 = vmatpush1.msra.mxu0 0.0
    %2258 = vmatprep.subr.mxu0 0.0
    %2259 = vmatpush1.msra.mxu0 0.0
    %2260 = vmatprep.subr.mxu0 0.0
    %2261 = vmatpush1.msra.mxu0 0.0
    %2262 = vmatprep.subr.mxu0 0.0
    %2263 = vmatpush1.msra.mxu0 0.0
    %2264 = vmatprep.subr.mxu0 %v184
    %2265 = vmatpush1.msra.mxu0 %v183
    %2266 = vmatprep.subr.mxu0 0.0
    %2267 = vmatpush2.msra.mxu0 0.0
    %2268 = vmatprep.subr.mxu0 0.0
    %2269 = vmatpush2.msra.mxu0 0.0
    %2270 = vmatprep.subr.mxu0 0.0
    %2271 = vmatpush2.msra.mxu0 0.0
    %2272 = vmatprep.subr.mxu0 0.0
    %2273 = vmatpush2.msra.mxu0 0.0
    %2274 = vmatprep.subr.mxu0 0.0
    %2275 = vmatpush2.msra.mxu0 0.0
    %2276 = vmatprep.subr.mxu0 0.0
    %2277 = vmatpush2.msra.mxu0 0.0
    %2278 = vmatprep.subr.mxu0 0.0
    %2279 = vmatpush2.msra.mxu0 0.0
    %2280 = vmatprep.subr.mxu0 0.0
    %2281 = vmatpush2.msra.mxu0 0.0
    %2282 = vmatprep.subr.mxu0 0.0
    %2283 = vmatpush2.msra.mxu0 0.0
    %2284 = vmatprep.subr.mxu0 0.0
    %2285 = vmatpush2.msra.mxu0 0.0
    %2286 = vmatprep.subr.mxu0 0.0
    %2287 = vmatpush2.msra.mxu0 0.0
    %2288 = vmatprep.subr.mxu0 0.0
    %2289 = vmatpush2.msra.mxu0 0.0
    %2290 = vmatprep.subr.mxu0 0.0
    %2291 = vmatpush2.msra.mxu0 0.0
    %2292 = vmatprep.subr.mxu0 0.0
    %2293 = vmatpush2.msra.mxu0 0.0
    %2294 = vmatprep.subr.mxu0 0.0
    %2295 = vmatpush2.msra.mxu0 0.0
    %2296 = vmatprep.subr.mxu0 0.0
    %2297 = vmatpush2.msra.mxu0 0.0
    %2298 = vmatprep.mubr.f32.mxu0 0.0
    %2299 = vmatmul.mubr.f32.gmra.mxu0 %v2161
    %v2300 = vpop.f32.mrf.mxu0
    %v2301 = vadd.f32 0.0, %v2300
    %v2302 = vpop.f32.mrf.mxu0
    %v2303 = vadd.f32 0.0, %v2302
    %2304 = vdwg.mxu0
    %v2305 = vlaneseq
    %v2306 = vshrl.u32 %v2305, 7
    %v2307 = vsub.s32 0, %v2306
    %v2308 = vrot.slane %v2085, %v2307
    %v2309 = vlaneseq
    %v2310 = vshrl.u32 %v2309, 7
    %v2311 = vsub.s32 0, %v2310
    %v2312 = vrot.slane %v2087, %v2311
    %v2313 = vlaneseq
    %v2314 = vshrl.u32 %v2313, 7
    %v2315 = vsub.s32 0, %v2314
    %v2316 = vrot.slane %v2156, %v2315
    %v2317 = vlaneseq
    %v2318 = vshrl.u32 %v2317, 7
    %v2319 = vsub.s32 0, %v2318
    %v2320 = vrot.slane %v2158, %v2319
    %v2321 = vmul.f32 %v1651, %v2308
    %v2322 = vmul.f32 %v1652, %v2312
    %v2323 = vmul.f32 %v1653, %v2316
    %v2324 = vmul.f32 %v1654, %v2320
    %v2325 = vmul.f32 %v1655, %v2308
    %v2326 = vmul.f32 %v1656, %v2312
    %v2327 = vmul.f32 %v1657, %v2316
    %v2328 = vmul.f32 %v1658, %v2320
    %v2329 = vlaneseq
    %v2330 = vshrl.u32 %v2329, 7
    %v2331 = vsub.s32 0, %v2330
    %v2332 = vrot.slane %v2230, %v2331
    %v2333 = vlaneseq
    %v2334 = vshrl.u32 %v2333, 7
    %v2335 = vsub.s32 0, %v2334
    %v2336 = vrot.slane %v2232, %v2335
    %v2337 = vlaneseq
    %v2338 = vshrl.u32 %v2337, 7
    %v2339 = vsub.s32 0, %v2338
    %v2340 = vrot.slane %v2301, %v2339
    %v2341 = vlaneseq
    %v2342 = vshrl.u32 %v2341, 7
    %v2343 = vsub.s32 0, %v2342
    %v2344 = vrot.slane %v2303, %v2343
    %v2345 = vadd.f32 %v2321, %v2332
    %v2346 = vadd.f32 %v2322, %v2336
    %v2347 = vadd.f32 %v2323, %v2340
    %v2348 = vadd.f32 %v2324, %v2344
    %v2349 = vadd.f32 %v2325, %v2332
    %v2350 = vadd.f32 %v2326, %v2336
    %v2351 = vadd.f32 %v2327, %v2340
    %v2352 = vadd.f32 %v2328, %v2344
    %v2353 = vmax.f32 %v2345, 0.0
    %v2354 = vmax.f32 %v2346, 0.0
    %v2355 = vmax.f32 %v2347, 0.0
    %v2356 = vmax.f32 %v2348, 0.0
    %v2357 = vmax.f32 %v2349, 0.0
    %v2358 = vmax.f32 %v2350, 0.0
    %v2359 = vmax.f32 %v2351, 0.0
    %v2360 = vmax.f32 %v2352, 0.0
    %v2361 = vpack.c.bf16 %v2357, %v2353
    %v2362 = vpack.c.bf16 %v2358, %v2354
    %v2363 = vpack.c.bf16 %v2359, %v2355
    %v2364 = vpack.c.bf16 %v2360, %v2356
    %s2365 = scalar_lea.vmem [#allocation7], 1024
    %v2366 = vld [vmem:[%s2365] sm:$0xff]
    %v2367 = vld [vmem:[%s2365 + $0x8] sm:$0xff]
    %v2368 = vld [vmem:[%s2365 + $0x10] sm:$0xff]
    %v2369 = vld [vmem:[%s2365 + $0x18] sm:$0xff]
    %v2370 = vld [vmem:[%s2365 + $0x20] sm:$0xff]
    %v2371 = vld [vmem:[%s2365 + $0x28] sm:$0xff]
    %v2372 = vld [vmem:[%s2365 + $0x30] sm:$0xff]
    %v2373 = vld [vmem:[%s2365 + $0x38] sm:$0xff]
    %v2374 = vld [vmem:[%s2365 + $0x40] sm:$0xff]
    %v2375 = vld [vmem:[%s2365 + $0x48] sm:$0xff]
    %v2376 = vld [vmem:[%s2365 + $0x50] sm:$0xff]
    %v2377 = vld [vmem:[%s2365 + $0x58] sm:$0xff]
    %v2378 = vld [vmem:[%s2365 + $0x60] sm:$0xff]
    %v2379 = vld [vmem:[%s2365 + $0x68] sm:$0xff]
    %v2380 = vld [vmem:[%s2365 + $0x70] sm:$0xff]
    %v2381 = vld [vmem:[%s2365 + $0x78] sm:$0xff]
    %v2382 = vld [vmem:[%s2365 + $0x80] sm:$0xff]
    %v2383 = vld [vmem:[%s2365 + $0x88] sm:$0xff]
    %v2384 = vld [vmem:[%s2365 + $0x90] sm:$0xff]
    %v2385 = vld [vmem:[%s2365 + $0x98] sm:$0xff]
    %v2386 = vld [vmem:[%s2365 + $0xa0] sm:$0xff]
    %v2387 = vld [vmem:[%s2365 + $0xa8] sm:$0xff]
    %v2388 = vld [vmem:[%s2365 + $0xb0] sm:$0xff]
    %v2389 = vld [vmem:[%s2365 + $0xb8] sm:$0xff]
    %v2390 = vld [vmem:[%s2365 + $0xc0] sm:$0xff]
    %v2391 = vld [vmem:[%s2365 + $0xc8] sm:$0xff]
    %v2392 = vld [vmem:[%s2365 + $0xd0] sm:$0xff]
    %v2393 = vld [vmem:[%s2365 + $0xd8] sm:$0xff]
    %v2394 = vld [vmem:[%s2365 + $0xe0] sm:$0xff]
    %v2395 = vld [vmem:[%s2365 + $0xe8] sm:$0xff]
    %v2396 = vld [vmem:[%s2365 + $0xf0] sm:$0xff]
    %v2397 = vld [vmem:[%s2365 + $0xf8] sm:$0xff]
    %v2398 = vld [vmem:[%s2365 + $0x100] sm:$0xff]
    %v2399 = vld [vmem:[%s2365 + $0x108] sm:$0xff]
    %v2400 = vld [vmem:[%s2365 + $0x110] sm:$0xff]
    %v2401 = vld [vmem:[%s2365 + $0x118] sm:$0xff]
    %v2402 = vld [vmem:[%s2365 + $0x120] sm:$0xff]
    %v2403 = vld [vmem:[%s2365 + $0x128] sm:$0xff]
    %v2404 = vld [vmem:[%s2365 + $0x130] sm:$0xff]
    %v2405 = vld [vmem:[%s2365 + $0x138] sm:$0xff]
    %v2406 = vld [vmem:[%s2365 + $0x140] sm:$0xff]
    %v2407 = vld [vmem:[%s2365 + $0x148] sm:$0xff]
    %v2408 = vld [vmem:[%s2365 + $0x150] sm:$0xff]
    %v2409 = vld [vmem:[%s2365 + $0x158] sm:$0xff]
    %v2410 = vld [vmem:[%s2365 + $0x160] sm:$0xff]
    %v2411 = vld [vmem:[%s2365 + $0x168] sm:$0xff]
    %v2412 = vld [vmem:[%s2365 + $0x170] sm:$0xff]
    %v2413 = vld [vmem:[%s2365 + $0x178] sm:$0xff]
    %v2414 = vld [vmem:[%s2365 + $0x180] sm:$0xff]
    %v2415 = vld [vmem:[%s2365 + $0x188] sm:$0xff]
    %v2416 = vld [vmem:[%s2365 + $0x190] sm:$0xff]
    %v2417 = vld [vmem:[%s2365 + $0x198] sm:$0xff]
    %v2418 = vld [vmem:[%s2365 + $0x1a0] sm:$0xff]
    %v2419 = vld [vmem:[%s2365 + $0x1a8] sm:$0xff]
    %v2420 = vld [vmem:[%s2365 + $0x1b0] sm:$0xff]
    %v2421 = vld [vmem:[%s2365 + $0x1b8] sm:$0xff]
    %v2422 = vld [vmem:[%s2365 + $0x1c0] sm:$0xff]
    %v2423 = vld [vmem:[%s2365 + $0x1c8] sm:$0xff]
    %v2424 = vld [vmem:[%s2365 + $0x1d0] sm:$0xff]
    %v2425 = vld [vmem:[%s2365 + $0x1d8] sm:$0xff]
    %v2426 = vld [vmem:[%s2365 + $0x1e0] sm:$0xff]
    %v2427 = vld [vmem:[%s2365 + $0x1e8] sm:$0xff]
    %v2428 = vld [vmem:[%s2365 + $0x1f0] sm:$0xff]
    %v2429 = vld [vmem:[%s2365 + $0x1f8] sm:$0xff]
    %v2430 = vld [vmem:[%s2365 + $0x200] sm:$0xff]
    %v2431 = vld [vmem:[%s2365 + $0x208] sm:$0xff]
    %v2432 = vld [vmem:[%s2365 + $0x210] sm:$0xff]
    %v2433 = vld [vmem:[%s2365 + $0x218] sm:$0xff]
    %v2434 = vld [vmem:[%s2365 + $0x220] sm:$0xff]
    %v2435 = vld [vmem:[%s2365 + $0x228] sm:$0xff]
    %v2436 = vld [vmem:[%s2365 + $0x230] sm:$0xff]
    %v2437 = vld [vmem:[%s2365 + $0x238] sm:$0xff]
    %v2438 = vld [vmem:[%s2365 + $0x240] sm:$0xff]
    %v2439 = vld [vmem:[%s2365 + $0x248] sm:$0xff]
    %v2440 = vld [vmem:[%s2365 + $0x250] sm:$0xff]
    %v2441 = vld [vmem:[%s2365 + $0x258] sm:$0xff]
    %v2442 = vld [vmem:[%s2365 + $0x260] sm:$0xff]
    %v2443 = vld [vmem:[%s2365 + $0x268] sm:$0xff]
    %v2444 = vld [vmem:[%s2365 + $0x270] sm:$0xff]
    %v2445 = vld [vmem:[%s2365 + $0x278] sm:$0xff]
    %v2446 = vld [vmem:[%s2365 + $0x280] sm:$0xff]
    %v2447 = vld [vmem:[%s2365 + $0x288] sm:$0xff]
    %v2448 = vld [vmem:[%s2365 + $0x290] sm:$0xff]
    %v2449 = vld [vmem:[%s2365 + $0x298] sm:$0xff]
    %v2450 = vld [vmem:[%s2365 + $0x2a0] sm:$0xff]
    %v2451 = vld [vmem:[%s2365 + $0x2a8] sm:$0xff]
    %v2452 = vld [vmem:[%s2365 + $0x2b0] sm:$0xff]
    %v2453 = vld [vmem:[%s2365 + $0x2b8] sm:$0xff]
    %v2454 = vld [vmem:[%s2365 + $0x2c0] sm:$0xff]
    %v2455 = vld [vmem:[%s2365 + $0x2c8] sm:$0xff]
    %v2456 = vld [vmem:[%s2365 + $0x2d0] sm:$0xff]
    %v2457 = vld [vmem:[%s2365 + $0x2d8] sm:$0xff]
    %v2458 = vld [vmem:[%s2365 + $0x2e0] sm:$0xff]
    %v2459 = vld [vmem:[%s2365 + $0x2e8] sm:$0xff]
    %v2460 = vld [vmem:[%s2365 + $0x2f0] sm:$0xff]
    %v2461 = vld [vmem:[%s2365 + $0x2f8] sm:$0xff]
    %v2462 = vld [vmem:[%s2365 + $0x300] sm:$0xff]
    %v2463 = vld [vmem:[%s2365 + $0x308] sm:$0xff]
    %v2464 = vld [vmem:[%s2365 + $0x310] sm:$0xff]
    %v2465 = vld [vmem:[%s2365 + $0x318] sm:$0xff]
    %v2466 = vld [vmem:[%s2365 + $0x320] sm:$0xff]
    %v2467 = vld [vmem:[%s2365 + $0x328] sm:$0xff]
    %v2468 = vld [vmem:[%s2365 + $0x330] sm:$0xff]
    %v2469 = vld [vmem:[%s2365 + $0x338] sm:$0xff]
    %v2470 = vld [vmem:[%s2365 + $0x340] sm:$0xff]
    %v2471 = vld [vmem:[%s2365 + $0x348] sm:$0xff]
    %v2472 = vld [vmem:[%s2365 + $0x350] sm:$0xff]
    %v2473 = vld [vmem:[%s2365 + $0x358] sm:$0xff]
    %v2474 = vld [vmem:[%s2365 + $0x360] sm:$0xff]
    %v2475 = vld [vmem:[%s2365 + $0x368] sm:$0xff]
    %v2476 = vld [vmem:[%s2365 + $0x370] sm:$0xff]
    %v2477 = vld [vmem:[%s2365 + $0x378] sm:$0xff]
    %v2478 = vld [vmem:[%s2365 + $0x380] sm:$0xff]
    %v2479 = vld [vmem:[%s2365 + $0x388] sm:$0xff]
    %v2480 = vld [vmem:[%s2365 + $0x390] sm:$0xff]
    %v2481 = vld [vmem:[%s2365 + $0x398] sm:$0xff]
    %v2482 = vld [vmem:[%s2365 + $0x3a0] sm:$0xff]
    %v2483 = vld [vmem:[%s2365 + $0x3a8] sm:$0xff]
    %v2484 = vld [vmem:[%s2365 + $0x3b0] sm:$0xff]
    %v2485 = vld [vmem:[%s2365 + $0x3b8] sm:$0xff]
    %v2486 = vld [vmem:[%s2365 + $0x3c0] sm:$0xff]
    %v2487 = vld [vmem:[%s2365 + $0x3c8] sm:$0xff]
    %v2488 = vld [vmem:[%s2365 + $0x3d0] sm:$0xff]
    %v2489 = vld [vmem:[%s2365 + $0x3d8] sm:$0xff]
    %v2490 = vld [vmem:[%s2365 + $0x3e0] sm:$0xff]
    %v2491 = vld [vmem:[%s2365 + $0x3e8] sm:$0xff]
    %v2492 = vld [vmem:[%s2365 + $0x3f0] sm:$0xff]
    %v2493 = vld [vmem:[%s2365 + $0x3f8] sm:$0xff]
    %v2494 = vrot.slane %v2353, 7
    %v2495 = vrot.slane %v2354, 7
    %v2496 = vrot.slane %v2355, 7
    %v2497 = vrot.slane %v2356, 7
    %v2498 = vrot.slane %v2357, 7
    %v2499 = vrot.slane %v2358, 7
    %v2500 = vrot.slane %v2359, 7
    %v2501 = vrot.slane %v2360, 7
    %v2502 = vsel %vm258, %v2494, %v2498
    %v2503 = vsel %vm258, %v2495, %v2499
    %v2504 = vsel %vm258, %v2496, %v2500
    %v2505 = vsel %vm258, %v2497, %v2501
    %v2506 = vsel %vm258, %v2498, %v2494
    %v2507 = vsel %vm258, %v2499, %v2495
    %v2508 = vsel %vm258, %v2500, %v2496
    %v2509 = vsel %vm258, %v2501, %v2497
    %v2510 = vmul.f32 %v2506, %v266
    %v2511 = vmul.f32 %v2507, %v266
    %v2512 = vmul.f32 %v2508, %v266
    %v2513 = vmul.f32 %v2509, %v266
    %v2514 = vmul.f32 %v2502, %v271
    %v2515 = vmul.f32 %v2503, %v271
    %v2516 = vmul.f32 %v2504, %v271
    %v2517 = vmul.f32 %v2505, %v271
    %v2518 = vpack.c.bf16 %v2514, %v2510
    %v2519 = vpack.c.bf16 %v2515, %v2511
    %v2520 = vpack.c.bf16 %v2516, %v2512
    %v2521 = vpack.c.bf16 %v2517, %v2513
    %v2522 = vld [vmem:[#allocation7] sm:$0xff]
    %v2523 = vld [vmem:[#allocation7 + $0x8] sm:$0xff]
    %v2524 = vld [vmem:[#allocation7 + $0x10] sm:$0xff]
    %v2525 = vld [vmem:[#allocation7 + $0x18] sm:$0xff]
    %v2526 = vld [vmem:[#allocation7 + $0x20] sm:$0xff]
    %v2527 = vld [vmem:[#allocation7 + $0x28] sm:$0xff]
    %v2528 = vld [vmem:[#allocation7 + $0x30] sm:$0xff]
    %v2529 = vld [vmem:[#allocation7 + $0x38] sm:$0xff]
    %v2530 = vld [vmem:[#allocation7 + $0x40] sm:$0xff]
    %v2531 = vld [vmem:[#allocation7 + $0x48] sm:$0xff]
    %v2532 = vld [vmem:[#allocation7 + $0x50] sm:$0xff]
    %v2533 = vld [vmem:[#allocation7 + $0x58] sm:$0xff]
    %v2534 = vld [vmem:[#allocation7 + $0x60] sm:$0xff]
    %v2535 = vld [vmem:[#allocation7 + $0x68] sm:$0xff]
    %v2536 = vld [vmem:[#allocation7 + $0x70] sm:$0xff]
    %v2537 = vld [vmem:[#allocation7 + $0x78] sm:$0xff]
    %v2538 = vld [vmem:[#allocation7 + $0x80] sm:$0xff]
    %v2539 = vld [vmem:[#allocation7 + $0x88] sm:$0xff]
    %v2540 = vld [vmem:[#allocation7 + $0x90] sm:$0xff]
    %v2541 = vld [vmem:[#allocation7 + $0x98] sm:$0xff]
    %v2542 = vld [vmem:[#allocation7 + $0xa0] sm:$0xff]
    %v2543 = vld [vmem:[#allocation7 + $0xa8] sm:$0xff]
    %v2544 = vld [vmem:[#allocation7 + $0xb0] sm:$0xff]
    %v2545 = vld [vmem:[#allocation7 + $0xb8] sm:$0xff]
    %v2546 = vld [vmem:[#allocation7 + $0xc0] sm:$0xff]
    %v2547 = vld [vmem:[#allocation7 + $0xc8] sm:$0xff]
    %v2548 = vld [vmem:[#allocation7 + $0xd0] sm:$0xff]
    %v2549 = vld [vmem:[#allocation7 + $0xd8] sm:$0xff]
    %v2550 = vld [vmem:[#allocation7 + $0xe0] sm:$0xff]
    %v2551 = vld [vmem:[#allocation7 + $0xe8] sm:$0xff]
    %v2552 = vld [vmem:[#allocation7 + $0xf0] sm:$0xff]
    %v2553 = vld [vmem:[#allocation7 + $0xf8] sm:$0xff]
    %v2554 = vld [vmem:[#allocation7 + $0x100] sm:$0xff]
    %v2555 = vld [vmem:[#allocation7 + $0x108] sm:$0xff]
    %v2556 = vld [vmem:[#allocation7 + $0x110] sm:$0xff]
    %v2557 = vld [vmem:[#allocation7 + $0x118] sm:$0xff]
    %v2558 = vld [vmem:[#allocation7 + $0x120] sm:$0xff]
    %v2559 = vld [vmem:[#allocation7 + $0x128] sm:$0xff]
    %v2560 = vld [vmem:[#allocation7 + $0x130] sm:$0xff]
    %v2561 = vld [vmem:[#allocation7 + $0x138] sm:$0xff]
    %v2562 = vld [vmem:[#allocation7 + $0x140] sm:$0xff]
    %v2563 = vld [vmem:[#allocation7 + $0x148] sm:$0xff]
    %v2564 = vld [vmem:[#allocation7 + $0x150] sm:$0xff]
    %v2565 = vld [vmem:[#allocation7 + $0x158] sm:$0xff]
    %v2566 = vld [vmem:[#allocation7 + $0x160] sm:$0xff]
    %v2567 = vld [vmem:[#allocation7 + $0x168] sm:$0xff]
    %v2568 = vld [vmem:[#allocation7 + $0x170] sm:$0xff]
    %v2569 = vld [vmem:[#allocation7 + $0x178] sm:$0xff]
    %v2570 = vld [vmem:[#allocation7 + $0x180] sm:$0xff]
    %v2571 = vld [vmem:[#allocation7 + $0x188] sm:$0xff]
    %v2572 = vld [vmem:[#allocation7 + $0x190] sm:$0xff]
    %v2573 = vld [vmem:[#allocation7 + $0x198] sm:$0xff]
    %v2574 = vld [vmem:[#allocation7 + $0x1a0] sm:$0xff]
    %v2575 = vld [vmem:[#allocation7 + $0x1a8] sm:$0xff]
    %v2576 = vld [vmem:[#allocation7 + $0x1b0] sm:$0xff]
    %v2577 = vld [vmem:[#allocation7 + $0x1b8] sm:$0xff]
    %v2578 = vld [vmem:[#allocation7 + $0x1c0] sm:$0xff]
    %v2579 = vld [vmem:[#allocation7 + $0x1c8] sm:$0xff]
    %v2580 = vld [vmem:[#allocation7 + $0x1d0] sm:$0xff]
    %v2581 = vld [vmem:[#allocation7 + $0x1d8] sm:$0xff]
    %v2582 = vld [vmem:[#allocation7 + $0x1e0] sm:$0xff]
    %v2583 = vld [vmem:[#allocation7 + $0x1e8] sm:$0xff]
    %v2584 = vld [vmem:[#allocation7 + $0x1f0] sm:$0xff]
    %v2585 = vld [vmem:[#allocation7 + $0x1f8] sm:$0xff]
    %v2586 = vld [vmem:[#allocation7 + $0x200] sm:$0xff]
    %v2587 = vld [vmem:[#allocation7 + $0x208] sm:$0xff]
    %v2588 = vld [vmem:[#allocation7 + $0x210] sm:$0xff]
    %v2589 = vld [vmem:[#allocation7 + $0x218] sm:$0xff]
    %v2590 = vld [vmem:[#allocation7 + $0x220] sm:$0xff]
    %v2591 = vld [vmem:[#allocation7 + $0x228] sm:$0xff]
    %v2592 = vld [vmem:[#allocation7 + $0x230] sm:$0xff]
    %v2593 = vld [vmem:[#allocation7 + $0x238] sm:$0xff]
    %v2594 = vld [vmem:[#allocation7 + $0x240] sm:$0xff]
    %v2595 = vld [vmem:[#allocation7 + $0x248] sm:$0xff]
    %v2596 = vld [vmem:[#allocation7 + $0x250] sm:$0xff]
    %v2597 = vld [vmem:[#allocation7 + $0x258] sm:$0xff]
    %v2598 = vld [vmem:[#allocation7 + $0x260] sm:$0xff]
    %v2599 = vld [vmem:[#allocation7 + $0x268] sm:$0xff]
    %v2600 = vld [vmem:[#allocation7 + $0x270] sm:$0xff]
    %v2601 = vld [vmem:[#allocation7 + $0x278] sm:$0xff]
    %v2602 = vld [vmem:[#allocation7 + $0x280] sm:$0xff]
    %v2603 = vld [vmem:[#allocation7 + $0x288] sm:$0xff]
    %v2604 = vld [vmem:[#allocation7 + $0x290] sm:$0xff]
    %v2605 = vld [vmem:[#allocation7 + $0x298] sm:$0xff]
    %v2606 = vld [vmem:[#allocation7 + $0x2a0] sm:$0xff]
    %v2607 = vld [vmem:[#allocation7 + $0x2a8] sm:$0xff]
    %v2608 = vld [vmem:[#allocation7 + $0x2b0] sm:$0xff]
    %v2609 = vld [vmem:[#allocation7 + $0x2b8] sm:$0xff]
    %v2610 = vld [vmem:[#allocation7 + $0x2c0] sm:$0xff]
    %v2611 = vld [vmem:[#allocation7 + $0x2c8] sm:$0xff]
    %v2612 = vld [vmem:[#allocation7 + $0x2d0] sm:$0xff]
    %v2613 = vld [vmem:[#allocation7 + $0x2d8] sm:$0xff]
    %v2614 = vld [vmem:[#allocation7 + $0x2e0] sm:$0xff]
    %v2615 = vld [vmem:[#allocation7 + $0x2e8] sm:$0xff]
    %v2616 = vld [vmem:[#allocation7 + $0x2f0] sm:$0xff]
    %v2617 = vld [vmem:[#allocation7 + $0x2f8] sm:$0xff]
    %v2618 = vld [vmem:[#allocation7 + $0x300] sm:$0xff]
    %v2619 = vld [vmem:[#allocation7 + $0x308] sm:$0xff]
    %v2620 = vld [vmem:[#allocation7 + $0x310] sm:$0xff]
    %v2621 = vld [vmem:[#allocation7 + $0x318] sm:$0xff]
    %v2622 = vld [vmem:[#allocation7 + $0x320] sm:$0xff]
    %v2623 = vld [vmem:[#allocation7 + $0x328] sm:$0xff]
    %v2624 = vld [vmem:[#allocation7 + $0x330] sm:$0xff]
    %v2625 = vld [vmem:[#allocation7 + $0x338] sm:$0xff]
    %v2626 = vld [vmem:[#allocation7 + $0x340] sm:$0xff]
    %v2627 = vld [vmem:[#allocation7 + $0x348] sm:$0xff]
    %v2628 = vld [vmem:[#allocation7 + $0x350] sm:$0xff]
    %v2629 = vld [vmem:[#allocation7 + $0x358] sm:$0xff]
    %v2630 = vld [vmem:[#allocation7 + $0x360] sm:$0xff]
    %v2631 = vld [vmem:[#allocation7 + $0x368] sm:$0xff]
    %v2632 = vld [vmem:[#allocation7 + $0x370] sm:$0xff]
    %v2633 = vld [vmem:[#allocation7 + $0x378] sm:$0xff]
    %v2634 = vld [vmem:[#allocation7 + $0x380] sm:$0xff]
    %v2635 = vld [vmem:[#allocation7 + $0x388] sm:$0xff]
    %v2636 = vld [vmem:[#allocation7 + $0x390] sm:$0xff]
    %v2637 = vld [vmem:[#allocation7 + $0x398] sm:$0xff]
    %v2638 = vld [vmem:[#allocation7 + $0x3a0] sm:$0xff]
    %v2639 = vld [vmem:[#allocation7 + $0x3a8] sm:$0xff]
    %v2640 = vld [vmem:[#allocation7 + $0x3b0] sm:$0xff]
    %v2641 = vld [vmem:[#allocation7 + $0x3b8] sm:$0xff]
    %v2642 = vld [vmem:[#allocation7 + $0x3c0] sm:$0xff]
    %v2643 = vld [vmem:[#allocation7 + $0x3c8] sm:$0xff]
    %v2644 = vld [vmem:[#allocation7 + $0x3d0] sm:$0xff]
    %v2645 = vld [vmem:[#allocation7 + $0x3d8] sm:$0xff]
    %v2646 = vld [vmem:[#allocation7 + $0x3e0] sm:$0xff]
    %v2647 = vld [vmem:[#allocation7 + $0x3e8] sm:$0xff]
    %v2648 = vld [vmem:[#allocation7 + $0x3f0] sm:$0xff]
    %v2649 = vld [vmem:[#allocation7 + $0x3f8] sm:$0xff]
    %v2778 = vunpack.c.l.b16 %v2522
    %v2779 = vunpack.c.h.b16 %v2522
    %v2780 = vunpack.c.l.b16 %v2523
    %v2781 = vunpack.c.h.b16 %v2523
    %v2782 = vunpack.c.l.b16 %v2524
    %v2783 = vunpack.c.h.b16 %v2524
    %v2784 = vunpack.c.l.b16 %v2525
    %v2785 = vunpack.c.h.b16 %v2525
    %v2786 = vunpack.c.l.b16 %v2526
    %v2787 = vunpack.c.h.b16 %v2526
    %v2788 = vunpack.c.l.b16 %v2527
    %v2789 = vunpack.c.h.b16 %v2527
    %v2790 = vunpack.c.l.b16 %v2528
    %v2791 = vunpack.c.h.b16 %v2528
    %v2792 = vunpack.c.l.b16 %v2529
    %v2793 = vunpack.c.h.b16 %v2529
    %v2794 = vunpack.c.l.b16 %v2530
    %v2795 = vunpack.c.h.b16 %v2530
    %v2796 = vunpack.c.l.b16 %v2531
    %v2797 = vunpack.c.h.b16 %v2531
    %v2798 = vunpack.c.l.b16 %v2532
    %v2799 = vunpack.c.h.b16 %v2532
    %v2800 = vunpack.c.l.b16 %v2533
    %v2801 = vunpack.c.h.b16 %v2533
    %v2802 = vunpack.c.l.b16 %v2534
    %v2803 = vunpack.c.h.b16 %v2534
    %v2804 = vunpack.c.l.b16 %v2535
    %v2805 = vunpack.c.h.b16 %v2535
    %v2806 = vunpack.c.l.b16 %v2536
    %v2807 = vunpack.c.h.b16 %v2536
    %v2808 = vunpack.c.l.b16 %v2537
    %v2809 = vunpack.c.h.b16 %v2537
    %v2810 = vunpack.c.l.b16 %v2538
    %v2811 = vunpack.c.h.b16 %v2538
    %v2812 = vunpack.c.l.b16 %v2539
    %v2813 = vunpack.c.h.b16 %v2539
    %v2814 = vunpack.c.l.b16 %v2540
    %v2815 = vunpack.c.h.b16 %v2540
    %v2816 = vunpack.c.l.b16 %v2541
    %v2817 = vunpack.c.h.b16 %v2541
    %v2818 = vunpack.c.l.b16 %v2542
    %v2819 = vunpack.c.h.b16 %v2542
    %v2820 = vunpack.c.l.b16 %v2543
    %v2821 = vunpack.c.h.b16 %v2543
    %v2822 = vunpack.c.l.b16 %v2544
    %v2823 = vunpack.c.h.b16 %v2544
    %v2824 = vunpack.c.l.b16 %v2545
    %v2825 = vunpack.c.h.b16 %v2545
    %v2826 = vunpack.c.l.b16 %v2546
    %v2827 = vunpack.c.h.b16 %v2546
    %v2828 = vunpack.c.l.b16 %v2547
    %v2829 = vunpack.c.h.b16 %v2547
    %v2830 = vunpack.c.l.b16 %v2548
    %v2831 = vunpack.c.h.b16 %v2548
    %v2832 = vunpack.c.l.b16 %v2549
    %v2833 = vunpack.c.h.b16 %v2549
    %v2834 = vunpack.c.l.b16 %v2550
    %v2835 = vunpack.c.h.b16 %v2550
    %v2836 = vunpack.c.l.b16 %v2551
    %v2837 = vunpack.c.h.b16 %v2551
    %v2838 = vunpack.c.l.b16 %v2552
    %v2839 = vunpack.c.h.b16 %v2552
    %v2840 = vunpack.c.l.b16 %v2553
    %v2841 = vunpack.c.h.b16 %v2553
    %v2842 = vunpack.c.l.b16 %v2554
    %v2843 = vunpack.c.h.b16 %v2554
    %v2844 = vunpack.c.l.b16 %v2555
    %v2845 = vunpack.c.h.b16 %v2555
    %v2846 = vunpack.c.l.b16 %v2556
    %v2847 = vunpack.c.h.b16 %v2556
    %v2848 = vunpack.c.l.b16 %v2557
    %v2849 = vunpack.c.h.b16 %v2557
    %v2850 = vunpack.c.l.b16 %v2558
    %v2851 = vunpack.c.h.b16 %v2558
    %v2852 = vunpack.c.l.b16 %v2559
    %v2853 = vunpack.c.h.b16 %v2559
    %v2854 = vunpack.c.l.b16 %v2560
    %v2855 = vunpack.c.h.b16 %v2560
    %v2856 = vunpack.c.l.b16 %v2561
    %v2857 = vunpack.c.h.b16 %v2561
    %v2858 = vunpack.c.l.b16 %v2562
    %v2859 = vunpack.c.h.b16 %v2562
    %v2860 = vunpack.c.l.b16 %v2563
    %v2861 = vunpack.c.h.b16 %v2563
    %v2862 = vunpack.c.l.b16 %v2564
    %v2863 = vunpack.c.h.b16 %v2564
    %v2864 = vunpack.c.l.b16 %v2565
    %v2865 = vunpack.c.h.b16 %v2565
    %v2866 = vunpack.c.l.b16 %v2566
    %v2867 = vunpack.c.h.b16 %v2566
    %v2868 = vunpack.c.l.b16 %v2567
    %v2869 = vunpack.c.h.b16 %v2567
    %v2870 = vunpack.c.l.b16 %v2568
    %v2871 = vunpack.c.h.b16 %v2568
    %v2872 = vunpack.c.l.b16 %v2569
    %v2873 = vunpack.c.h.b16 %v2569
    %v2874 = vunpack.c.l.b16 %v2570
    %v2875 = vunpack.c.h.b16 %v2570
    %v2876 = vunpack.c.l.b16 %v2571
    %v2877 = vunpack.c.h.b16 %v2571
    %v2878 = vunpack.c.l.b16 %v2572
    %v2879 = vunpack.c.h.b16 %v2572
    %v2880 = vunpack.c.l.b16 %v2573
    %v2881 = vunpack.c.h.b16 %v2573
    %v2882 = vunpack.c.l.b16 %v2574
    %v2883 = vunpack.c.h.b16 %v2574
    %v2884 = vunpack.c.l.b16 %v2575
    %v2885 = vunpack.c.h.b16 %v2575
    %v2886 = vunpack.c.l.b16 %v2576
    %v2887 = vunpack.c.h.b16 %v2576
    %v2888 = vunpack.c.l.b16 %v2577
    %v2889 = vunpack.c.h.b16 %v2577
    %v2890 = vunpack.c.l.b16 %v2578
    %v2891 = vunpack.c.h.b16 %v2578
    %v2892 = vunpack.c.l.b16 %v2579
    %v2893 = vunpack.c.h.b16 %v2579
    %v2894 = vunpack.c.l.b16 %v2580
    %v2895 = vunpack.c.h.b16 %v2580
    %v2896 = vunpack.c.l.b16 %v2581
    %v2897 = vunpack.c.h.b16 %v2581
    %v2898 = vunpack.c.l.b16 %v2582
    %v2899 = vunpack.c.h.b16 %v2582
    %v2900 = vunpack.c.l.b16 %v2583
    %v2901 = vunpack.c.h.b16 %v2583
    %v2902 = vunpack.c.l.b16 %v2584
    %v2903 = vunpack.c.h.b16 %v2584
    %v2904 = vunpack.c.l.b16 %v2585
    %v2905 = vunpack.c.h.b16 %v2585
    %v2906 = vunpack.c.l.b16 %v2586
    %v2907 = vunpack.c.h.b16 %v2586
    %v2908 = vunpack.c.l.b16 %v2587
    %v2909 = vunpack.c.h.b16 %v2587
    %v2910 = vunpack.c.l.b16 %v2588
    %v2911 = vunpack.c.h.b16 %v2588
    %v2912 = vunpack.c.l.b16 %v2589
    %v2913 = vunpack.c.h.b16 %v2589
    %v2914 = vunpack.c.l.b16 %v2590
    %v2915 = vunpack.c.h.b16 %v2590
    %v2916 = vunpack.c.l.b16 %v2591
    %v2917 = vunpack.c.h.b16 %v2591
    %v2918 = vunpack.c.l.b16 %v2592
    %v2919 = vunpack.c.h.b16 %v2592
    %v2920 = vunpack.c.l.b16 %v2593
    %v2921 = vunpack.c.h.b16 %v2593
    %v2922 = vunpack.c.l.b16 %v2594
    %v2923 = vunpack.c.h.b16 %v2594
    %v2924 = vunpack.c.l.b16 %v2595
    %v2925 = vunpack.c.h.b16 %v2595
    %v2926 = vunpack.c.l.b16 %v2596
    %v2927 = vunpack.c.h.b16 %v2596
    %v2928 = vunpack.c.l.b16 %v2597
    %v2929 = vunpack.c.h.b16 %v2597
    %v2930 = vunpack.c.l.b16 %v2598
    %v2931 = vunpack.c.h.b16 %v2598
    %v2932 = vunpack.c.l.b16 %v2599
    %v2933 = vunpack.c.h.b16 %v2599
    %v2934 = vunpack.c.l.b16 %v2600
    %v2935 = vunpack.c.h.b16 %v2600
    %v2936 = vunpack.c.l.b16 %v2601
    %v2937 = vunpack.c.h.b16 %v2601
    %v2938 = vunpack.c.l.b16 %v2602
    %v2939 = vunpack.c.h.b16 %v2602
    %v2940 = vunpack.c.l.b16 %v2603
    %v2941 = vunpack.c.h.b16 %v2603
    %v2942 = vunpack.c.l.b16 %v2604
    %v2943 = vunpack.c.h.b16 %v2604
    %v2944 = vunpack.c.l.b16 %v2605
    %v2945 = vunpack.c.h.b16 %v2605
    %v2946 = vunpack.c.l.b16 %v2606
    %v2947 = vunpack.c.h.b16 %v2606
    %v2948 = vunpack.c.l.b16 %v2607
    %v2949 = vunpack.c.h.b16 %v2607
    %v2950 = vunpack.c.l.b16 %v2608
    %v2951 = vunpack.c.h.b16 %v2608
    %v2952 = vunpack.c.l.b16 %v2609
    %v2953 = vunpack.c.h.b16 %v2609
    %v2954 = vunpack.c.l.b16 %v2610
    %v2955 = vunpack.c.h.b16 %v2610
    %v2956 = vunpack.c.l.b16 %v2611
    %v2957 = vunpack.c.h.b16 %v2611
    %v2958 = vunpack.c.l.b16 %v2612
    %v2959 = vunpack.c.h.b16 %v2612
    %v2960 = vunpack.c.l.b16 %v2613
    %v2961 = vunpack.c.h.b16 %v2613
    %v2962 = vunpack.c.l.b16 %v2614
    %v2963 = vunpack.c.h.b16 %v2614
    %v2964 = vunpack.c.l.b16 %v2615
    %v2965 = vunpack.c.h.b16 %v2615
    %v2966 = vunpack.c.l.b16 %v2616
    %v2967 = vunpack.c.h.b16 %v2616
    %v2968 = vunpack.c.l.b16 %v2617
    %v2969 = vunpack.c.h.b16 %v2617
    %v2970 = vunpack.c.l.b16 %v2618
    %v2971 = vunpack.c.h.b16 %v2618
    %v2972 = vunpack.c.l.b16 %v2619
    %v2973 = vunpack.c.h.b16 %v2619
    %v2974 = vunpack.c.l.b16 %v2620
    %v2975 = vunpack.c.h.b16 %v2620
    %v2976 = vunpack.c.l.b16 %v2621
    %v2977 = vunpack.c.h.b16 %v2621
    %v2978 = vunpack.c.l.b16 %v2622
    %v2979 = vunpack.c.h.b16 %v2622
    %v2980 = vunpack.c.l.b16 %v2623
    %v2981 = vunpack.c.h.b16 %v2623
    %v2982 = vunpack.c.l.b16 %v2624
    %v2983 = vunpack.c.h.b16 %v2624
    %v2984 = vunpack.c.l.b16 %v2625
    %v2985 = vunpack.c.h.b16 %v2625
    %v2986 = vunpack.c.l.b16 %v2626
    %v2987 = vunpack.c.h.b16 %v2626
    %v2988 = vunpack.c.l.b16 %v2627
    %v2989 = vunpack.c.h.b16 %v2627
    %v2990 = vunpack.c.l.b16 %v2628
    %v2991 = vunpack.c.h.b16 %v2628
    %v2992 = vunpack.c.l.b16 %v2629
    %v2993 = vunpack.c.h.b16 %v2629
    %v2994 = vunpack.c.l.b16 %v2630
    %v2995 = vunpack.c.h.b16 %v2630
    %v2996 = vunpack.c.l.b16 %v2631
    %v2997 = vunpack.c.h.b16 %v2631
    %v2998 = vunpack.c.l.b16 %v2632
    %v2999 = vunpack.c.h.b16 %v2632
    %v3000 = vunpack.c.l.b16 %v2633
    %v3001 = vunpack.c.h.b16 %v2633
    %v3002 = vunpack.c.l.b16 %v2634
    %v3003 = vunpack.c.h.b16 %v2634
    %v3004 = vunpack.c.l.b16 %v2635
    %v3005 = vunpack.c.h.b16 %v2635
    %v3006 = vunpack.c.l.b16 %v2636
    %v3007 = vunpack.c.h.b16 %v2636
    %v3008 = vunpack.c.l.b16 %v2637
    %v3009 = vunpack.c.h.b16 %v2637
    %v3010 = vunpack.c.l.b16 %v2638
    %v3011 = vunpack.c.h.b16 %v2638
    %v3012 = vunpack.c.l.b16 %v2639
    %v3013 = vunpack.c.h.b16 %v2639
    %v3014 = vunpack.c.l.b16 %v2640
    %v3015 = vunpack.c.h.b16 %v2640
    %v3016 = vunpack.c.l.b16 %v2641
    %v3017 = vunpack.c.h.b16 %v2641
    %v3018 = vunpack.c.l.b16 %v2642
    %v3019 = vunpack.c.h.b16 %v2642
    %v3020 = vunpack.c.l.b16 %v2643
    %v3021 = vunpack.c.h.b16 %v2643
    %v3022 = vunpack.c.l.b16 %v2644
    %v3023 = vunpack.c.h.b16 %v2644
    %v3024 = vunpack.c.l.b16 %v2645
    %v3025 = vunpack.c.h.b16 %v2645
    %v3026 = vunpack.c.l.b16 %v2646
    %v3027 = vunpack.c.h.b16 %v2646
    %v3028 = vunpack.c.l.b16 %v2647
    %v3029 = vunpack.c.h.b16 %v2647
    %v3030 = vunpack.c.l.b16 %v2648
    %v3031 = vunpack.c.h.b16 %v2648
    %v3032 = vunpack.c.l.b16 %v2649
    %v3033 = vunpack.c.h.b16 %v2649
    %v3034 = vpack.c.b16 %v2782, %v2778
    %v3035 = vpack.c.b16 %v2783, %v2779
    %v3036 = vpack.c.b16 %v2784, %v2780
    %v3037 = vpack.c.b16 %v2785, %v2781
    %v3038 = vpack.c.b16 %v2790, %v2786
    %v3039 = vpack.c.b16 %v2791, %v2787
    %v3040 = vpack.c.b16 %v2792, %v2788
    %v3041 = vpack.c.b16 %v2793, %v2789
    %v3042 = vpack.c.b16 %v2798, %v2794
    %v3043 = vpack.c.b16 %v2799, %v2795
    %v3044 = vpack.c.b16 %v2800, %v2796
    %v3045 = vpack.c.b16 %v2801, %v2797
    %v3046 = vpack.c.b16 %v2806, %v2802
    %v3047 = vpack.c.b16 %v2807, %v2803
    %v3048 = vpack.c.b16 %v2808, %v2804
    %v3049 = vpack.c.b16 %v2809, %v2805
    %v3050 = vpack.c.b16 %v2814, %v2810
    %v3051 = vpack.c.b16 %v2815, %v2811
    %v3052 = vpack.c.b16 %v2816, %v2812
    %v3053 = vpack.c.b16 %v2817, %v2813
    %v3054 = vpack.c.b16 %v2822, %v2818
    %v3055 = vpack.c.b16 %v2823, %v2819
    %v3056 = vpack.c.b16 %v2824, %v2820
    %v3057 = vpack.c.b16 %v2825, %v2821
    %v3058 = vpack.c.b16 %v2830, %v2826
    %v3059 = vpack.c.b16 %v2831, %v2827
    %v3060 = vpack.c.b16 %v2832, %v2828
    %v3061 = vpack.c.b16 %v2833, %v2829
    %v3062 = vpack.c.b16 %v2838, %v2834
    %v3063 = vpack.c.b16 %v2839, %v2835
    %v3064 = vpack.c.b16 %v2840, %v2836
    %v3065 = vpack.c.b16 %v2841, %v2837
    %v3066 = vpack.c.b16 %v2846, %v2842
    %v3067 = vpack.c.b16 %v2847, %v2843
    %v3068 = vpack.c.b16 %v2848, %v2844
    %v3069 = vpack.c.b16 %v2849, %v2845
    %v3070 = vpack.c.b16 %v2854, %v2850
    %v3071 = vpack.c.b16 %v2855, %v2851
    %v3072 = vpack.c.b16 %v2856, %v2852
    %v3073 = vpack.c.b16 %v2857, %v2853
    %v3074 = vpack.c.b16 %v2862, %v2858
    %v3075 = vpack.c.b16 %v2863, %v2859
    %v3076 = vpack.c.b16 %v2864, %v2860
    %v3077 = vpack.c.b16 %v2865, %v2861
    %v3078 = vpack.c.b16 %v2870, %v2866
    %v3079 = vpack.c.b16 %v2871, %v2867
    %v3080 = vpack.c.b16 %v2872, %v2868
    %v3081 = vpack.c.b16 %v2873, %v2869
    %v3082 = vpack.c.b16 %v2878, %v2874
    %v3083 = vpack.c.b16 %v2879, %v2875
    %v3084 = vpack.c.b16 %v2880, %v2876
    %v3085 = vpack.c.b16 %v2881, %v2877
    %v3086 = vpack.c.b16 %v2886, %v2882
    %v3087 = vpack.c.b16 %v2887, %v2883
    %v3088 = vpack.c.b16 %v2888, %v2884
    %v3089 = vpack.c.b16 %v2889, %v2885
    %v3090 = vpack.c.b16 %v2894, %v2890
    %v3091 = vpack.c.b16 %v2895, %v2891
    %v3092 = vpack.c.b16 %v2896, %v2892
    %v3093 = vpack.c.b16 %v2897, %v2893
    %v3094 = vpack.c.b16 %v2902, %v2898
    %v3095 = vpack.c.b16 %v2903, %v2899
    %v3096 = vpack.c.b16 %v2904, %v2900
    %v3097 = vpack.c.b16 %v2905, %v2901
    %v3098 = vpack.c.b16 %v2910, %v2906
    %v3099 = vpack.c.b16 %v2911, %v2907
    %v3100 = vpack.c.b16 %v2912, %v2908
    %v3101 = vpack.c.b16 %v2913, %v2909
    %v3102 = vpack.c.b16 %v2918, %v2914
    %v3103 = vpack.c.b16 %v2919, %v2915
    %v3104 = vpack.c.b16 %v2920, %v2916
    %v3105 = vpack.c.b16 %v2921, %v2917
    %v3106 = vpack.c.b16 %v2926, %v2922
    %v3107 = vpack.c.b16 %v2927, %v2923
    %v3108 = vpack.c.b16 %v2928, %v2924
    %v3109 = vpack.c.b16 %v2929, %v2925
    %v3110 = vpack.c.b16 %v2934, %v2930
    %v3111 = vpack.c.b16 %v2935, %v2931
    %v3112 = vpack.c.b16 %v2936, %v2932
    %v3113 = vpack.c.b16 %v2937, %v2933
    %v3114 = vpack.c.b16 %v2942, %v2938
    %v3115 = vpack.c.b16 %v2943, %v2939
    %v3116 = vpack.c.b16 %v2944, %v2940
    %v3117 = vpack.c.b16 %v2945, %v2941
    %v3118 = vpack.c.b16 %v2950, %v2946
    %v3119 = vpack.c.b16 %v2951, %v2947
    %v3120 = vpack.c.b16 %v2952, %v2948
    %v3121 = vpack.c.b16 %v2953, %v2949
    %v3122 = vpack.c.b16 %v2958, %v2954
    %v3123 = vpack.c.b16 %v2959, %v2955
    %v3124 = vpack.c.b16 %v2960, %v2956
    %v3125 = vpack.c.b16 %v2961, %v2957
    %v3126 = vpack.c.b16 %v2966, %v2962
    %v3127 = vpack.c.b16 %v2967, %v2963
    %v3128 = vpack.c.b16 %v2968, %v2964
    %v3129 = vpack.c.b16 %v2969, %v2965
    %v3130 = vpack.c.b16 %v2974, %v2970
    %v3131 = vpack.c.b16 %v2975, %v2971
    %v3132 = vpack.c.b16 %v2976, %v2972
    %v3133 = vpack.c.b16 %v2977, %v2973
    %v3134 = vpack.c.b16 %v2982, %v2978
    %v3135 = vpack.c.b16 %v2983, %v2979
    %v3136 = vpack.c.b16 %v2984, %v2980
    %v3137 = vpack.c.b16 %v2985, %v2981
    %v3138 = vpack.c.b16 %v2990, %v2986
    %v3139 = vpack.c.b16 %v2991, %v2987
    %v3140 = vpack.c.b16 %v2992, %v2988
    %v3141 = vpack.c.b16 %v2993, %v2989
    %v3142 = vpack.c.b16 %v2998, %v2994
    %v3143 = vpack.c.b16 %v2999, %v2995
    %v3144 = vpack.c.b16 %v3000, %v2996
    %v3145 = vpack.c.b16 %v3001, %v2997
    %v3146 = vpack.c.b16 %v3006, %v3002
    %v3147 = vpack.c.b16 %v3007, %v3003
    %v3148 = vpack.c.b16 %v3008, %v3004
    %v3149 = vpack.c.b16 %v3009, %v3005
    %v3150 = vpack.c.b16 %v3014, %v3010
    %v3151 = vpack.c.b16 %v3015, %v3011
    %v3152 = vpack.c.b16 %v3016, %v3012
    %v3153 = vpack.c.b16 %v3017, %v3013
    %v3154 = vpack.c.b16 %v3022, %v3018
    %v3155 = vpack.c.b16 %v3023, %v3019
    %v3156 = vpack.c.b16 %v3024, %v3020
    %v3157 = vpack.c.b16 %v3025, %v3021
    %v3158 = vpack.c.b16 %v3030, %v3026
    %v3159 = vpack.c.b16 %v3031, %v3027
    %v3160 = vpack.c.b16 %v3032, %v3028
    %v3161 = vpack.c.b16 %v3033, %v3029
    %3290 = vmatprep.subr.bf16.mxu0 %v3063
    %3291 = vmatpush1.bf16.msra.mxu0 %v3062
    %3292 = vmatprep.subr.bf16.mxu0 %v3059
    %3293 = vmatpush1.bf16.msra.mxu0 %v3058
    %3294 = vmatprep.subr.bf16.mxu0 %v3055
    %3295 = vmatpush1.bf16.msra.mxu0 %v3054
    %3296 = vmatprep.subr.bf16.mxu0 %v3051
    %3297 = vmatpush1.bf16.msra.mxu0 %v3050
    %3298 = vmatprep.subr.bf16.mxu0 %v3047
    %3299 = vmatpush1.bf16.msra.mxu0 %v3046
    %3300 = vmatprep.subr.bf16.mxu0 %v3043
    %3301 = vmatpush1.bf16.msra.mxu0 %v3042
    %3302 = vmatprep.subr.bf16.mxu0 %v3039
    %3303 = vmatpush1.bf16.msra.mxu0 %v3038
    %3304 = vmatprep.subr.bf16.mxu0 %v3035
    %3305 = vmatpush1.bf16.msra.mxu0 %v3034
    %3306 = vmatprep.subr.bf16.mxu0 %v3095
    %3307 = vmatpush2.bf16.msra.mxu0 %v3094
    %3308 = vmatprep.subr.bf16.mxu0 %v3091
    %3309 = vmatpush2.bf16.msra.mxu0 %v3090
    %3310 = vmatprep.subr.bf16.mxu0 %v3087
    %3311 = vmatpush2.bf16.msra.mxu0 %v3086
    %3312 = vmatprep.subr.bf16.mxu0 %v3083
    %3313 = vmatpush2.bf16.msra.mxu0 %v3082
    %3314 = vmatprep.subr.bf16.mxu0 %v3079
    %3315 = vmatpush2.bf16.msra.mxu0 %v3078
    %3316 = vmatprep.subr.bf16.mxu0 %v3075
    %3317 = vmatpush2.bf16.msra.mxu0 %v3074
    %3318 = vmatprep.subr.bf16.mxu0 %v3071
    %3319 = vmatpush2.bf16.msra.mxu0 %v3070
    %3320 = vmatprep.subr.bf16.mxu0 %v3067
    %3321 = vmatpush2.bf16.msra.mxu0 %v3066
    %3322 = vmatprep.mubr.bf16.mxu0 %v2519
    %3323 = vmatmul.mubr.bf16.gmra.mxu0 %v2518
    %v3324 = vpop.f32.mrf.mxu0
    %v3325 = vadd.f32 0.0, %v3324
    %v3326 = vpop.f32.mrf.mxu0
    %v3327 = vadd.f32 0.0, %v3326
    %v3328 = vpop.f32.mrf.mxu0
    %v3329 = vadd.f32 0.0, %v3328
    %v3330 = vpop.f32.mrf.mxu0
    %v3331 = vadd.f32 0.0, %v3330
    %3332 = vdwg.mxu0
    %3333 = vmatprep.subr.bf16.mxu0 %v3127
    %3334 = vmatpush1.bf16.msra.mxu0 %v3126
    %3335 = vmatprep.subr.bf16.mxu0 %v3123
    %3336 = vmatpush1.bf16.msra.mxu0 %v3122
    %3337 = vmatprep.subr.bf16.mxu0 %v3119
    %3338 = vmatpush1.bf16.msra.mxu0 %v3118
    %3339 = vmatprep.subr.bf16.mxu0 %v3115
    %3340 = vmatpush1.bf16.msra.mxu0 %v3114
    %3341 = vmatprep.subr.bf16.mxu0 %v3111
    %3342 = vmatpush1.bf16.msra.mxu0 %v3110
    %3343 = vmatprep.subr.bf16.mxu0 %v3107
    %3344 = vmatpush1.bf16.msra.mxu0 %v3106
    %3345 = vmatprep.subr.bf16.mxu0 %v3103
    %3346 = vmatpush1.bf16.msra.mxu0 %v3102
    %3347 = vmatprep.subr.bf16.mxu0 %v3099
    %3348 = vmatpush1.bf16.msra.mxu0 %v3098
    %3349 = vmatprep.subr.bf16.mxu0 %v3159
    %3350 = vmatpush2.bf16.msra.mxu0 %v3158
    %3351 = vmatprep.subr.bf16.mxu0 %v3155
    %3352 = vmatpush2.bf16.msra.mxu0 %v3154
    %3353 = vmatprep.subr.bf16.mxu0 %v3151
    %3354 = vmatpush2.bf16.msra.mxu0 %v3150
    %3355 = vmatprep.subr.bf16.mxu0 %v3147
    %3356 = vmatpush2.bf16.msra.mxu0 %v3146
    %3357 = vmatprep.subr.bf16.mxu0 %v3143
    %3358 = vmatpush2.bf16.msra.mxu0 %v3142
    %3359 = vmatprep.subr.bf16.mxu0 %v3139
    %3360 = vmatpush2.bf16.msra.mxu0 %v3138
    %3361 = vmatprep.subr.bf16.mxu0 %v3135
    %3362 = vmatpush2.bf16.msra.mxu0 %v3134
    %3363 = vmatprep.subr.bf16.mxu0 %v3131
    %3364 = vmatpush2.bf16.msra.mxu0 %v3130
    %3365 = vmatprep.mubr.bf16.mxu0 %v2521
    %3366 = vmatmul.mubr.bf16.gmra.mxu0 %v2520
    %v3367 = vpop.f32.mrf.mxu0
    %v3368 = vadd.f32 %v3325, %v3367
    %v3369 = vpop.f32.mrf.mxu0
    %v3370 = vadd.f32 %v3327, %v3369
    %v3371 = vpop.f32.mrf.mxu0
    %v3372 = vadd.f32 %v3329, %v3371
    %v3373 = vpop.f32.mrf.mxu0
    %v3374 = vadd.f32 %v3331, %v3373
    %3375 = vdwg.mxu0
    %3376 = vmatprep.subr.bf16.mxu0 %v3065
    %3377 = vmatpush1.bf16.msra.mxu0 %v3064
    %3378 = vmatprep.subr.bf16.mxu0 %v3061
    %3379 = vmatpush1.bf16.msra.mxu0 %v3060
    %3380 = vmatprep.subr.bf16.mxu0 %v3057
    %3381 = vmatpush1.bf16.msra.mxu0 %v3056
    %3382 = vmatprep.subr.bf16.mxu0 %v3053
    %3383 = vmatpush1.bf16.msra.mxu0 %v3052
    %3384 = vmatprep.subr.bf16.mxu0 %v3049
    %3385 = vmatpush1.bf16.msra.mxu0 %v3048
    %3386 = vmatprep.subr.bf16.mxu0 %v3045
    %3387 = vmatpush1.bf16.msra.mxu0 %v3044
    %3388 = vmatprep.subr.bf16.mxu0 %v3041
    %3389 = vmatpush1.bf16.msra.mxu0 %v3040
    %3390 = vmatprep.subr.bf16.mxu0 %v3037
    %3391 = vmatpush1.bf16.msra.mxu0 %v3036
    %3392 = vmatprep.subr.bf16.mxu0 %v3097
    %3393 = vmatpush2.bf16.msra.mxu0 %v3096
    %3394 = vmatprep.subr.bf16.mxu0 %v3093
    %3395 = vmatpush2.bf16.msra.mxu0 %v3092
    %3396 = vmatprep.subr.bf16.mxu0 %v3089
    %3397 = vmatpush2.bf16.msra.mxu0 %v3088
    %3398 = vmatprep.subr.bf16.mxu0 %v3085
    %3399 = vmatpush2.bf16.msra.mxu0 %v3084
    %3400 = vmatprep.subr.bf16.mxu0 %v3081
    %3401 = vmatpush2.bf16.msra.mxu0 %v3080
    %3402 = vmatprep.subr.bf16.mxu0 %v3077
    %3403 = vmatpush2.bf16.msra.mxu0 %v3076
    %3404 = vmatprep.subr.bf16.mxu0 %v3073
    %3405 = vmatpush2.bf16.msra.mxu0 %v3072
    %3406 = vmatprep.subr.bf16.mxu0 %v3069
    %3407 = vmatpush2.bf16.msra.mxu0 %v3068
    %3408 = vmatprep.mubr.bf16.mxu0 %v2519
    %3409 = vmatmul.mubr.bf16.gmra.mxu0 %v2518
    %v3410 = vpop.f32.mrf.mxu0
    %v3411 = vadd.f32 0.0, %v3410
    %v3412 = vpop.f32.mrf.mxu0
    %v3413 = vadd.f32 0.0, %v3412
    %v3414 = vpop.f32.mrf.mxu0
    %v3415 = vadd.f32 0.0, %v3414
    %v3416 = vpop.f32.mrf.mxu0
    %v3417 = vadd.f32 0.0, %v3416
    %3418 = vdwg.mxu0
    %3419 = vmatprep.subr.bf16.mxu0 %v3129
    %3420 = vmatpush1.bf16.msra.mxu0 %v3128
    %3421 = vmatprep.subr.bf16.mxu0 %v3125
    %3422 = vmatpush1.bf16.msra.mxu0 %v3124
    %3423 = vmatprep.subr.bf16.mxu0 %v3121
    %3424 = vmatpush1.bf16.msra.mxu0 %v3120
    %3425 = vmatprep.subr.bf16.mxu0 %v3117
    %3426 = vmatpush1.bf16.msra.mxu0 %v3116
    %3427 = vmatprep.subr.bf16.mxu0 %v3113
    %3428 = vmatpush1.bf16.msra.mxu0 %v3112
    %3429 = vmatprep.subr.bf16.mxu0 %v3109
    %3430 = vmatpush1.bf16.msra.mxu0 %v3108
    %3431 = vmatprep.subr.bf16.mxu0 %v3105
    %3432 = vmatpush1.bf16.msra.mxu0 %v3104
    %3433 = vmatprep.subr.bf16.mxu0 %v3101
    %3434 = vmatpush1.bf16.msra.mxu0 %v3100
    %3435 = vmatprep.subr.bf16.mxu0 %v3161
    %3436 = vmatpush2.bf16.msra.mxu0 %v3160
    %3437 = vmatprep.subr.bf16.mxu0 %v3157
    %3438 = vmatpush2.bf16.msra.mxu0 %v3156
    %3439 = vmatprep.subr.bf16.mxu0 %v3153
    %3440 = vmatpush2.bf16.msra.mxu0 %v3152
    %3441 = vmatprep.subr.bf16.mxu0 %v3149
    %3442 = vmatpush2.bf16.msra.mxu0 %v3148
    %3443 = vmatprep.subr.bf16.mxu0 %v3145
    %3444 = vmatpush2.bf16.msra.mxu0 %v3144
    %3445 = vmatprep.subr.bf16.mxu0 %v3141
    %3446 = vmatpush2.bf16.msra.mxu0 %v3140
    %3447 = vmatprep.subr.bf16.mxu0 %v3137
    %3448 = vmatpush2.bf16.msra.mxu0 %v3136
    %3449 = vmatprep.subr.bf16.mxu0 %v3133
    %3450 = vmatpush2.bf16.msra.mxu0 %v3132
    %3451 = vmatprep.mubr.bf16.mxu0 %v2521
    %3452 = vmatmul.mubr.bf16.gmra.mxu0 %v2520
    %v3453 = vpop.f32.mrf.mxu0
    %v3454 = vadd.f32 %v3411, %v3453
    %v3455 = vpop.f32.mrf.mxu0
    %v3456 = vadd.f32 %v3413, %v3455
    %v3457 = vpop.f32.mrf.mxu0
    %v3458 = vadd.f32 %v3415, %v3457
    %v3459 = vpop.f32.mrf.mxu0
    %v3460 = vadd.f32 %v3417, %v3459
    %3461 = vdwg.mxu0
    %v3590 = vunpack.c.l.b16 %v2366
    %v3591 = vunpack.c.h.b16 %v2366
    %v3592 = vunpack.c.l.b16 %v2367
    %v3593 = vunpack.c.h.b16 %v2367
    %v3594 = vunpack.c.l.b16 %v2368
    %v3595 = vunpack.c.h.b16 %v2368
    %v3596 = vunpack.c.l.b16 %v2369
    %v3597 = vunpack.c.h.b16 %v2369
    %v3598 = vunpack.c.l.b16 %v2370
    %v3599 = vunpack.c.h.b16 %v2370
    %v3600 = vunpack.c.l.b16 %v2371
    %v3601 = vunpack.c.h.b16 %v2371
    %v3602 = vunpack.c.l.b16 %v2372
    %v3603 = vunpack.c.h.b16 %v2372
    %v3604 = vunpack.c.l.b16 %v2373
    %v3605 = vunpack.c.h.b16 %v2373
    %v3606 = vunpack.c.l.b16 %v2374
    %v3607 = vunpack.c.h.b16 %v2374
    %v3608 = vunpack.c.l.b16 %v2375
    %v3609 = vunpack.c.h.b16 %v2375
    %v3610 = vunpack.c.l.b16 %v2376
    %v3611 = vunpack.c.h.b16 %v2376
    %v3612 = vunpack.c.l.b16 %v2377
    %v3613 = vunpack.c.h.b16 %v2377
    %v3614 = vunpack.c.l.b16 %v2378
    %v3615 = vunpack.c.h.b16 %v2378
    %v3616 = vunpack.c.l.b16 %v2379
    %v3617 = vunpack.c.h.b16 %v2379
    %v3618 = vunpack.c.l.b16 %v2380
    %v3619 = vunpack.c.h.b16 %v2380
    %v3620 = vunpack.c.l.b16 %v2381
    %v3621 = vunpack.c.h.b16 %v2381
    %v3622 = vunpack.c.l.b16 %v2382
    %v3623 = vunpack.c.h.b16 %v2382
    %v3624 = vunpack.c.l.b16 %v2383
    %v3625 = vunpack.c.h.b16 %v2383
    %v3626 = vunpack.c.l.b16 %v2384
    %v3627 = vunpack.c.h.b16 %v2384
    %v3628 = vunpack.c.l.b16 %v2385
    %v3629 = vunpack.c.h.b16 %v2385
    %v3630 = vunpack.c.l.b16 %v2386
    %v3631 = vunpack.c.h.b16 %v2386
    %v3632 = vunpack.c.l.b16 %v2387
    %v3633 = vunpack.c.h.b16 %v2387
    %v3634 = vunpack.c.l.b16 %v2388
    %v3635 = vunpack.c.h.b16 %v2388
    %v3636 = vunpack.c.l.b16 %v2389
    %v3637 = vunpack.c.h.b16 %v2389
    %v3638 = vunpack.c.l.b16 %v2390
    %v3639 = vunpack.c.h.b16 %v2390
    %v3640 = vunpack.c.l.b16 %v2391
    %v3641 = vunpack.c.h.b16 %v2391
    %v3642 = vunpack.c.l.b16 %v2392
    %v3643 = vunpack.c.h.b16 %v2392
    %v3644 = vunpack.c.l.b16 %v2393
    %v3645 = vunpack.c.h.b16 %v2393
    %v3646 = vunpack.c.l.b16 %v2394
    %v3647 = vunpack.c.h.b16 %v2394
    %v3648 = vunpack.c.l.b16 %v2395
    %v3649 = vunpack.c.h.b16 %v2395
    %v3650 = vunpack.c.l.b16 %v2396
    %v3651 = vunpack.c.h.b16 %v2396
    %v3652 = vunpack.c.l.b16 %v2397
    %v3653 = vunpack.c.h.b16 %v2397
    %v3654 = vunpack.c.l.b16 %v2398
    %v3655 = vunpack.c.h.b16 %v2398
    %v3656 = vunpack.c.l.b16 %v2399
    %v3657 = vunpack.c.h.b16 %v2399
    %v3658 = vunpack.c.l.b16 %v2400
    %v3659 = vunpack.c.h.b16 %v2400
    %v3660 = vunpack.c.l.b16 %v2401
    %v3661 = vunpack.c.h.b16 %v2401
    %v3662 = vunpack.c.l.b16 %v2402
    %v3663 = vunpack.c.h.b16 %v2402
    %v3664 = vunpack.c.l.b16 %v2403
    %v3665 = vunpack.c.h.b16 %v2403
    %v3666 = vunpack.c.l.b16 %v2404
    %v3667 = vunpack.c.h.b16 %v2404
    %v3668 = vunpack.c.l.b16 %v2405
    %v3669 = vunpack.c.h.b16 %v2405
    %v3670 = vunpack.c.l.b16 %v2406
    %v3671 = vunpack.c.h.b16 %v2406
    %v3672 = vunpack.c.l.b16 %v2407
    %v3673 = vunpack.c.h.b16 %v2407
    %v3674 = vunpack.c.l.b16 %v2408
    %v3675 = vunpack.c.h.b16 %v2408
    %v3676 = vunpack.c.l.b16 %v2409
    %v3677 = vunpack.c.h.b16 %v2409
    %v3678 = vunpack.c.l.b16 %v2410
    %v3679 = vunpack.c.h.b16 %v2410
    %v3680 = vunpack.c.l.b16 %v2411
    %v3681 = vunpack.c.h.b16 %v2411
    %v3682 = vunpack.c.l.b16 %v2412
    %v3683 = vunpack.c.h.b16 %v2412
    %v3684 = vunpack.c.l.b16 %v2413
    %v3685 = vunpack.c.h.b16 %v2413
    %v3686 = vunpack.c.l.b16 %v2414
    %v3687 = vunpack.c.h.b16 %v2414
    %v3688 = vunpack.c.l.b16 %v2415
    %v3689 = vunpack.c.h.b16 %v2415
    %v3690 = vunpack.c.l.b16 %v2416
    %v3691 = vunpack.c.h.b16 %v2416
    %v3692 = vunpack.c.l.b16 %v2417
    %v3693 = vunpack.c.h.b16 %v2417
    %v3694 = vunpack.c.l.b16 %v2418
    %v3695 = vunpack.c.h.b16 %v2418
    %v3696 = vunpack.c.l.b16 %v2419
    %v3697 = vunpack.c.h.b16 %v2419
    %v3698 = vunpack.c.l.b16 %v2420
    %v3699 = vunpack.c.h.b16 %v2420
    %v3700 = vunpack.c.l.b16 %v2421
    %v3701 = vunpack.c.h.b16 %v2421
    %v3702 = vunpack.c.l.b16 %v2422
    %v3703 = vunpack.c.h.b16 %v2422
    %v3704 = vunpack.c.l.b16 %v2423
    %v3705 = vunpack.c.h.b16 %v2423
    %v3706 = vunpack.c.l.b16 %v2424
    %v3707 = vunpack.c.h.b16 %v2424
    %v3708 = vunpack.c.l.b16 %v2425
    %v3709 = vunpack.c.h.b16 %v2425
    %v3710 = vunpack.c.l.b16 %v2426
    %v3711 = vunpack.c.h.b16 %v2426
    %v3712 = vunpack.c.l.b16 %v2427
    %v3713 = vunpack.c.h.b16 %v2427
    %v3714 = vunpack.c.l.b16 %v2428
    %v3715 = vunpack.c.h.b16 %v2428
    %v3716 = vunpack.c.l.b16 %v2429
    %v3717 = vunpack.c.h.b16 %v2429
    %v3718 = vunpack.c.l.b16 %v2430
    %v3719 = vunpack.c.h.b16 %v2430
    %v3720 = vunpack.c.l.b16 %v2431
    %v3721 = vunpack.c.h.b16 %v2431
    %v3722 = vunpack.c.l.b16 %v2432
    %v3723 = vunpack.c.h.b16 %v2432
    %v3724 = vunpack.c.l.b16 %v2433
    %v3725 = vunpack.c.h.b16 %v2433
    %v3726 = vunpack.c.l.b16 %v2434
    %v3727 = vunpack.c.h.b16 %v2434
    %v3728 = vunpack.c.l.b16 %v2435
    %v3729 = vunpack.c.h.b16 %v2435
    %v3730 = vunpack.c.l.b16 %v2436
    %v3731 = vunpack.c.h.b16 %v2436
    %v3732 = vunpack.c.l.b16 %v2437
    %v3733 = vunpack.c.h.b16 %v2437
    %v3734 = vunpack.c.l.b16 %v2438
    %v3735 = vunpack.c.h.b16 %v2438
    %v3736 = vunpack.c.l.b16 %v2439
    %v3737 = vunpack.c.h.b16 %v2439
    %v3738 = vunpack.c.l.b16 %v2440
    %v3739 = vunpack.c.h.b16 %v2440
    %v3740 = vunpack.c.l.b16 %v2441
    %v3741 = vunpack.c.h.b16 %v2441
    %v3742 = vunpack.c.l.b16 %v2442
    %v3743 = vunpack.c.h.b16 %v2442
    %v3744 = vunpack.c.l.b16 %v2443
    %v3745 = vunpack.c.h.b16 %v2443
    %v3746 = vunpack.c.l.b16 %v2444
    %v3747 = vunpack.c.h.b16 %v2444
    %v3748 = vunpack.c.l.b16 %v2445
    %v3749 = vunpack.c.h.b16 %v2445
    %v3750 = vunpack.c.l.b16 %v2446
    %v3751 = vunpack.c.h.b16 %v2446
    %v3752 = vunpack.c.l.b16 %v2447
    %v3753 = vunpack.c.h.b16 %v2447
    %v3754 = vunpack.c.l.b16 %v2448
    %v3755 = vunpack.c.h.b16 %v2448
    %v3756 = vunpack.c.l.b16 %v2449
    %v3757 = vunpack.c.h.b16 %v2449
    %v3758 = vunpack.c.l.b16 %v2450
    %v3759 = vunpack.c.h.b16 %v2450
    %v3760 = vunpack.c.l.b16 %v2451
    %v3761 = vunpack.c.h.b16 %v2451
    %v3762 = vunpack.c.l.b16 %v2452
    %v3763 = vunpack.c.h.b16 %v2452
    %v3764 = vunpack.c.l.b16 %v2453
    %v3765 = vunpack.c.h.b16 %v2453
    %v3766 = vunpack.c.l.b16 %v2454
    %v3767 = vunpack.c.h.b16 %v2454
    %v3768 = vunpack.c.l.b16 %v2455
    %v3769 = vunpack.c.h.b16 %v2455
    %v3770 = vunpack.c.l.b16 %v2456
    %v3771 = vunpack.c.h.b16 %v2456
    %v3772 = vunpack.c.l.b16 %v2457
    %v3773 = vunpack.c.h.b16 %v2457
    %v3774 = vunpack.c.l.b16 %v2458
    %v3775 = vunpack.c.h.b16 %v2458
    %v3776 = vunpack.c.l.b16 %v2459
    %v3777 = vunpack.c.h.b16 %v2459
    %v3778 = vunpack.c.l.b16 %v2460
    %v3779 = vunpack.c.h.b16 %v2460
    %v3780 = vunpack.c.l.b16 %v2461
    %v3781 = vunpack.c.h.b16 %v2461
    %v3782 = vunpack.c.l.b16 %v2462
    %v3783 = vunpack.c.h.b16 %v2462
    %v3784 = vunpack.c.l.b16 %v2463
    %v3785 = vunpack.c.h.b16 %v2463
    %v3786 = vunpack.c.l.b16 %v2464
    %v3787 = vunpack.c.h.b16 %v2464
    %v3788 = vunpack.c.l.b16 %v2465
    %v3789 = vunpack.c.h.b16 %v2465
    %v3790 = vunpack.c.l.b16 %v2466
    %v3791 = vunpack.c.h.b16 %v2466
    %v3792 = vunpack.c.l.b16 %v2467
    %v3793 = vunpack.c.h.b16 %v2467
    %v3794 = vunpack.c.l.b16 %v2468
    %v3795 = vunpack.c.h.b16 %v2468
    %v3796 = vunpack.c.l.b16 %v2469
    %v3797 = vunpack.c.h.b16 %v2469
    %v3798 = vunpack.c.l.b16 %v2470
    %v3799 = vunpack.c.h.b16 %v2470
    %v3800 = vunpack.c.l.b16 %v2471
    %v3801 = vunpack.c.h.b16 %v2471
    %v3802 = vunpack.c.l.b16 %v2472
    %v3803 = vunpack.c.h.b16 %v2472
    %v3804 = vunpack.c.l.b16 %v2473
    %v3805 = vunpack.c.h.b16 %v2473
    %v3806 = vunpack.c.l.b16 %v2474
    %v3807 = vunpack.c.h.b16 %v2474
    %v3808 = vunpack.c.l.b16 %v2475
    %v3809 = vunpack.c.h.b16 %v2475
    %v3810 = vunpack.c.l.b16 %v2476
    %v3811 = vunpack.c.h.b16 %v2476
    %v3812 = vunpack.c.l.b16 %v2477
    %v3813 = vunpack.c.h.b16 %v2477
    %v3814 = vunpack.c.l.b16 %v2478
    %v3815 = vunpack.c.h.b16 %v2478
    %v3816 = vunpack.c.l.b16 %v2479
    %v3817 = vunpack.c.h.b16 %v2479
    %v3818 = vunpack.c.l.b16 %v2480
    %v3819 = vunpack.c.h.b16 %v2480
    %v3820 = vunpack.c.l.b16 %v2481
    %v3821 = vunpack.c.h.b16 %v2481
    %v3822 = vunpack.c.l.b16 %v2482
    %v3823 = vunpack.c.h.b16 %v2482
    %v3824 = vunpack.c.l.b16 %v2483
    %v3825 = vunpack.c.h.b16 %v2483
    %v3826 = vunpack.c.l.b16 %v2484
    %v3827 = vunpack.c.h.b16 %v2484
    %v3828 = vunpack.c.l.b16 %v2485
    %v3829 = vunpack.c.h.b16 %v2485
    %v3830 = vunpack.c.l.b16 %v2486
    %v3831 = vunpack.c.h.b16 %v2486
    %v3832 = vunpack.c.l.b16 %v2487
    %v3833 = vunpack.c.h.b16 %v2487
    %v3834 = vunpack.c.l.b16 %v2488
    %v3835 = vunpack.c.h.b16 %v2488
    %v3836 = vunpack.c.l.b16 %v2489
    %v3837 = vunpack.c.h.b16 %v2489
    %v3838 = vunpack.c.l.b16 %v2490
    %v3839 = vunpack.c.h.b16 %v2490
    %v3840 = vunpack.c.l.b16 %v2491
    %v3841 = vunpack.c.h.b16 %v2491
    %v3842 = vunpack.c.l.b16 %v2492
    %v3843 = vunpack.c.h.b16 %v2492
    %v3844 = vunpack.c.l.b16 %v2493
    %v3845 = vunpack.c.h.b16 %v2493
    %v3846 = vpack.c.b16 %v3594, %v3590
    %v3847 = vpack.c.b16 %v3595, %v3591
    %v3848 = vpack.c.b16 %v3596, %v3592
    %v3849 = vpack.c.b16 %v3597, %v3593
    %v3850 = vpack.c.b16 %v3602, %v3598
    %v3851 = vpack.c.b16 %v3603, %v3599
    %v3852 = vpack.c.b16 %v3604, %v3600
    %v3853 = vpack.c.b16 %v3605, %v3601
    %v3854 = vpack.c.b16 %v3610, %v3606
    %v3855 = vpack.c.b16 %v3611, %v3607
    %v3856 = vpack.c.b16 %v3612, %v3608
    %v3857 = vpack.c.b16 %v3613, %v3609
    %v3858 = vpack.c.b16 %v3618, %v3614
    %v3859 = vpack.c.b16 %v3619, %v3615
    %v3860 = vpack.c.b16 %v3620, %v3616
    %v3861 = vpack.c.b16 %v3621, %v3617
    %v3862 = vpack.c.b16 %v3626, %v3622
    %v3863 = vpack.c.b16 %v3627, %v3623
    %v3864 = vpack.c.b16 %v3628, %v3624
    %v3865 = vpack.c.b16 %v3629, %v3625
    %v3866 = vpack.c.b16 %v3634, %v3630
    %v3867 = vpack.c.b16 %v3635, %v3631
    %v3868 = vpack.c.b16 %v3636, %v3632
    %v3869 = vpack.c.b16 %v3637, %v3633
    %v3870 = vpack.c.b16 %v3642, %v3638
    %v3871 = vpack.c.b16 %v3643, %v3639
    %v3872 = vpack.c.b16 %v3644, %v3640
    %v3873 = vpack.c.b16 %v3645, %v3641
    %v3874 = vpack.c.b16 %v3650, %v3646
    %v3875 = vpack.c.b16 %v3651, %v3647
    %v3876 = vpack.c.b16 %v3652, %v3648
    %v3877 = vpack.c.b16 %v3653, %v3649
    %v3878 = vpack.c.b16 %v3658, %v3654
    %v3879 = vpack.c.b16 %v3659, %v3655
    %v3880 = vpack.c.b16 %v3660, %v3656
    %v3881 = vpack.c.b16 %v3661, %v3657
    %v3882 = vpack.c.b16 %v3666, %v3662
    %v3883 = vpack.c.b16 %v3667, %v3663
    %v3884 = vpack.c.b16 %v3668, %v3664
    %v3885 = vpack.c.b16 %v3669, %v3665
    %v3886 = vpack.c.b16 %v3674, %v3670
    %v3887 = vpack.c.b16 %v3675, %v3671
    %v3888 = vpack.c.b16 %v3676, %v3672
    %v3889 = vpack.c.b16 %v3677, %v3673
    %v3890 = vpack.c.b16 %v3682, %v3678
    %v3891 = vpack.c.b16 %v3683, %v3679
    %v3892 = vpack.c.b16 %v3684, %v3680
    %v3893 = vpack.c.b16 %v3685, %v3681
    %v3894 = vpack.c.b16 %v3690, %v3686
    %v3895 = vpack.c.b16 %v3691, %v3687
    %v3896 = vpack.c.b16 %v3692, %v3688
    %v3897 = vpack.c.b16 %v3693, %v3689
    %v3898 = vpack.c.b16 %v3698, %v3694
    %v3899 = vpack.c.b16 %v3699, %v3695
    %v3900 = vpack.c.b16 %v3700, %v3696
    %v3901 = vpack.c.b16 %v3701, %v3697
    %v3902 = vpack.c.b16 %v3706, %v3702
    %v3903 = vpack.c.b16 %v3707, %v3703
    %v3904 = vpack.c.b16 %v3708, %v3704
    %v3905 = vpack.c.b16 %v3709, %v3705
    %v3906 = vpack.c.b16 %v3714, %v3710
    %v3907 = vpack.c.b16 %v3715, %v3711
    %v3908 = vpack.c.b16 %v3716, %v3712
    %v3909 = vpack.c.b16 %v3717, %v3713
    %v3910 = vpack.c.b16 %v3722, %v3718
    %v3911 = vpack.c.b16 %v3723, %v3719
    %v3912 = vpack.c.b16 %v3724, %v3720
    %v3913 = vpack.c.b16 %v3725, %v3721
    %v3914 = vpack.c.b16 %v3730, %v3726
    %v3915 = vpack.c.b16 %v3731, %v3727
    %v3916 = vpack.c.b16 %v3732, %v3728
    %v3917 = vpack.c.b16 %v3733, %v3729
    %v3918 = vpack.c.b16 %v3738, %v3734
    %v3919 = vpack.c.b16 %v3739, %v3735
    %v3920 = vpack.c.b16 %v3740, %v3736
    %v3921 = vpack.c.b16 %v3741, %v3737
    %v3922 = vpack.c.b16 %v3746, %v3742
    %v3923 = vpack.c.b16 %v3747, %v3743
    %v3924 = vpack.c.b16 %v3748, %v3744
    %v3925 = vpack.c.b16 %v3749, %v3745
    %v3926 = vpack.c.b16 %v3754, %v3750
    %v3927 = vpack.c.b16 %v3755, %v3751
    %v3928 = vpack.c.b16 %v3756, %v3752
    %v3929 = vpack.c.b16 %v3757, %v3753
    %v3930 = vpack.c.b16 %v3762, %v3758
    %v3931 = vpack.c.b16 %v3763, %v3759
    %v3932 = vpack.c.b16 %v3764, %v3760
    %v3933 = vpack.c.b16 %v3765, %v3761
    %v3934 = vpack.c.b16 %v3770, %v3766
    %v3935 = vpack.c.b16 %v3771, %v3767
    %v3936 = vpack.c.b16 %v3772, %v3768
    %v3937 = vpack.c.b16 %v3773, %v3769
    %v3938 = vpack.c.b16 %v3778, %v3774
    %v3939 = vpack.c.b16 %v3779, %v3775
    %v3940 = vpack.c.b16 %v3780, %v3776
    %v3941 = vpack.c.b16 %v3781, %v3777
    %v3942 = vpack.c.b16 %v3786, %v3782
    %v3943 = vpack.c.b16 %v3787, %v3783
    %v3944 = vpack.c.b16 %v3788, %v3784
    %v3945 = vpack.c.b16 %v3789, %v3785
    %v3946 = vpack.c.b16 %v3794, %v3790
    %v3947 = vpack.c.b16 %v3795, %v3791
    %v3948 = vpack.c.b16 %v3796, %v3792
    %v3949 = vpack.c.b16 %v3797, %v3793
    %v3950 = vpack.c.b16 %v3802, %v3798
    %v3951 = vpack.c.b16 %v3803, %v3799
    %v3952 = vpack.c.b16 %v3804, %v3800
    %v3953 = vpack.c.b16 %v3805, %v3801
    %v3954 = vpack.c.b16 %v3810, %v3806
    %v3955 = vpack.c.b16 %v3811, %v3807
    %v3956 = vpack.c.b16 %v3812, %v3808
    %v3957 = vpack.c.b16 %v3813, %v3809
    %v3958 = vpack.c.b16 %v3818, %v3814
    %v3959 = vpack.c.b16 %v3819, %v3815
    %v3960 = vpack.c.b16 %v3820, %v3816
    %v3961 = vpack.c.b16 %v3821, %v3817
    %v3962 = vpack.c.b16 %v3826, %v3822
    %v3963 = vpack.c.b16 %v3827, %v3823
    %v3964 = vpack.c.b16 %v3828, %v3824
    %v3965 = vpack.c.b16 %v3829, %v3825
    %v3966 = vpack.c.b16 %v3834, %v3830
    %v3967 = vpack.c.b16 %v3835, %v3831
    %v3968 = vpack.c.b16 %v3836, %v3832
    %v3969 = vpack.c.b16 %v3837, %v3833
    %v3970 = vpack.c.b16 %v3842, %v3838
    %v3971 = vpack.c.b16 %v3843, %v3839
    %v3972 = vpack.c.b16 %v3844, %v3840
    %v3973 = vpack.c.b16 %v3845, %v3841
    %4102 = vmatprep.subr.bf16.mxu0 %v3875
    %4103 = vmatpush1.bf16.msra.mxu0 %v3874
    %4104 = vmatprep.subr.bf16.mxu0 %v3871
    %4105 = vmatpush1.bf16.msra.mxu0 %v3870
    %4106 = vmatprep.subr.bf16.mxu0 %v3867
    %4107 = vmatpush1.bf16.msra.mxu0 %v3866
    %4108 = vmatprep.subr.bf16.mxu0 %v3863
    %4109 = vmatpush1.bf16.msra.mxu0 %v3862
    %4110 = vmatprep.subr.bf16.mxu0 %v3859
    %4111 = vmatpush1.bf16.msra.mxu0 %v3858
    %4112 = vmatprep.subr.bf16.mxu0 %v3855
    %4113 = vmatpush1.bf16.msra.mxu0 %v3854
    %4114 = vmatprep.subr.bf16.mxu0 %v3851
    %4115 = vmatpush1.bf16.msra.mxu0 %v3850
    %4116 = vmatprep.subr.bf16.mxu0 %v3847
    %4117 = vmatpush1.bf16.msra.mxu0 %v3846
    %4118 = vmatprep.subr.bf16.mxu0 %v3907
    %4119 = vmatpush2.bf16.msra.mxu0 %v3906
    %4120 = vmatprep.subr.bf16.mxu0 %v3903
    %4121 = vmatpush2.bf16.msra.mxu0 %v3902
    %4122 = vmatprep.subr.bf16.mxu0 %v3899
    %4123 = vmatpush2.bf16.msra.mxu0 %v3898
    %4124 = vmatprep.subr.bf16.mxu0 %v3895
    %4125 = vmatpush2.bf16.msra.mxu0 %v3894
    %4126 = vmatprep.subr.bf16.mxu0 %v3891
    %4127 = vmatpush2.bf16.msra.mxu0 %v3890
    %4128 = vmatprep.subr.bf16.mxu0 %v3887
    %4129 = vmatpush2.bf16.msra.mxu0 %v3886
    %4130 = vmatprep.subr.bf16.mxu0 %v3883
    %4131 = vmatpush2.bf16.msra.mxu0 %v3882
    %4132 = vmatprep.subr.bf16.mxu0 %v3879
    %4133 = vmatpush2.bf16.msra.mxu0 %v3878
    %4134 = vmatprep.mubr.bf16.mxu0 %v2362
    %4135 = vmatmul.mubr.bf16.gmra.mxu0 %v2361
    %v4136 = vpop.f32.mrf.mxu0
    %v4137 = vadd.f32 %v3368, %v4136
    %v4138 = vpop.f32.mrf.mxu0
    %v4139 = vadd.f32 %v3370, %v4138
    %v4140 = vpop.f32.mrf.mxu0
    %v4141 = vadd.f32 %v3372, %v4140
    %v4142 = vpop.f32.mrf.mxu0
    %v4143 = vadd.f32 %v3374, %v4142
    %4144 = vdwg.mxu0
    %4145 = vmatprep.subr.bf16.mxu0 %v3939
    %4146 = vmatpush1.bf16.msra.mxu0 %v3938
    %4147 = vmatprep.subr.bf16.mxu0 %v3935
    %4148 = vmatpush1.bf16.msra.mxu0 %v3934
    %4149 = vmatprep.subr.bf16.mxu0 %v3931
    %4150 = vmatpush1.bf16.msra.mxu0 %v3930
    %4151 = vmatprep.subr.bf16.mxu0 %v3927
    %4152 = vmatpush1.bf16.msra.mxu0 %v3926
    %4153 = vmatprep.subr.bf16.mxu0 %v3923
    %4154 = vmatpush1.bf16.msra.mxu0 %v3922
    %4155 = vmatprep.subr.bf16.mxu0 %v3919
    %4156 = vmatpush1.bf16.msra.mxu0 %v3918
    %4157 = vmatprep.subr.bf16.mxu0 %v3915
    %4158 = vmatpush1.bf16.msra.mxu0 %v3914
    %4159 = vmatprep.subr.bf16.mxu0 %v3911
    %4160 = vmatpush1.bf16.msra.mxu0 %v3910
    %4161 = vmatprep.subr.bf16.mxu0 %v3971
    %4162 = vmatpush2.bf16.msra.mxu0 %v3970
    %4163 = vmatprep.subr.bf16.mxu0 %v3967
    %4164 = vmatpush2.bf16.msra.mxu0 %v3966
    %4165 = vmatprep.subr.bf16.mxu0 %v3963
    %4166 = vmatpush2.bf16.msra.mxu0 %v3962
    %4167 = vmatprep.subr.bf16.mxu0 %v3959
    %4168 = vmatpush2.bf16.msra.mxu0 %v3958
    %4169 = vmatprep.subr.bf16.mxu0 %v3955
    %4170 = vmatpush2.bf16.msra.mxu0 %v3954
    %4171 = vmatprep.subr.bf16.mxu0 %v3951
    %4172 = vmatpush2.bf16.msra.mxu0 %v3950
    %4173 = vmatprep.subr.bf16.mxu0 %v3947
    %4174 = vmatpush2.bf16.msra.mxu0 %v3946
    %4175 = vmatprep.subr.bf16.mxu0 %v3943
    %4176 = vmatpush2.bf16.msra.mxu0 %v3942
    %4177 = vmatprep.mubr.bf16.mxu0 %v2364
    %4178 = vmatmul.mubr.bf16.gmra.mxu0 %v2363
    %v4179 = vpop.f32.mrf.mxu0
    %v4180 = vadd.f32 %v4137, %v4179
    %v4181 = vpop.f32.mrf.mxu0
    %v4182 = vadd.f32 %v4139, %v4181
    %v4183 = vpop.f32.mrf.mxu0
    %v4184 = vadd.f32 %v4141, %v4183
    %v4185 = vpop.f32.mrf.mxu0
    %v4186 = vadd.f32 %v4143, %v4185
    %4187 = vdwg.mxu0
    %4188 = vmatprep.subr.bf16.mxu0 %v3877
    %4189 = vmatpush1.bf16.msra.mxu0 %v3876
    %4190 = vmatprep.subr.bf16.mxu0 %v3873
    %4191 = vmatpush1.bf16.msra.mxu0 %v3872
    %4192 = vmatprep.subr.bf16.mxu0 %v3869
    %4193 = vmatpush1.bf16.msra.mxu0 %v3868
    %4194 = vmatprep.subr.bf16.mxu0 %v3865
    %4195 = vmatpush1.bf16.msra.mxu0 %v3864
    %4196 = vmatprep.subr.bf16.mxu0 %v3861
    %4197 = vmatpush1.bf16.msra.mxu0 %v3860
    %4198 = vmatprep.subr.bf16.mxu0 %v3857
    %4199 = vmatpush1.bf16.msra.mxu0 %v3856
    %4200 = vmatprep.subr.bf16.mxu0 %v3853
    %4201 = vmatpush1.bf16.msra.mxu0 %v3852
    %4202 = vmatprep.subr.bf16.mxu0 %v3849
    %4203 = vmatpush1.bf16.msra.mxu0 %v3848
    %4204 = vmatprep.subr.bf16.mxu0 %v3909
    %4205 = vmatpush2.bf16.msra.mxu0 %v3908
    %4206 = vmatprep.subr.bf16.mxu0 %v3905
    %4207 = vmatpush2.bf16.msra.mxu0 %v3904
    %4208 = vmatprep.subr.bf16.mxu0 %v3901
    %4209 = vmatpush2.bf16.msra.mxu0 %v3900
    %4210 = vmatprep.subr.bf16.mxu0 %v3897
    %4211 = vmatpush2.bf16.msra.mxu0 %v3896
    %4212 = vmatprep.subr.bf16.mxu0 %v3893
    %4213 = vmatpush2.bf16.msra.mxu0 %v3892
    %4214 = vmatprep.subr.bf16.mxu0 %v3889
    %4215 = vmatpush2.bf16.msra.mxu0 %v3888
    %4216 = vmatprep.subr.bf16.mxu0 %v3885
    %4217 = vmatpush2.bf16.msra.mxu0 %v3884
    %4218 = vmatprep.subr.bf16.mxu0 %v3881
    %4219 = vmatpush2.bf16.msra.mxu0 %v3880
    %4220 = vmatprep.mubr.bf16.mxu0 %v2362
    %4221 = vmatmul.mubr.bf16.gmra.mxu0 %v2361
    %v4222 = vpop.f32.mrf.mxu0
    %v4223 = vadd.f32 %v3454, %v4222
    %v4224 = vpop.f32.mrf.mxu0
    %v4225 = vadd.f32 %v3456, %v4224
    %v4226 = vpop.f32.mrf.mxu0
    %v4227 = vadd.f32 %v3458, %v4226
    %v4228 = vpop.f32.mrf.mxu0
    %v4229 = vadd.f32 %v3460, %v4228
    %4230 = vdwg.mxu0
    %4231 = vmatprep.subr.bf16.mxu0 %v3941
    %4232 = vmatpush1.bf16.msra.mxu0 %v3940
    %4233 = vmatprep.subr.bf16.mxu0 %v3937
    %4234 = vmatpush1.bf16.msra.mxu0 %v3936
    %4235 = vmatprep.subr.bf16.mxu0 %v3933
    %4236 = vmatpush1.bf16.msra.mxu0 %v3932
    %4237 = vmatprep.subr.bf16.mxu0 %v3929
    %4238 = vmatpush1.bf16.msra.mxu0 %v3928
    %4239 = vmatprep.subr.bf16.mxu0 %v3925
    %4240 = vmatpush1.bf16.msra.mxu0 %v3924
    %4241 = vmatprep.subr.bf16.mxu0 %v3921
    %4242 = vmatpush1.bf16.msra.mxu0 %v3920
    %4243 = vmatprep.subr.bf16.mxu0 %v3917
    %4244 = vmatpush1.bf16.msra.mxu0 %v3916
    %4245 = vmatprep.subr.bf16.mxu0 %v3913
    %4246 = vmatpush1.bf16.msra.mxu0 %v3912
    %4247 = vmatprep.subr.bf16.mxu0 %v3973
    %4248 = vmatpush2.bf16.msra.mxu0 %v3972
    %4249 = vmatprep.subr.bf16.mxu0 %v3969
    %4250 = vmatpush2.bf16.msra.mxu0 %v3968
    %4251 = vmatprep.subr.bf16.mxu0 %v3965
    %4252 = vmatpush2.bf16.msra.mxu0 %v3964
    %4253 = vmatprep.subr.bf16.mxu0 %v3961
    %4254 = vmatpush2.bf16.msra.mxu0 %v3960
    %4255 = vmatprep.subr.bf16.mxu0 %v3957
    %4256 = vmatpush2.bf16.msra.mxu0 %v3956
    %4257 = vmatprep.subr.bf16.mxu0 %v3953
    %4258 = vmatpush2.bf16.msra.mxu0 %v3952
    %4259 = vmatprep.subr.bf16.mxu0 %v3949
    %4260 = vmatpush2.bf16.msra.mxu0 %v3948
    %4261 = vmatprep.subr.bf16.mxu0 %v3945
    %4262 = vmatpush2.bf16.msra.mxu0 %v3944
    %4263 = vmatprep.mubr.bf16.mxu0 %v2364
    %4264 = vmatmul.mubr.bf16.gmra.mxu0 %v2363
    %v4265 = vpop.f32.mrf.mxu0
    %v4266 = vadd.f32 %v4223, %v4265
    %v4267 = vpop.f32.mrf.mxu0
    %v4268 = vadd.f32 %v4225, %v4267
    %v4269 = vpop.f32.mrf.mxu0
    %v4270 = vadd.f32 %v4227, %v4269
    %v4271 = vpop.f32.mrf.mxu0
    %v4272 = vadd.f32 %v4229, %v4271
    %4273 = vdwg.mxu0
    %v4274 = vrot.slane %v2353, 1
    %v4275 = vrot.slane %v2354, 1
    %v4276 = vrot.slane %v2355, 1
    %v4277 = vrot.slane %v2356, 1
    %v4278 = vrot.slane %v2357, 1
    %v4279 = vrot.slane %v2358, 1
    %v4280 = vrot.slane %v2359, 1
    %v4281 = vrot.slane %v2360, 1
    %v4282 = vsel %vm1159, %v4274, %v4278
    %v4283 = vsel %vm1159, %v4275, %v4279
    %v4284 = vsel %vm1159, %v4276, %v4280
    %v4285 = vsel %vm1159, %v4277, %v4281
    %v4286 = vsel %vm1159, %v4278, %v4274
    %v4287 = vsel %vm1159, %v4279, %v4275
    %v4288 = vsel %vm1159, %v4280, %v4276
    %v4289 = vsel %vm1159, %v4281, %v4277
    %v4290 = vmul.f32 %v4282, %v1167
    %v4291 = vmul.f32 %v4283, %v1167
    %v4292 = vmul.f32 %v4284, %v1167
    %v4293 = vmul.f32 %v4285, %v1167
    %v4294 = vmul.f32 %v4286, %v1172
    %v4295 = vmul.f32 %v4287, %v1172
    %v4296 = vmul.f32 %v4288, %v1172
    %v4297 = vmul.f32 %v4289, %v1172
    %v4298 = vpack.c.bf16 %v4294, %v4290
    %v4299 = vpack.c.bf16 %v4295, %v4291
    %v4300 = vpack.c.bf16 %v4296, %v4292
    %v4301 = vpack.c.bf16 %v4297, %v4293
    %s4302 = scalar_lea.vmem [#allocation7], 2048
    %v4303 = vld [vmem:[%s4302] sm:$0xff]
    %v4304 = vld [vmem:[%s4302 + $0x8] sm:$0xff]
    %v4305 = vld [vmem:[%s4302 + $0x10] sm:$0xff]
    %v4306 = vld [vmem:[%s4302 + $0x18] sm:$0xff]
    %v4307 = vld [vmem:[%s4302 + $0x20] sm:$0xff]
    %v4308 = vld [vmem:[%s4302 + $0x28] sm:$0xff]
    %v4309 = vld [vmem:[%s4302 + $0x30] sm:$0xff]
    %v4310 = vld [vmem:[%s4302 + $0x38] sm:$0xff]
    %v4311 = vld [vmem:[%s4302 + $0x40] sm:$0xff]
    %v4312 = vld [vmem:[%s4302 + $0x48] sm:$0xff]
    %v4313 = vld [vmem:[%s4302 + $0x50] sm:$0xff]
    %v4314 = vld [vmem:[%s4302 + $0x58] sm:$0xff]
    %v4315 = vld [vmem:[%s4302 + $0x60] sm:$0xff]
    %v4316 = vld [vmem:[%s4302 + $0x68] sm:$0xff]
    %v4317 = vld [vmem:[%s4302 + $0x70] sm:$0xff]
    %v4318 = vld [vmem:[%s4302 + $0x78] sm:$0xff]
    %v4319 = vld [vmem:[%s4302 + $0x80] sm:$0xff]
    %v4320 = vld [vmem:[%s4302 + $0x88] sm:$0xff]
    %v4321 = vld [vmem:[%s4302 + $0x90] sm:$0xff]
    %v4322 = vld [vmem:[%s4302 + $0x98] sm:$0xff]
    %v4323 = vld [vmem:[%s4302 + $0xa0] sm:$0xff]
    %v4324 = vld [vmem:[%s4302 + $0xa8] sm:$0xff]
    %v4325 = vld [vmem:[%s4302 + $0xb0] sm:$0xff]
    %v4326 = vld [vmem:[%s4302 + $0xb8] sm:$0xff]
    %v4327 = vld [vmem:[%s4302 + $0xc0] sm:$0xff]
    %v4328 = vld [vmem:[%s4302 + $0xc8] sm:$0xff]
    %v4329 = vld [vmem:[%s4302 + $0xd0] sm:$0xff]
    %v4330 = vld [vmem:[%s4302 + $0xd8] sm:$0xff]
    %v4331 = vld [vmem:[%s4302 + $0xe0] sm:$0xff]
    %v4332 = vld [vmem:[%s4302 + $0xe8] sm:$0xff]
    %v4333 = vld [vmem:[%s4302 + $0xf0] sm:$0xff]
    %v4334 = vld [vmem:[%s4302 + $0xf8] sm:$0xff]
    %v4335 = vld [vmem:[%s4302 + $0x100] sm:$0xff]
    %v4336 = vld [vmem:[%s4302 + $0x108] sm:$0xff]
    %v4337 = vld [vmem:[%s4302 + $0x110] sm:$0xff]
    %v4338 = vld [vmem:[%s4302 + $0x118] sm:$0xff]
    %v4339 = vld [vmem:[%s4302 + $0x120] sm:$0xff]
    %v4340 = vld [vmem:[%s4302 + $0x128] sm:$0xff]
    %v4341 = vld [vmem:[%s4302 + $0x130] sm:$0xff]
    %v4342 = vld [vmem:[%s4302 + $0x138] sm:$0xff]
    %v4343 = vld [vmem:[%s4302 + $0x140] sm:$0xff]
    %v4344 = vld [vmem:[%s4302 + $0x148] sm:$0xff]
    %v4345 = vld [vmem:[%s4302 + $0x150] sm:$0xff]
    %v4346 = vld [vmem:[%s4302 + $0x158] sm:$0xff]
    %v4347 = vld [vmem:[%s4302 + $0x160] sm:$0xff]
    %v4348 = vld [vmem:[%s4302 + $0x168] sm:$0xff]
    %v4349 = vld [vmem:[%s4302 + $0x170] sm:$0xff]
    %v4350 = vld [vmem:[%s4302 + $0x178] sm:$0xff]
    %v4351 = vld [vmem:[%s4302 + $0x180] sm:$0xff]
    %v4352 = vld [vmem:[%s4302 + $0x188] sm:$0xff]
    %v4353 = vld [vmem:[%s4302 + $0x190] sm:$0xff]
    %v4354 = vld [vmem:[%s4302 + $0x198] sm:$0xff]
    %v4355 = vld [vmem:[%s4302 + $0x1a0] sm:$0xff]
    %v4356 = vld [vmem:[%s4302 + $0x1a8] sm:$0xff]
    %v4357 = vld [vmem:[%s4302 + $0x1b0] sm:$0xff]
    %v4358 = vld [vmem:[%s4302 + $0x1b8] sm:$0xff]
    %v4359 = vld [vmem:[%s4302 + $0x1c0] sm:$0xff]
    %v4360 = vld [vmem:[%s4302 + $0x1c8] sm:$0xff]
    %v4361 = vld [vmem:[%s4302 + $0x1d0] sm:$0xff]
    %v4362 = vld [vmem:[%s4302 + $0x1d8] sm:$0xff]
    %v4363 = vld [vmem:[%s4302 + $0x1e0] sm:$0xff]
    %v4364 = vld [vmem:[%s4302 + $0x1e8] sm:$0xff]
    %v4365 = vld [vmem:[%s4302 + $0x1f0] sm:$0xff]
    %v4366 = vld [vmem:[%s4302 + $0x1f8] sm:$0xff]
    %v4367 = vld [vmem:[%s4302 + $0x200] sm:$0xff]
    %v4368 = vld [vmem:[%s4302 + $0x208] sm:$0xff]
    %v4369 = vld [vmem:[%s4302 + $0x210] sm:$0xff]
    %v4370 = vld [vmem:[%s4302 + $0x218] sm:$0xff]
    %v4371 = vld [vmem:[%s4302 + $0x220] sm:$0xff]
    %v4372 = vld [vmem:[%s4302 + $0x228] sm:$0xff]
    %v4373 = vld [vmem:[%s4302 + $0x230] sm:$0xff]
    %v4374 = vld [vmem:[%s4302 + $0x238] sm:$0xff]
    %v4375 = vld [vmem:[%s4302 + $0x240] sm:$0xff]
    %v4376 = vld [vmem:[%s4302 + $0x248] sm:$0xff]
    %v4377 = vld [vmem:[%s4302 + $0x250] sm:$0xff]
    %v4378 = vld [vmem:[%s4302 + $0x258] sm:$0xff]
    %v4379 = vld [vmem:[%s4302 + $0x260] sm:$0xff]
    %v4380 = vld [vmem:[%s4302 + $0x268] sm:$0xff]
    %v4381 = vld [vmem:[%s4302 + $0x270] sm:$0xff]
    %v4382 = vld [vmem:[%s4302 + $0x278] sm:$0xff]
    %v4383 = vld [vmem:[%s4302 + $0x280] sm:$0xff]
    %v4384 = vld [vmem:[%s4302 + $0x288] sm:$0xff]
    %v4385 = vld [vmem:[%s4302 + $0x290] sm:$0xff]
    %v4386 = vld [vmem:[%s4302 + $0x298] sm:$0xff]
    %v4387 = vld [vmem:[%s4302 + $0x2a0] sm:$0xff]
    %v4388 = vld [vmem:[%s4302 + $0x2a8] sm:$0xff]
    %v4389 = vld [vmem:[%s4302 + $0x2b0] sm:$0xff]
    %v4390 = vld [vmem:[%s4302 + $0x2b8] sm:$0xff]
    %v4391 = vld [vmem:[%s4302 + $0x2c0] sm:$0xff]
    %v4392 = vld [vmem:[%s4302 + $0x2c8] sm:$0xff]
    %v4393 = vld [vmem:[%s4302 + $0x2d0] sm:$0xff]
    %v4394 = vld [vmem:[%s4302 + $0x2d8] sm:$0xff]
    %v4395 = vld [vmem:[%s4302 + $0x2e0] sm:$0xff]
    %v4396 = vld [vmem:[%s4302 + $0x2e8] sm:$0xff]
    %v4397 = vld [vmem:[%s4302 + $0x2f0] sm:$0xff]
    %v4398 = vld [vmem:[%s4302 + $0x2f8] sm:$0xff]
    %v4399 = vld [vmem:[%s4302 + $0x300] sm:$0xff]
    %v4400 = vld [vmem:[%s4302 + $0x308] sm:$0xff]
    %v4401 = vld [vmem:[%s4302 + $0x310] sm:$0xff]
    %v4402 = vld [vmem:[%s4302 + $0x318] sm:$0xff]
    %v4403 = vld [vmem:[%s4302 + $0x320] sm:$0xff]
    %v4404 = vld [vmem:[%s4302 + $0x328] sm:$0xff]
    %v4405 = vld [vmem:[%s4302 + $0x330] sm:$0xff]
    %v4406 = vld [vmem:[%s4302 + $0x338] sm:$0xff]
    %v4407 = vld [vmem:[%s4302 + $0x340] sm:$0xff]
    %v4408 = vld [vmem:[%s4302 + $0x348] sm:$0xff]
    %v4409 = vld [vmem:[%s4302 + $0x350] sm:$0xff]
    %v4410 = vld [vmem:[%s4302 + $0x358] sm:$0xff]
    %v4411 = vld [vmem:[%s4302 + $0x360] sm:$0xff]
    %v4412 = vld [vmem:[%s4302 + $0x368] sm:$0xff]
    %v4413 = vld [vmem:[%s4302 + $0x370] sm:$0xff]
    %v4414 = vld [vmem:[%s4302 + $0x378] sm:$0xff]
    %v4415 = vld [vmem:[%s4302 + $0x380] sm:$0xff]
    %v4416 = vld [vmem:[%s4302 + $0x388] sm:$0xff]
    %v4417 = vld [vmem:[%s4302 + $0x390] sm:$0xff]
    %v4418 = vld [vmem:[%s4302 + $0x398] sm:$0xff]
    %v4419 = vld [vmem:[%s4302 + $0x3a0] sm:$0xff]
    %v4420 = vld [vmem:[%s4302 + $0x3a8] sm:$0xff]
    %v4421 = vld [vmem:[%s4302 + $0x3b0] sm:$0xff]
    %v4422 = vld [vmem:[%s4302 + $0x3b8] sm:$0xff]
    %v4423 = vld [vmem:[%s4302 + $0x3c0] sm:$0xff]
    %v4424 = vld [vmem:[%s4302 + $0x3c8] sm:$0xff]
    %v4425 = vld [vmem:[%s4302 + $0x3d0] sm:$0xff]
    %v4426 = vld [vmem:[%s4302 + $0x3d8] sm:$0xff]
    %v4427 = vld [vmem:[%s4302 + $0x3e0] sm:$0xff]
    %v4428 = vld [vmem:[%s4302 + $0x3e8] sm:$0xff]
    %v4429 = vld [vmem:[%s4302 + $0x3f0] sm:$0xff]
    %v4430 = vld [vmem:[%s4302 + $0x3f8] sm:$0xff]
    %v4559 = vunpack.c.l.b16 %v4303
    %v4560 = vunpack.c.h.b16 %v4303
    %v4561 = vunpack.c.l.b16 %v4304
    %v4562 = vunpack.c.h.b16 %v4304
    %v4563 = vunpack.c.l.b16 %v4305
    %v4564 = vunpack.c.h.b16 %v4305
    %v4565 = vunpack.c.l.b16 %v4306
    %v4566 = vunpack.c.h.b16 %v4306
    %v4567 = vunpack.c.l.b16 %v4307
    %v4568 = vunpack.c.h.b16 %v4307
    %v4569 = vunpack.c.l.b16 %v4308
    %v4570 = vunpack.c.h.b16 %v4308
    %v4571 = vunpack.c.l.b16 %v4309
    %v4572 = vunpack.c.h.b16 %v4309
    %v4573 = vunpack.c.l.b16 %v4310
    %v4574 = vunpack.c.h.b16 %v4310
    %v4575 = vunpack.c.l.b16 %v4311
    %v4576 = vunpack.c.h.b16 %v4311
    %v4577 = vunpack.c.l.b16 %v4312
    %v4578 = vunpack.c.h.b16 %v4312
    %v4579 = vunpack.c.l.b16 %v4313
    %v4580 = vunpack.c.h.b16 %v4313
    %v4581 = vunpack.c.l.b16 %v4314
    %v4582 = vunpack.c.h.b16 %v4314
    %v4583 = vunpack.c.l.b16 %v4315
    %v4584 = vunpack.c.h.b16 %v4315
    %v4585 = vunpack.c.l.b16 %v4316
    %v4586 = vunpack.c.h.b16 %v4316
    %v4587 = vunpack.c.l.b16 %v4317
    %v4588 = vunpack.c.h.b16 %v4317
    %v4589 = vunpack.c.l.b16 %v4318
    %v4590 = vunpack.c.h.b16 %v4318
    %v4591 = vunpack.c.l.b16 %v4319
    %v4592 = vunpack.c.h.b16 %v4319
    %v4593 = vunpack.c.l.b16 %v4320
    %v4594 = vunpack.c.h.b16 %v4320
    %v4595 = vunpack.c.l.b16 %v4321
    %v4596 = vunpack.c.h.b16 %v4321
    %v4597 = vunpack.c.l.b16 %v4322
    %v4598 = vunpack.c.h.b16 %v4322
    %v4599 = vunpack.c.l.b16 %v4323
    %v4600 = vunpack.c.h.b16 %v4323
    %v4601 = vunpack.c.l.b16 %v4324
    %v4602 = vunpack.c.h.b16 %v4324
    %v4603 = vunpack.c.l.b16 %v4325
    %v4604 = vunpack.c.h.b16 %v4325
    %v4605 = vunpack.c.l.b16 %v4326
    %v4606 = vunpack.c.h.b16 %v4326
    %v4607 = vunpack.c.l.b16 %v4327
    %v4608 = vunpack.c.h.b16 %v4327
    %v4609 = vunpack.c.l.b16 %v4328
    %v4610 = vunpack.c.h.b16 %v4328
    %v4611 = vunpack.c.l.b16 %v4329
    %v4612 = vunpack.c.h.b16 %v4329
    %v4613 = vunpack.c.l.b16 %v4330
    %v4614 = vunpack.c.h.b16 %v4330
    %v4615 = vunpack.c.l.b16 %v4331
    %v4616 = vunpack.c.h.b16 %v4331
    %v4617 = vunpack.c.l.b16 %v4332
    %v4618 = vunpack.c.h.b16 %v4332
    %v4619 = vunpack.c.l.b16 %v4333
    %v4620 = vunpack.c.h.b16 %v4333
    %v4621 = vunpack.c.l.b16 %v4334
    %v4622 = vunpack.c.h.b16 %v4334
    %v4623 = vunpack.c.l.b16 %v4335
    %v4624 = vunpack.c.h.b16 %v4335
    %v4625 = vunpack.c.l.b16 %v4336
    %v4626 = vunpack.c.h.b16 %v4336
    %v4627 = vunpack.c.l.b16 %v4337
    %v4628 = vunpack.c.h.b16 %v4337
    %v4629 = vunpack.c.l.b16 %v4338
    %v4630 = vunpack.c.h.b16 %v4338
    %v4631 = vunpack.c.l.b16 %v4339
    %v4632 = vunpack.c.h.b16 %v4339
    %v4633 = vunpack.c.l.b16 %v4340
    %v4634 = vunpack.c.h.b16 %v4340
    %v4635 = vunpack.c.l.b16 %v4341
    %v4636 = vunpack.c.h.b16 %v4341
    %v4637 = vunpack.c.l.b16 %v4342
    %v4638 = vunpack.c.h.b16 %v4342
    %v4639 = vunpack.c.l.b16 %v4343
    %v4640 = vunpack.c.h.b16 %v4343
    %v4641 = vunpack.c.l.b16 %v4344
    %v4642 = vunpack.c.h.b16 %v4344
    %v4643 = vunpack.c.l.b16 %v4345
    %v4644 = vunpack.c.h.b16 %v4345
    %v4645 = vunpack.c.l.b16 %v4346
    %v4646 = vunpack.c.h.b16 %v4346
    %v4647 = vunpack.c.l.b16 %v4347
    %v4648 = vunpack.c.h.b16 %v4347
    %v4649 = vunpack.c.l.b16 %v4348
    %v4650 = vunpack.c.h.b16 %v4348
    %v4651 = vunpack.c.l.b16 %v4349
    %v4652 = vunpack.c.h.b16 %v4349
    %v4653 = vunpack.c.l.b16 %v4350
    %v4654 = vunpack.c.h.b16 %v4350
    %v4655 = vunpack.c.l.b16 %v4351
    %v4656 = vunpack.c.h.b16 %v4351
    %v4657 = vunpack.c.l.b16 %v4352
    %v4658 = vunpack.c.h.b16 %v4352
    %v4659 = vunpack.c.l.b16 %v4353
    %v4660 = vunpack.c.h.b16 %v4353
    %v4661 = vunpack.c.l.b16 %v4354
    %v4662 = vunpack.c.h.b16 %v4354
    %v4663 = vunpack.c.l.b16 %v4355
    %v4664 = vunpack.c.h.b16 %v4355
    %v4665 = vunpack.c.l.b16 %v4356
    %v4666 = vunpack.c.h.b16 %v4356
    %v4667 = vunpack.c.l.b16 %v4357
    %v4668 = vunpack.c.h.b16 %v4357
    %v4669 = vunpack.c.l.b16 %v4358
    %v4670 = vunpack.c.h.b16 %v4358
    %v4671 = vunpack.c.l.b16 %v4359
    %v4672 = vunpack.c.h.b16 %v4359
    %v4673 = vunpack.c.l.b16 %v4360
    %v4674 = vunpack.c.h.b16 %v4360
    %v4675 = vunpack.c.l.b16 %v4361
    %v4676 = vunpack.c.h.b16 %v4361
    %v4677 = vunpack.c.l.b16 %v4362
    %v4678 = vunpack.c.h.b16 %v4362
    %v4679 = vunpack.c.l.b16 %v4363
    %v4680 = vunpack.c.h.b16 %v4363
    %v4681 = vunpack.c.l.b16 %v4364
    %v4682 = vunpack.c.h.b16 %v4364
    %v4683 = vunpack.c.l.b16 %v4365
    %v4684 = vunpack.c.h.b16 %v4365
    %v4685 = vunpack.c.l.b16 %v4366
    %v4686 = vunpack.c.h.b16 %v4366
    %v4687 = vunpack.c.l.b16 %v4367
    %v4688 = vunpack.c.h.b16 %v4367
    %v4689 = vunpack.c.l.b16 %v4368
    %v4690 = vunpack.c.h.b16 %v4368
    %v4691 = vunpack.c.l.b16 %v4369
    %v4692 = vunpack.c.h.b16 %v4369
    %v4693 = vunpack.c.l.b16 %v4370
    %v4694 = vunpack.c.h.b16 %v4370
    %v4695 = vunpack.c.l.b16 %v4371
    %v4696 = vunpack.c.h.b16 %v4371
    %v4697 = vunpack.c.l.b16 %v4372
    %v4698 = vunpack.c.h.b16 %v4372
    %v4699 = vunpack.c.l.b16 %v4373
    %v4700 = vunpack.c.h.b16 %v4373
    %v4701 = vunpack.c.l.b16 %v4374
    %v4702 = vunpack.c.h.b16 %v4374
    %v4703 = vunpack.c.l.b16 %v4375
    %v4704 = vunpack.c.h.b16 %v4375
    %v4705 = vunpack.c.l.b16 %v4376
    %v4706 = vunpack.c.h.b16 %v4376
    %v4707 = vunpack.c.l.b16 %v4377
    %v4708 = vunpack.c.h.b16 %v4377
    %v4709 = vunpack.c.l.b16 %v4378
    %v4710 = vunpack.c.h.b16 %v4378
    %v4711 = vunpack.c.l.b16 %v4379
    %v4712 = vunpack.c.h.b16 %v4379
    %v4713 = vunpack.c.l.b16 %v4380
    %v4714 = vunpack.c.h.b16 %v4380
    %v4715 = vunpack.c.l.b16 %v4381
    %v4716 = vunpack.c.h.b16 %v4381
    %v4717 = vunpack.c.l.b16 %v4382
    %v4718 = vunpack.c.h.b16 %v4382
    %v4719 = vunpack.c.l.b16 %v4383
    %v4720 = vunpack.c.h.b16 %v4383
    %v4721 = vunpack.c.l.b16 %v4384
    %v4722 = vunpack.c.h.b16 %v4384
    %v4723 = vunpack.c.l.b16 %v4385
    %v4724 = vunpack.c.h.b16 %v4385
    %v4725 = vunpack.c.l.b16 %v4386
    %v4726 = vunpack.c.h.b16 %v4386
    %v4727 = vunpack.c.l.b16 %v4387
    %v4728 = vunpack.c.h.b16 %v4387
    %v4729 = vunpack.c.l.b16 %v4388
    %v4730 = vunpack.c.h.b16 %v4388
    %v4731 = vunpack.c.l.b16 %v4389
    %v4732 = vunpack.c.h.b16 %v4389
    %v4733 = vunpack.c.l.b16 %v4390
    %v4734 = vunpack.c.h.b16 %v4390
    %v4735 = vunpack.c.l.b16 %v4391
    %v4736 = vunpack.c.h.b16 %v4391
    %v4737 = vunpack.c.l.b16 %v4392
    %v4738 = vunpack.c.h.b16 %v4392
    %v4739 = vunpack.c.l.b16 %v4393
    %v4740 = vunpack.c.h.b16 %v4393
    %v4741 = vunpack.c.l.b16 %v4394
    %v4742 = vunpack.c.h.b16 %v4394
    %v4743 = vunpack.c.l.b16 %v4395
    %v4744 = vunpack.c.h.b16 %v4395
    %v4745 = vunpack.c.l.b16 %v4396
    %v4746 = vunpack.c.h.b16 %v4396
    %v4747 = vunpack.c.l.b16 %v4397
    %v4748 = vunpack.c.h.b16 %v4397
    %v4749 = vunpack.c.l.b16 %v4398
    %v4750 = vunpack.c.h.b16 %v4398
    %v4751 = vunpack.c.l.b16 %v4399
    %v4752 = vunpack.c.h.b16 %v4399
    %v4753 = vunpack.c.l.b16 %v4400
    %v4754 = vunpack.c.h.b16 %v4400
    %v4755 = vunpack.c.l.b16 %v4401
    %v4756 = vunpack.c.h.b16 %v4401
    %v4757 = vunpack.c.l.b16 %v4402
    %v4758 = vunpack.c.h.b16 %v4402
    %v4759 = vunpack.c.l.b16 %v4403
    %v4760 = vunpack.c.h.b16 %v4403
    %v4761 = vunpack.c.l.b16 %v4404
    %v4762 = vunpack.c.h.b16 %v4404
    %v4763 = vunpack.c.l.b16 %v4405
    %v4764 = vunpack.c.h.b16 %v4405
    %v4765 = vunpack.c.l.b16 %v4406
    %v4766 = vunpack.c.h.b16 %v4406
    %v4767 = vunpack.c.l.b16 %v4407
    %v4768 = vunpack.c.h.b16 %v4407
    %v4769 = vunpack.c.l.b16 %v4408
    %v4770 = vunpack.c.h.b16 %v4408
    %v4771 = vunpack.c.l.b16 %v4409
    %v4772 = vunpack.c.h.b16 %v4409
    %v4773 = vunpack.c.l.b16 %v4410
    %v4774 = vunpack.c.h.b16 %v4410
    %v4775 = vunpack.c.l.b16 %v4411
    %v4776 = vunpack.c.h.b16 %v4411
    %v4777 = vunpack.c.l.b16 %v4412
    %v4778 = vunpack.c.h.b16 %v4412
    %v4779 = vunpack.c.l.b16 %v4413
    %v4780 = vunpack.c.h.b16 %v4413
    %v4781 = vunpack.c.l.b16 %v4414
    %v4782 = vunpack.c.h.b16 %v4414
    %v4783 = vunpack.c.l.b16 %v4415
    %v4784 = vunpack.c.h.b16 %v4415
    %v4785 = vunpack.c.l.b16 %v4416
    %v4786 = vunpack.c.h.b16 %v4416
    %v4787 = vunpack.c.l.b16 %v4417
    %v4788 = vunpack.c.h.b16 %v4417
    %v4789 = vunpack.c.l.b16 %v4418
    %v4790 = vunpack.c.h.b16 %v4418
    %v4791 = vunpack.c.l.b16 %v4419
    %v4792 = vunpack.c.h.b16 %v4419
    %v4793 = vunpack.c.l.b16 %v4420
    %v4794 = vunpack.c.h.b16 %v4420
    %v4795 = vunpack.c.l.b16 %v4421
    %v4796 = vunpack.c.h.b16 %v4421
    %v4797 = vunpack.c.l.b16 %v4422
    %v4798 = vunpack.c.h.b16 %v4422
    %v4799 = vunpack.c.l.b16 %v4423
    %v4800 = vunpack.c.h.b16 %v4423
    %v4801 = vunpack.c.l.b16 %v4424
    %v4802 = vunpack.c.h.b16 %v4424
    %v4803 = vunpack.c.l.b16 %v4425
    %v4804 = vunpack.c.h.b16 %v4425
    %v4805 = vunpack.c.l.b16 %v4426
    %v4806 = vunpack.c.h.b16 %v4426
    %v4807 = vunpack.c.l.b16 %v4427
    %v4808 = vunpack.c.h.b16 %v4427
    %v4809 = vunpack.c.l.b16 %v4428
    %v4810 = vunpack.c.h.b16 %v4428
    %v4811 = vunpack.c.l.b16 %v4429
    %v4812 = vunpack.c.h.b16 %v4429
    %v4813 = vunpack.c.l.b16 %v4430
    %v4814 = vunpack.c.h.b16 %v4430
    %v4815 = vpack.c.b16 %v4563, %v4559
    %v4816 = vpack.c.b16 %v4564, %v4560
    %v4817 = vpack.c.b16 %v4565, %v4561
    %v4818 = vpack.c.b16 %v4566, %v4562
    %v4819 = vpack.c.b16 %v4571, %v4567
    %v4820 = vpack.c.b16 %v4572, %v4568
    %v4821 = vpack.c.b16 %v4573, %v4569
    %v4822 = vpack.c.b16 %v4574, %v4570
    %v4823 = vpack.c.b16 %v4579, %v4575
    %v4824 = vpack.c.b16 %v4580, %v4576
    %v4825 = vpack.c.b16 %v4581, %v4577
    %v4826 = vpack.c.b16 %v4582, %v4578
    %v4827 = vpack.c.b16 %v4587, %v4583
    %v4828 = vpack.c.b16 %v4588, %v4584
    %v4829 = vpack.c.b16 %v4589, %v4585
    %v4830 = vpack.c.b16 %v4590, %v4586
    %v4831 = vpack.c.b16 %v4595, %v4591
    %v4832 = vpack.c.b16 %v4596, %v4592
    %v4833 = vpack.c.b16 %v4597, %v4593
    %v4834 = vpack.c.b16 %v4598, %v4594
    %v4835 = vpack.c.b16 %v4603, %v4599
    %v4836 = vpack.c.b16 %v4604, %v4600
    %v4837 = vpack.c.b16 %v4605, %v4601
    %v4838 = vpack.c.b16 %v4606, %v4602
    %v4839 = vpack.c.b16 %v4611, %v4607
    %v4840 = vpack.c.b16 %v4612, %v4608
    %v4841 = vpack.c.b16 %v4613, %v4609
    %v4842 = vpack.c.b16 %v4614, %v4610
    %v4843 = vpack.c.b16 %v4619, %v4615
    %v4844 = vpack.c.b16 %v4620, %v4616
    %v4845 = vpack.c.b16 %v4621, %v4617
    %v4846 = vpack.c.b16 %v4622, %v4618
    %v4847 = vpack.c.b16 %v4627, %v4623
    %v4848 = vpack.c.b16 %v4628, %v4624
    %v4849 = vpack.c.b16 %v4629, %v4625
    %v4850 = vpack.c.b16 %v4630, %v4626
    %v4851 = vpack.c.b16 %v4635, %v4631
    %v4852 = vpack.c.b16 %v4636, %v4632
    %v4853 = vpack.c.b16 %v4637, %v4633
    %v4854 = vpack.c.b16 %v4638, %v4634
    %v4855 = vpack.c.b16 %v4643, %v4639
    %v4856 = vpack.c.b16 %v4644, %v4640
    %v4857 = vpack.c.b16 %v4645, %v4641
    %v4858 = vpack.c.b16 %v4646, %v4642
    %v4859 = vpack.c.b16 %v4651, %v4647
    %v4860 = vpack.c.b16 %v4652, %v4648
    %v4861 = vpack.c.b16 %v4653, %v4649
    %v4862 = vpack.c.b16 %v4654, %v4650
    %v4863 = vpack.c.b16 %v4659, %v4655
    %v4864 = vpack.c.b16 %v4660, %v4656
    %v4865 = vpack.c.b16 %v4661, %v4657
    %v4866 = vpack.c.b16 %v4662, %v4658
    %v4867 = vpack.c.b16 %v4667, %v4663
    %v4868 = vpack.c.b16 %v4668, %v4664
    %v4869 = vpack.c.b16 %v4669, %v4665
    %v4870 = vpack.c.b16 %v4670, %v4666
    %v4871 = vpack.c.b16 %v4675, %v4671
    %v4872 = vpack.c.b16 %v4676, %v4672
    %v4873 = vpack.c.b16 %v4677, %v4673
    %v4874 = vpack.c.b16 %v4678, %v4674
    %v4875 = vpack.c.b16 %v4683, %v4679
    %v4876 = vpack.c.b16 %v4684, %v4680
    %v4877 = vpack.c.b16 %v4685, %v4681
    %v4878 = vpack.c.b16 %v4686, %v4682
    %v4879 = vpack.c.b16 %v4691, %v4687
    %v4880 = vpack.c.b16 %v4692, %v4688
    %v4881 = vpack.c.b16 %v4693, %v4689
    %v4882 = vpack.c.b16 %v4694, %v4690
    %v4883 = vpack.c.b16 %v4699, %v4695
    %v4884 = vpack.c.b16 %v4700, %v4696
    %v4885 = vpack.c.b16 %v4701, %v4697
    %v4886 = vpack.c.b16 %v4702, %v4698
    %v4887 = vpack.c.b16 %v4707, %v4703
    %v4888 = vpack.c.b16 %v4708, %v4704
    %v4889 = vpack.c.b16 %v4709, %v4705
    %v4890 = vpack.c.b16 %v4710, %v4706
    %v4891 = vpack.c.b16 %v4715, %v4711
    %v4892 = vpack.c.b16 %v4716, %v4712
    %v4893 = vpack.c.b16 %v4717, %v4713
    %v4894 = vpack.c.b16 %v4718, %v4714
    %v4895 = vpack.c.b16 %v4723, %v4719
    %v4896 = vpack.c.b16 %v4724, %v4720
    %v4897 = vpack.c.b16 %v4725, %v4721
    %v4898 = vpack.c.b16 %v4726, %v4722
    %v4899 = vpack.c.b16 %v4731, %v4727
    %v4900 = vpack.c.b16 %v4732, %v4728
    %v4901 = vpack.c.b16 %v4733, %v4729
    %v4902 = vpack.c.b16 %v4734, %v4730
    %v4903 = vpack.c.b16 %v4739, %v4735
    %v4904 = vpack.c.b16 %v4740, %v4736
    %v4905 = vpack.c.b16 %v4741, %v4737
    %v4906 = vpack.c.b16 %v4742, %v4738
    %v4907 = vpack.c.b16 %v4747, %v4743
    %v4908 = vpack.c.b16 %v4748, %v4744
    %v4909 = vpack.c.b16 %v4749, %v4745
    %v4910 = vpack.c.b16 %v4750, %v4746
    %v4911 = vpack.c.b16 %v4755, %v4751
    %v4912 = vpack.c.b16 %v4756, %v4752
    %v4913 = vpack.c.b16 %v4757, %v4753
    %v4914 = vpack.c.b16 %v4758, %v4754
    %v4915 = vpack.c.b16 %v4763, %v4759
    %v4916 = vpack.c.b16 %v4764, %v4760
    %v4917 = vpack.c.b16 %v4765, %v4761
    %v4918 = vpack.c.b16 %v4766, %v4762
    %v4919 = vpack.c.b16 %v4771, %v4767
    %v4920 = vpack.c.b16 %v4772, %v4768
    %v4921 = vpack.c.b16 %v4773, %v4769
    %v4922 = vpack.c.b16 %v4774, %v4770
    %v4923 = vpack.c.b16 %v4779, %v4775
    %v4924 = vpack.c.b16 %v4780, %v4776
    %v4925 = vpack.c.b16 %v4781, %v4777
    %v4926 = vpack.c.b16 %v4782, %v4778
    %v4927 = vpack.c.b16 %v4787, %v4783
    %v4928 = vpack.c.b16 %v4788, %v4784
    %v4929 = vpack.c.b16 %v4789, %v4785
    %v4930 = vpack.c.b16 %v4790, %v4786
    %v4931 = vpack.c.b16 %v4795, %v4791
    %v4932 = vpack.c.b16 %v4796, %v4792
    %v4933 = vpack.c.b16 %v4797, %v4793
    %v4934 = vpack.c.b16 %v4798, %v4794
    %v4935 = vpack.c.b16 %v4803, %v4799
    %v4936 = vpack.c.b16 %v4804, %v4800
    %v4937 = vpack.c.b16 %v4805, %v4801
    %v4938 = vpack.c.b16 %v4806, %v4802
    %v4939 = vpack.c.b16 %v4811, %v4807
    %v4940 = vpack.c.b16 %v4812, %v4808
    %v4941 = vpack.c.b16 %v4813, %v4809
    %v4942 = vpack.c.b16 %v4814, %v4810
    %5071 = vmatprep.subr.bf16.mxu0 %v4844
    %5072 = vmatpush1.bf16.msra.mxu0 %v4843
    %5073 = vmatprep.subr.bf16.mxu0 %v4840
    %5074 = vmatpush1.bf16.msra.mxu0 %v4839
    %5075 = vmatprep.subr.bf16.mxu0 %v4836
    %5076 = vmatpush1.bf16.msra.mxu0 %v4835
    %5077 = vmatprep.subr.bf16.mxu0 %v4832
    %5078 = vmatpush1.bf16.msra.mxu0 %v4831
    %5079 = vmatprep.subr.bf16.mxu0 %v4828
    %5080 = vmatpush1.bf16.msra.mxu0 %v4827
    %5081 = vmatprep.subr.bf16.mxu0 %v4824
    %5082 = vmatpush1.bf16.msra.mxu0 %v4823
    %5083 = vmatprep.subr.bf16.mxu0 %v4820
    %5084 = vmatpush1.bf16.msra.mxu0 %v4819
    %5085 = vmatprep.subr.bf16.mxu0 %v4816
    %5086 = vmatpush1.bf16.msra.mxu0 %v4815
    %5087 = vmatprep.subr.bf16.mxu0 %v4876
    %5088 = vmatpush2.bf16.msra.mxu0 %v4875
    %5089 = vmatprep.subr.bf16.mxu0 %v4872
    %5090 = vmatpush2.bf16.msra.mxu0 %v4871
    %5091 = vmatprep.subr.bf16.mxu0 %v4868
    %5092 = vmatpush2.bf16.msra.mxu0 %v4867
    %5093 = vmatprep.subr.bf16.mxu0 %v4864
    %5094 = vmatpush2.bf16.msra.mxu0 %v4863
    %5095 = vmatprep.subr.bf16.mxu0 %v4860
    %5096 = vmatpush2.bf16.msra.mxu0 %v4859
    %5097 = vmatprep.subr.bf16.mxu0 %v4856
    %5098 = vmatpush2.bf16.msra.mxu0 %v4855
    %5099 = vmatprep.subr.bf16.mxu0 %v4852
    %5100 = vmatpush2.bf16.msra.mxu0 %v4851
    %5101 = vmatprep.subr.bf16.mxu0 %v4848
    %5102 = vmatpush2.bf16.msra.mxu0 %v4847
    %5103 = vmatprep.mubr.bf16.mxu0 %v4299
    %5104 = vmatmul.mubr.bf16.gmra.mxu0 %v4298
    %v5105 = vpop.f32.mrf.mxu0
    %v5106 = vadd.f32 0.0, %v5105
    %v5107 = vpop.f32.mrf.mxu0
    %v5108 = vadd.f32 0.0, %v5107
    %v5109 = vpop.f32.mrf.mxu0
    %v5110 = vadd.f32 0.0, %v5109
    %v5111 = vpop.f32.mrf.mxu0
    %v5112 = vadd.f32 0.0, %v5111
    %5113 = vdwg.mxu0
    %5114 = vmatprep.subr.bf16.mxu0 %v4908
    %5115 = vmatpush1.bf16.msra.mxu0 %v4907
    %5116 = vmatprep.subr.bf16.mxu0 %v4904
    %5117 = vmatpush1.bf16.msra.mxu0 %v4903
    %5118 = vmatprep.subr.bf16.mxu0 %v4900
    %5119 = vmatpush1.bf16.msra.mxu0 %v4899
    %5120 = vmatprep.subr.bf16.mxu0 %v4896
    %5121 = vmatpush1.bf16.msra.mxu0 %v4895
    %5122 = vmatprep.subr.bf16.mxu0 %v4892
    %5123 = vmatpush1.bf16.msra.mxu0 %v4891
    %5124 = vmatprep.subr.bf16.mxu0 %v4888
    %5125 = vmatpush1.bf16.msra.mxu0 %v4887
    %5126 = vmatprep.subr.bf16.mxu0 %v4884
    %5127 = vmatpush1.bf16.msra.mxu0 %v4883
    %5128 = vmatprep.subr.bf16.mxu0 %v4880
    %5129 = vmatpush1.bf16.msra.mxu0 %v4879
    %5130 = vmatprep.subr.bf16.mxu0 %v4940
    %5131 = vmatpush2.bf16.msra.mxu0 %v4939
    %5132 = vmatprep.subr.bf16.mxu0 %v4936
    %5133 = vmatpush2.bf16.msra.mxu0 %v4935
    %5134 = vmatprep.subr.bf16.mxu0 %v4932
    %5135 = vmatpush2.bf16.msra.mxu0 %v4931
    %5136 = vmatprep.subr.bf16.mxu0 %v4928
    %5137 = vmatpush2.bf16.msra.mxu0 %v4927
    %5138 = vmatprep.subr.bf16.mxu0 %v4924
    %5139 = vmatpush2.bf16.msra.mxu0 %v4923
    %5140 = vmatprep.subr.bf16.mxu0 %v4920
    %5141 = vmatpush2.bf16.msra.mxu0 %v4919
    %5142 = vmatprep.subr.bf16.mxu0 %v4916
    %5143 = vmatpush2.bf16.msra.mxu0 %v4915
    %5144 = vmatprep.subr.bf16.mxu0 %v4912
    %5145 = vmatpush2.bf16.msra.mxu0 %v4911
    %5146 = vmatprep.mubr.bf16.mxu0 %v4301
    %5147 = vmatmul.mubr.bf16.gmra.mxu0 %v4300
    %v5148 = vpop.f32.mrf.mxu0
    %v5149 = vadd.f32 %v5106, %v5148
    %v5150 = vpop.f32.mrf.mxu0
    %v5151 = vadd.f32 %v5108, %v5150
    %v5152 = vpop.f32.mrf.mxu0
    %v5153 = vadd.f32 %v5110, %v5152
    %v5154 = vpop.f32.mrf.mxu0
    %v5155 = vadd.f32 %v5112, %v5154
    %5156 = vdwg.mxu0
    %5157 = vmatprep.subr.bf16.mxu0 %v4846
    %5158 = vmatpush1.bf16.msra.mxu0 %v4845
    %5159 = vmatprep.subr.bf16.mxu0 %v4842
    %5160 = vmatpush1.bf16.msra.mxu0 %v4841
    %5161 = vmatprep.subr.bf16.mxu0 %v4838
    %5162 = vmatpush1.bf16.msra.mxu0 %v4837
    %5163 = vmatprep.subr.bf16.mxu0 %v4834
    %5164 = vmatpush1.bf16.msra.mxu0 %v4833
    %5165 = vmatprep.subr.bf16.mxu0 %v4830
    %5166 = vmatpush1.bf16.msra.mxu0 %v4829
    %5167 = vmatprep.subr.bf16.mxu0 %v4826
    %5168 = vmatpush1.bf16.msra.mxu0 %v4825
    %5169 = vmatprep.subr.bf16.mxu0 %v4822
    %5170 = vmatpush1.bf16.msra.mxu0 %v4821
    %5171 = vmatprep.subr.bf16.mxu0 %v4818
    %5172 = vmatpush1.bf16.msra.mxu0 %v4817
    %5173 = vmatprep.subr.bf16.mxu0 %v4878
    %5174 = vmatpush2.bf16.msra.mxu0 %v4877
    %5175 = vmatprep.subr.bf16.mxu0 %v4874
    %5176 = vmatpush2.bf16.msra.mxu0 %v4873
    %5177 = vmatprep.subr.bf16.mxu0 %v4870
    %5178 = vmatpush2.bf16.msra.mxu0 %v4869
    %5179 = vmatprep.subr.bf16.mxu0 %v4866
    %5180 = vmatpush2.bf16.msra.mxu0 %v4865
    %5181 = vmatprep.subr.bf16.mxu0 %v4862
    %5182 = vmatpush2.bf16.msra.mxu0 %v4861
    %5183 = vmatprep.subr.bf16.mxu0 %v4858
    %5184 = vmatpush2.bf16.msra.mxu0 %v4857
    %5185 = vmatprep.subr.bf16.mxu0 %v4854
    %5186 = vmatpush2.bf16.msra.mxu0 %v4853
    %5187 = vmatprep.subr.bf16.mxu0 %v4850
    %5188 = vmatpush2.bf16.msra.mxu0 %v4849
    %5189 = vmatprep.mubr.bf16.mxu0 %v4299
    %5190 = vmatmul.mubr.bf16.gmra.mxu0 %v4298
    %v5191 = vpop.f32.mrf.mxu0
    %v5192 = vadd.f32 0.0, %v5191
    %v5193 = vpop.f32.mrf.mxu0
    %v5194 = vadd.f32 0.0, %v5193
    %v5195 = vpop.f32.mrf.mxu0
    %v5196 = vadd.f32 0.0, %v5195
    %v5197 = vpop.f32.mrf.mxu0
    %v5198 = vadd.f32 0.0, %v5197
    %5199 = vdwg.mxu0
    %5200 = vmatprep.subr.bf16.mxu0 %v4910
    %5201 = vmatpush1.bf16.msra.mxu0 %v4909
    %5202 = vmatprep.subr.bf16.mxu0 %v4906
    %5203 = vmatpush1.bf16.msra.mxu0 %v4905
    %5204 = vmatprep.subr.bf16.mxu0 %v4902
    %5205 = vmatpush1.bf16.msra.mxu0 %v4901
    %5206 = vmatprep.subr.bf16.mxu0 %v4898
    %5207 = vmatpush1.bf16.msra.mxu0 %v4897
    %5208 = vmatprep.subr.bf16.mxu0 %v4894
    %5209 = vmatpush1.bf16.msra.mxu0 %v4893
    %5210 = vmatprep.subr.bf16.mxu0 %v4890
    %5211 = vmatpush1.bf16.msra.mxu0 %v4889
    %5212 = vmatprep.subr.bf16.mxu0 %v4886
    %5213 = vmatpush1.bf16.msra.mxu0 %v4885
    %5214 = vmatprep.subr.bf16.mxu0 %v4882
    %5215 = vmatpush1.bf16.msra.mxu0 %v4881
    %5216 = vmatprep.subr.bf16.mxu0 %v4942
    %5217 = vmatpush2.bf16.msra.mxu0 %v4941
    %5218 = vmatprep.subr.bf16.mxu0 %v4938
    %5219 = vmatpush2.bf16.msra.mxu0 %v4937
    %5220 = vmatprep.subr.bf16.mxu0 %v4934
    %5221 = vmatpush2.bf16.msra.mxu0 %v4933
    %5222 = vmatprep.subr.bf16.mxu0 %v4930
    %5223 = vmatpush2.bf16.msra.mxu0 %v4929
    %5224 = vmatprep.subr.bf16.mxu0 %v4926
    %5225 = vmatpush2.bf16.msra.mxu0 %v4925
    %5226 = vmatprep.subr.bf16.mxu0 %v4922
    %5227 = vmatpush2.bf16.msra.mxu0 %v4921
    %5228 = vmatprep.subr.bf16.mxu0 %v4918
    %5229 = vmatpush2.bf16.msra.mxu0 %v4917
    %5230 = vmatprep.subr.bf16.mxu0 %v4914
    %5231 = vmatpush2.bf16.msra.mxu0 %v4913
    %5232 = vmatprep.mubr.bf16.mxu0 %v4301
    %5233 = vmatmul.mubr.bf16.gmra.mxu0 %v4300
    %v5234 = vpop.f32.mrf.mxu0
    %v5235 = vadd.f32 %v5192, %v5234
    %v5236 = vpop.f32.mrf.mxu0
    %v5237 = vadd.f32 %v5194, %v5236
    %v5238 = vpop.f32.mrf.mxu0
    %v5239 = vadd.f32 %v5196, %v5238
    %v5240 = vpop.f32.mrf.mxu0
    %v5241 = vadd.f32 %v5198, %v5240
    %5242 = vdwg.mxu0
    %v5243 = vadd.f32 %v4180, %v5149
    %v5244 = vadd.f32 %v4182, %v5151
    %v5245 = vadd.f32 %v4266, %v5235
    %v5246 = vadd.f32 %v4268, %v5237
    %v5247 = vadd.f32 %v4184, %v5153
    %v5248 = vadd.f32 %v4186, %v5155
    %v5249 = vadd.f32 %v4270, %v5239
    %v5250 = vadd.f32 %v4272, %v5241
    %v5251 = vld [vmem:[#allocation11 + $0x2] sm:$0x1]
    %v5252 = vld [vmem:[#allocation11 + $0x3] sm:$0x1]
    %v5253 = vadd.f32 %v5243, %v5247
    %v5254 = vrot.slane %v5253, 4
    %v5255 = vadd.f32 %v5253, %v5254
    %v5256 = vrot.slane %v5255, 2
    %v5257 = vadd.f32 %v5255, %v5256
    %v5258 = vrot.slane %v5257, 1
    %v5259 = vadd.f32 %v5257, %v5258
    %v5260 = vadd.f32 %v5244, %v5248
    %v5261 = vrot.slane %v5260, 4
    %v5262 = vadd.f32 %v5260, %v5261
    %v5263 = vrot.slane %v5262, 2
    %v5264 = vadd.f32 %v5262, %v5263
    %v5265 = vrot.slane %v5264, 1
    %v5266 = vadd.f32 %v5264, %v5265
    %v5267 = vadd.f32 %v5245, %v5249
    %v5268 = vrot.slane %v5267, 4
    %v5269 = vadd.f32 %v5267, %v5268
    %v5270 = vrot.slane %v5269, 2
    %v5271 = vadd.f32 %v5269, %v5270
    %v5272 = vrot.slane %v5271, 1
    %v5273 = vadd.f32 %v5271, %v5272
    %v5274 = vadd.f32 %v5246, %v5250
    %v5275 = vrot.slane %v5274, 4
    %v5276 = vadd.f32 %v5274, %v5275
    %v5277 = vrot.slane %v5276, 2
    %v5278 = vadd.f32 %v5276, %v5277
    %v5279 = vrot.slane %v5278, 1
    %v5280 = vadd.f32 %v5278, %v5279
    %v5281 = vmul.f32 %v5243, %v5243
    %v5282 = vmul.f32 %v5244, %v5244
    %v5283 = vmul.f32 %v5245, %v5245
    %v5284 = vmul.f32 %v5246, %v5246
    %v5285 = vmul.f32 %v5247, %v5247
    %v5286 = vmul.f32 %v5248, %v5248
    %v5287 = vmul.f32 %v5249, %v5249
    %v5288 = vmul.f32 %v5250, %v5250
    %v5289 = vadd.f32 %v5281, %v5285
    %v5290 = vrot.slane %v5289, 4
    %v5291 = vadd.f32 %v5289, %v5290
    %v5292 = vrot.slane %v5291, 2
    %v5293 = vadd.f32 %v5291, %v5292
    %v5294 = vrot.slane %v5293, 1
    %v5295 = vadd.f32 %v5293, %v5294
    %v5296 = vadd.f32 %v5282, %v5286
    %v5297 = vrot.slane %v5296, 4
    %v5298 = vadd.f32 %v5296, %v5297
    %v5299 = vrot.slane %v5298, 2
    %v5300 = vadd.f32 %v5298, %v5299
    %v5301 = vrot.slane %v5300, 1
    %v5302 = vadd.f32 %v5300, %v5301
    %v5303 = vadd.f32 %v5283, %v5287
    %v5304 = vrot.slane %v5303, 4
    %v5305 = vadd.f32 %v5303, %v5304
    %v5306 = vrot.slane %v5305, 2
    %v5307 = vadd.f32 %v5305, %v5306
    %v5308 = vrot.slane %v5307, 1
    %v5309 = vadd.f32 %v5307, %v5308
    %v5310 = vadd.f32 %v5284, %v5288
    %v5311 = vrot.slane %v5310, 4
    %v5312 = vadd.f32 %v5310, %v5311
    %v5313 = vrot.slane %v5312, 2
    %v5314 = vadd.f32 %v5312, %v5313
    %v5315 = vrot.slane %v5314, 1
    %v5316 = vadd.f32 %v5314, %v5315
    %5317 = vmatprep.subr.mxu0 0.0
    %5318 = vmatpush1.msra.mxu0 %v132
    %5319 = vmatprep.subr.mxu0 0.0
    %5320 = vmatpush1.msra.mxu0 %v131
    %5321 = vmatprep.subr.mxu0 0.0
    %5322 = vmatpush1.msra.mxu0 %v130
    %5323 = vmatprep.subr.mxu0 0.0
    %5324 = vmatpush1.msra.mxu0 %v129
    %5325 = vmatprep.subr.mxu0 0.0
    %5326 = vmatpush1.msra.mxu0 %v128
    %5327 = vmatprep.subr.mxu0 0.0
    %5328 = vmatpush1.msra.mxu0 %v127
    %5329 = vmatprep.subr.mxu0 0.0
    %5330 = vmatpush1.msra.mxu0 %v126
    %5331 = vmatprep.subr.mxu0 0.0
    %5332 = vmatpush1.msra.mxu0 %v125
    %5333 = vmatprep.subr.mxu0 0.0
    %5334 = vmatpush1.msra.mxu0 %v124
    %5335 = vmatprep.subr.mxu0 0.0
    %5336 = vmatpush1.msra.mxu0 %v123
    %5337 = vmatprep.subr.mxu0 0.0
    %5338 = vmatpush1.msra.mxu0 %v122
    %5339 = vmatprep.subr.mxu0 0.0
    %5340 = vmatpush1.msra.mxu0 %v121
    %5341 = vmatprep.subr.mxu0 0.0
    %5342 = vmatpush1.msra.mxu0 %v120
    %5343 = vmatprep.subr.mxu0 0.0
    %5344 = vmatpush1.msra.mxu0 %v119
    %5345 = vmatprep.subr.mxu0 0.0
    %5346 = vmatpush1.msra.mxu0 %v118
    %5347 = vmatprep.subr.mxu0 0.0
    %5348 = vmatpush1.msra.mxu0 %v117
    %5349 = vmatprep.subr.mxu0 0.0
    %5350 = vmatpush2.msra.mxu0 %v148
    %5351 = vmatprep.subr.mxu0 0.0
    %5352 = vmatpush2.msra.mxu0 %v147
    %5353 = vmatprep.subr.mxu0 0.0
    %5354 = vmatpush2.msra.mxu0 %v146
    %5355 = vmatprep.subr.mxu0 0.0
    %5356 = vmatpush2.msra.mxu0 %v145
    %5357 = vmatprep.subr.mxu0 0.0
    %5358 = vmatpush2.msra.mxu0 %v144
    %5359 = vmatprep.subr.mxu0 0.0
    %5360 = vmatpush2.msra.mxu0 %v143
    %5361 = vmatprep.subr.mxu0 0.0
    %5362 = vmatpush2.msra.mxu0 %v142
    %5363 = vmatprep.subr.mxu0 0.0
    %5364 = vmatpush2.msra.mxu0 %v141
    %5365 = vmatprep.subr.mxu0 0.0
    %5366 = vmatpush2.msra.mxu0 %v140
    %5367 = vmatprep.subr.mxu0 0.0
    %5368 = vmatpush2.msra.mxu0 %v139
    %5369 = vmatprep.subr.mxu0 0.0
    %5370 = vmatpush2.msra.mxu0 %v138
    %5371 = vmatprep.subr.mxu0 0.0
    %5372 = vmatpush2.msra.mxu0 %v137
    %5373 = vmatprep.subr.mxu0 0.0
    %5374 = vmatpush2.msra.mxu0 %v136
    %5375 = vmatprep.subr.mxu0 0.0
    %5376 = vmatpush2.msra.mxu0 %v135
    %5377 = vmatprep.subr.mxu0 0.0
    %5378 = vmatpush2.msra.mxu0 %v134
    %5379 = vmatprep.subr.mxu0 0.0
    %5380 = vmatpush2.msra.mxu0 %v133
    %5381 = vmatprep.mubr.f32.mxu0 %v5266
    %5382 = vmatmul.mubr.f32.gmra.mxu0 %v5259
    %v5383 = vpop.f32.mrf.mxu0
    %v5384 = vadd.f32 0.0, %v5383
    %v5385 = vpop.f32.mrf.mxu0
    %5386 = vdwg.mxu0
    %5387 = vmatprep.subr.mxu0 0.0
    %5388 = vmatpush1.msra.mxu0 %v164
    %5389 = vmatprep.subr.mxu0 0.0
    %5390 = vmatpush1.msra.mxu0 %v163
    %5391 = vmatprep.subr.mxu0 0.0
    %5392 = vmatpush1.msra.mxu0 %v162
    %5393 = vmatprep.subr.mxu0 0.0
    %5394 = vmatpush1.msra.mxu0 %v161
    %5395 = vmatprep.subr.mxu0 0.0
    %5396 = vmatpush1.msra.mxu0 %v160
    %5397 = vmatprep.subr.mxu0 0.0
    %5398 = vmatpush1.msra.mxu0 %v159
    %5399 = vmatprep.subr.mxu0 0.0
    %5400 = vmatpush1.msra.mxu0 %v158
    %5401 = vmatprep.subr.mxu0 0.0
    %5402 = vmatpush1.msra.mxu0 %v157
    %5403 = vmatprep.subr.mxu0 0.0
    %5404 = vmatpush1.msra.mxu0 %v156
    %5405 = vmatprep.subr.mxu0 0.0
    %5406 = vmatpush1.msra.mxu0 %v155
    %5407 = vmatprep.subr.mxu0 0.0
    %5408 = vmatpush1.msra.mxu0 %v154
    %5409 = vmatprep.subr.mxu0 0.0
    %5410 = vmatpush1.msra.mxu0 %v153
    %5411 = vmatprep.subr.mxu0 0.0
    %5412 = vmatpush1.msra.mxu0 %v152
    %5413 = vmatprep.subr.mxu0 0.0
    %5414 = vmatpush1.msra.mxu0 %v151
    %5415 = vmatprep.subr.mxu0 0.0
    %5416 = vmatpush1.msra.mxu0 %v150
    %5417 = vmatprep.subr.mxu0 0.0
    %5418 = vmatpush1.msra.mxu0 %v149
    %5419 = vmatprep.subr.mxu0 0.0
    %5420 = vmatpush2.msra.mxu0 %v180
    %5421 = vmatprep.subr.mxu0 0.0
    %5422 = vmatpush2.msra.mxu0 %v179
    %5423 = vmatprep.subr.mxu0 0.0
    %5424 = vmatpush2.msra.mxu0 %v178
    %5425 = vmatprep.subr.mxu0 0.0
    %5426 = vmatpush2.msra.mxu0 %v177
    %5427 = vmatprep.subr.mxu0 0.0
    %5428 = vmatpush2.msra.mxu0 %v176
    %5429 = vmatprep.subr.mxu0 0.0
    %5430 = vmatpush2.msra.mxu0 %v175
    %5431 = vmatprep.subr.mxu0 0.0
    %5432 = vmatpush2.msra.mxu0 %v174
    %5433 = vmatprep.subr.mxu0 0.0
    %5434 = vmatpush2.msra.mxu0 %v173
    %5435 = vmatprep.subr.mxu0 0.0
    %5436 = vmatpush2.msra.mxu0 %v172
    %5437 = vmatprep.subr.mxu0 0.0
    %5438 = vmatpush2.msra.mxu0 %v171
    %5439 = vmatprep.subr.mxu0 0.0
    %5440 = vmatpush2.msra.mxu0 %v170
    %5441 = vmatprep.subr.mxu0 0.0
    %5442 = vmatpush2.msra.mxu0 %v169
    %5443 = vmatprep.subr.mxu0 0.0
    %5444 = vmatpush2.msra.mxu0 %v168
    %5445 = vmatprep.subr.mxu0 0.0
    %5446 = vmatpush2.msra.mxu0 %v167
    %5447 = vmatprep.subr.mxu0 0.0
    %5448 = vmatpush2.msra.mxu0 %v166
    %5449 = vmatprep.subr.mxu0 0.0
    %5450 = vmatpush2.msra.mxu0 %v165
    %5451 = vmatprep.mubr.f32.mxu0 %v5280
    %5452 = vmatmul.mubr.f32.gmra.mxu0 %v5273
    %v5453 = vpop.f32.mrf.mxu0
    %v5454 = vadd.f32 %v5384, %v5453
    %v5455 = vpop.f32.mrf.mxu0
    %5456 = vdwg.mxu0
    %5457 = vmatprep.subr.mxu0 0.0
    %5458 = vmatpush1.msra.mxu0 %v132
    %5459 = vmatprep.subr.mxu0 0.0
    %5460 = vmatpush1.msra.mxu0 %v131
    %5461 = vmatprep.subr.mxu0 0.0
    %5462 = vmatpush1.msra.mxu0 %v130
    %5463 = vmatprep.subr.mxu0 0.0
    %5464 = vmatpush1.msra.mxu0 %v129
    %5465 = vmatprep.subr.mxu0 0.0
    %5466 = vmatpush1.msra.mxu0 %v128
    %5467 = vmatprep.subr.mxu0 0.0
    %5468 = vmatpush1.msra.mxu0 %v127
    %5469 = vmatprep.subr.mxu0 0.0
    %5470 = vmatpush1.msra.mxu0 %v126
    %5471 = vmatprep.subr.mxu0 0.0
    %5472 = vmatpush1.msra.mxu0 %v125
    %5473 = vmatprep.subr.mxu0 0.0
    %5474 = vmatpush1.msra.mxu0 %v124
    %5475 = vmatprep.subr.mxu0 0.0
    %5476 = vmatpush1.msra.mxu0 %v123
    %5477 = vmatprep.subr.mxu0 0.0
    %5478 = vmatpush1.msra.mxu0 %v122
    %5479 = vmatprep.subr.mxu0 0.0
    %5480 = vmatpush1.msra.mxu0 %v121
    %5481 = vmatprep.subr.mxu0 0.0
    %5482 = vmatpush1.msra.mxu0 %v120
    %5483 = vmatprep.subr.mxu0 0.0
    %5484 = vmatpush1.msra.mxu0 %v119
    %5485 = vmatprep.subr.mxu0 0.0
    %5486 = vmatpush1.msra.mxu0 %v118
    %5487 = vmatprep.subr.mxu0 0.0
    %5488 = vmatpush1.msra.mxu0 %v117
    %5489 = vmatprep.subr.mxu0 0.0
    %5490 = vmatpush2.msra.mxu0 %v148
    %5491 = vmatprep.subr.mxu0 0.0
    %5492 = vmatpush2.msra.mxu0 %v147
    %5493 = vmatprep.subr.mxu0 0.0
    %5494 = vmatpush2.msra.mxu0 %v146
    %5495 = vmatprep.subr.mxu0 0.0
    %5496 = vmatpush2.msra.mxu0 %v145
    %5497 = vmatprep.subr.mxu0 0.0
    %5498 = vmatpush2.msra.mxu0 %v144
    %5499 = vmatprep.subr.mxu0 0.0
    %5500 = vmatpush2.msra.mxu0 %v143
    %5501 = vmatprep.subr.mxu0 0.0
    %5502 = vmatpush2.msra.mxu0 %v142
    %5503 = vmatprep.subr.mxu0 0.0
    %5504 = vmatpush2.msra.mxu0 %v141
    %5505 = vmatprep.subr.mxu0 0.0
    %5506 = vmatpush2.msra.mxu0 %v140
    %5507 = vmatprep.subr.mxu0 0.0
    %5508 = vmatpush2.msra.mxu0 %v139
    %5509 = vmatprep.subr.mxu0 0.0
    %5510 = vmatpush2.msra.mxu0 %v138
    %5511 = vmatprep.subr.mxu0 0.0
    %5512 = vmatpush2.msra.mxu0 %v137
    %5513 = vmatprep.subr.mxu0 0.0
    %5514 = vmatpush2.msra.mxu0 %v136
    %5515 = vmatprep.subr.mxu0 0.0
    %5516 = vmatpush2.msra.mxu0 %v135
    %5517 = vmatprep.subr.mxu0 0.0
    %5518 = vmatpush2.msra.mxu0 %v134
    %5519 = vmatprep.subr.mxu0 0.0
    %5520 = vmatpush2.msra.mxu0 %v133
    %5521 = vmatprep.mubr.f32.mxu0 %v5302
    %5522 = vmatmul.mubr.f32.gmra.mxu0 %v5295
    %v5523 = vpop.f32.mrf.mxu0
    %v5524 = vadd.f32 0.0, %v5523
    %v5525 = vpop.f32.mrf.mxu0
    %5526 = vdwg.mxu0
    %5527 = vmatprep.subr.mxu0 0.0
    %5528 = vmatpush1.msra.mxu0 %v164
    %5529 = vmatprep.subr.mxu0 0.0
    %5530 = vmatpush1.msra.mxu0 %v163
    %5531 = vmatprep.subr.mxu0 0.0
    %5532 = vmatpush1.msra.mxu0 %v162
    %5533 = vmatprep.subr.mxu0 0.0
    %5534 = vmatpush1.msra.mxu0 %v161
    %5535 = vmatprep.subr.mxu0 0.0
    %5536 = vmatpush1.msra.mxu0 %v160
    %5537 = vmatprep.subr.mxu0 0.0
    %5538 = vmatpush1.msra.mxu0 %v159
    %5539 = vmatprep.subr.mxu0 0.0
    %5540 = vmatpush1.msra.mxu0 %v158
    %5541 = vmatprep.subr.mxu0 0.0
    %5542 = vmatpush1.msra.mxu0 %v157
    %5543 = vmatprep.subr.mxu0 0.0
    %5544 = vmatpush1.msra.mxu0 %v156
    %5545 = vmatprep.subr.mxu0 0.0
    %5546 = vmatpush1.msra.mxu0 %v155
    %5547 = vmatprep.subr.mxu0 0.0
    %5548 = vmatpush1.msra.mxu0 %v154
    %5549 = vmatprep.subr.mxu0 0.0
    %5550 = vmatpush1.msra.mxu0 %v153
    %5551 = vmatprep.subr.mxu0 0.0
    %5552 = vmatpush1.msra.mxu0 %v152
    %5553 = vmatprep.subr.mxu0 0.0
    %5554 = vmatpush1.msra.mxu0 %v151
    %5555 = vmatprep.subr.mxu0 0.0
    %5556 = vmatpush1.msra.mxu0 %v150
    %5557 = vmatprep.subr.mxu0 0.0
    %5558 = vmatpush1.msra.mxu0 %v149
    %5559 = vmatprep.subr.mxu0 0.0
    %5560 = vmatpush2.msra.mxu0 %v180
    %5561 = vmatprep.subr.mxu0 0.0
    %5562 = vmatpush2.msra.mxu0 %v179
    %5563 = vmatprep.subr.mxu0 0.0
    %5564 = vmatpush2.msra.mxu0 %v178
    %5565 = vmatprep.subr.mxu0 0.0
    %5566 = vmatpush2.msra.mxu0 %v177
    %5567 = vmatprep.subr.mxu0 0.0
    %5568 = vmatpush2.msra.mxu0 %v176
    %5569 = vmatprep.subr.mxu0 0.0
    %5570 = vmatpush2.msra.mxu0 %v175
    %5571 = vmatprep.subr.mxu0 0.0
    %5572 = vmatpush2.msra.mxu0 %v174
    %5573 = vmatprep.subr.mxu0 0.0
    %5574 = vmatpush2.msra.mxu0 %v173
    %5575 = vmatprep.subr.mxu0 0.0
    %5576 = vmatpush2.msra.mxu0 %v172
    %5577 = vmatprep.subr.mxu0 0.0
    %5578 = vmatpush2.msra.mxu0 %v171
    %5579 = vmatprep.subr.mxu0 0.0
    %5580 = vmatpush2.msra.mxu0 %v170
    %5581 = vmatprep.subr.mxu0 0.0
    %5582 = vmatpush2.msra.mxu0 %v169
    %5583 = vmatprep.subr.mxu0 0.0
    %5584 = vmatpush2.msra.mxu0 %v168
    %5585 = vmatprep.subr.mxu0 0.0
    %5586 = vmatpush2.msra.mxu0 %v167
    %5587 = vmatprep.subr.mxu0 0.0
    %5588 = vmatpush2.msra.mxu0 %v166
    %5589 = vmatprep.subr.mxu0 0.0
    %5590 = vmatpush2.msra.mxu0 %v165
    %5591 = vmatprep.mubr.f32.mxu0 %v5316
    %5592 = vmatmul.mubr.f32.gmra.mxu0 %v5309
    %v5593 = vpop.f32.mrf.mxu0
    %v5594 = vadd.f32 %v5524, %v5593
    %v5595 = vpop.f32.mrf.mxu0
    %5596 = vdwg.mxu0
    %v5597 = vmul.f32 %v5454, 0.0009765625
    %v5598 = vmul.f32 %v5594, 0.0009765625
    %v5599 = vmul.f32 %v5597, %v5597
    %v5600 = vsub.f32 %v5598, %v5599
    %v5601 = vadd.f32 %v5600, 1e-05
    %v5602 = vrsqrt.pop %v5601
    %v5603 = vmul.f32 %v5251, %v5602
    %v5604 = vmul.f32 %v5597, %v5603
    %v5605 = vsub.f32 %v5252, %v5604
    %v5607 = vsel %vm2014, %v5603, 0
    %5609 = vmatprep.subr.mxu0 0.0
    %5610 = vmatpush1.msra.mxu0 0.0
    %5611 = vmatprep.subr.mxu0 0.0
    %5612 = vmatpush1.msra.mxu0 0.0
    %5613 = vmatprep.subr.mxu0 0.0
    %5614 = vmatpush1.msra.mxu0 0.0
    %5615 = vmatprep.subr.mxu0 0.0
    %5616 = vmatpush1.msra.mxu0 0.0
    %5617 = vmatprep.subr.mxu0 0.0
    %5618 = vmatpush1.msra.mxu0 0.0
    %5619 = vmatprep.subr.mxu0 0.0
    %5620 = vmatpush1.msra.mxu0 0.0
    %5621 = vmatprep.subr.mxu0 0.0
    %5622 = vmatpush1.msra.mxu0 0.0
    %5623 = vmatprep.subr.mxu0 0.0
    %5624 = vmatpush1.msra.mxu0 0.0
    %5625 = vmatprep.subr.mxu0 0.0
    %5626 = vmatpush1.msra.mxu0 0.0
    %5627 = vmatprep.subr.mxu0 0.0
    %5628 = vmatpush1.msra.mxu0 0.0
    %5629 = vmatprep.subr.mxu0 0.0
    %5630 = vmatpush1.msra.mxu0 0.0
    %5631 = vmatprep.subr.mxu0 0.0
    %5632 = vmatpush1.msra.mxu0 0.0
    %5633 = vmatprep.subr.mxu0 0.0
    %5634 = vmatpush1.msra.mxu0 0.0
    %5635 = vmatprep.subr.mxu0 0.0
    %5636 = vmatpush1.msra.mxu0 0.0
    %5637 = vmatprep.subr.mxu0 0.0
    %5638 = vmatpush1.msra.mxu0 0.0
    %5639 = vmatprep.subr.mxu0 %v182
    %5640 = vmatpush1.msra.mxu0 %v181
    %5641 = vmatprep.subr.mxu0 0.0
    %5642 = vmatpush2.msra.mxu0 0.0
    %5643 = vmatprep.subr.mxu0 0.0
    %5644 = vmatpush2.msra.mxu0 0.0
    %5645 = vmatprep.subr.mxu0 0.0
    %5646 = vmatpush2.msra.mxu0 0.0
    %5647 = vmatprep.subr.mxu0 0.0
    %5648 = vmatpush2.msra.mxu0 0.0
    %5649 = vmatprep.subr.mxu0 0.0
    %5650 = vmatpush2.msra.mxu0 0.0
    %5651 = vmatprep.subr.mxu0 0.0
    %5652 = vmatpush2.msra.mxu0 0.0
    %5653 = vmatprep.subr.mxu0 0.0
    %5654 = vmatpush2.msra.mxu0 0.0
    %5655 = vmatprep.subr.mxu0 0.0
    %5656 = vmatpush2.msra.mxu0 0.0
    %5657 = vmatprep.subr.mxu0 0.0
    %5658 = vmatpush2.msra.mxu0 0.0
    %5659 = vmatprep.subr.mxu0 0.0
    %5660 = vmatpush2.msra.mxu0 0.0
    %5661 = vmatprep.subr.mxu0 0.0
    %5662 = vmatpush2.msra.mxu0 0.0
    %5663 = vmatprep.subr.mxu0 0.0
    %5664 = vmatpush2.msra.mxu0 0.0
    %5665 = vmatprep.subr.mxu0 0.0
    %5666 = vmatpush2.msra.mxu0 0.0
    %5667 = vmatprep.subr.mxu0 0.0
    %5668 = vmatpush2.msra.mxu0 0.0
    %5669 = vmatprep.subr.mxu0 0.0
    %5670 = vmatpush2.msra.mxu0 0.0
    %5671 = vmatprep.subr.mxu0 0.0
    %5672 = vmatpush2.msra.mxu0 0.0
    %5673 = vmatprep.mubr.f32.mxu0 0.0
    %5674 = vmatmul.mubr.f32.gmra.mxu0 %v5607
    %v5675 = vpop.f32.mrf.mxu0
    %v5676 = vadd.f32 0.0, %v5675
    %v5677 = vpop.f32.mrf.mxu0
    %v5678 = vadd.f32 0.0, %v5677
    %5679 = vdwg.mxu0
    %5680 = vmatprep.subr.mxu0 0.0
    %5681 = vmatpush1.msra.mxu0 0.0
    %5682 = vmatprep.subr.mxu0 0.0
    %5683 = vmatpush1.msra.mxu0 0.0
    %5684 = vmatprep.subr.mxu0 0.0
    %5685 = vmatpush1.msra.mxu0 0.0
    %5686 = vmatprep.subr.mxu0 0.0
    %5687 = vmatpush1.msra.mxu0 0.0
    %5688 = vmatprep.subr.mxu0 0.0
    %5689 = vmatpush1.msra.mxu0 0.0
    %5690 = vmatprep.subr.mxu0 0.0
    %5691 = vmatpush1.msra.mxu0 0.0
    %5692 = vmatprep.subr.mxu0 0.0
    %5693 = vmatpush1.msra.mxu0 0.0
    %5694 = vmatprep.subr.mxu0 0.0
    %5695 = vmatpush1.msra.mxu0 0.0
    %5696 = vmatprep.subr.mxu0 0.0
    %5697 = vmatpush1.msra.mxu0 0.0
    %5698 = vmatprep.subr.mxu0 0.0
    %5699 = vmatpush1.msra.mxu0 0.0
    %5700 = vmatprep.subr.mxu0 0.0
    %5701 = vmatpush1.msra.mxu0 0.0
    %5702 = vmatprep.subr.mxu0 0.0
    %5703 = vmatpush1.msra.mxu0 0.0
    %5704 = vmatprep.subr.mxu0 0.0
    %5705 = vmatpush1.msra.mxu0 0.0
    %5706 = vmatprep.subr.mxu0 0.0
    %5707 = vmatpush1.msra.mxu0 0.0
    %5708 = vmatprep.subr.mxu0 0.0
    %5709 = vmatpush1.msra.mxu0 0.0
    %5710 = vmatprep.subr.mxu0 %v184
    %5711 = vmatpush1.msra.mxu0 %v183
    %5712 = vmatprep.subr.mxu0 0.0
    %5713 = vmatpush2.msra.mxu0 0.0
    %5714 = vmatprep.subr.mxu0 0.0
    %5715 = vmatpush2.msra.mxu0 0.0
    %5716 = vmatprep.subr.mxu0 0.0
    %5717 = vmatpush2.msra.mxu0 0.0
    %5718 = vmatprep.subr.mxu0 0.0
    %5719 = vmatpush2.msra.mxu0 0.0
    %5720 = vmatprep.subr.mxu0 0.0
    %5721 = vmatpush2.msra.mxu0 0.0
    %5722 = vmatprep.subr.mxu0 0.0
    %5723 = vmatpush2.msra.mxu0 0.0
    %5724 = vmatprep.subr.mxu0 0.0
    %5725 = vmatpush2.msra.mxu0 0.0
    %5726 = vmatprep.subr.mxu0 0.0
    %5727 = vmatpush2.msra.mxu0 0.0
    %5728 = vmatprep.subr.mxu0 0.0
    %5729 = vmatpush2.msra.mxu0 0.0
    %5730 = vmatprep.subr.mxu0 0.0
    %5731 = vmatpush2.msra.mxu0 0.0
    %5732 = vmatprep.subr.mxu0 0.0
    %5733 = vmatpush2.msra.mxu0 0.0
    %5734 = vmatprep.subr.mxu0 0.0
    %5735 = vmatpush2.msra.mxu0 0.0
    %5736 = vmatprep.subr.mxu0 0.0
    %5737 = vmatpush2.msra.mxu0 0.0
    %5738 = vmatprep.subr.mxu0 0.0
    %5739 = vmatpush2.msra.mxu0 0.0
    %5740 = vmatprep.subr.mxu0 0.0
    %5741 = vmatpush2.msra.mxu0 0.0
    %5742 = vmatprep.subr.mxu0 0.0
    %5743 = vmatpush2.msra.mxu0 0.0
    %5744 = vmatprep.mubr.f32.mxu0 0.0
    %5745 = vmatmul.mubr.f32.gmra.mxu0 %v5607
    %v5746 = vpop.f32.mrf.mxu0
    %v5747 = vadd.f32 0.0, %v5746
    %v5748 = vpop.f32.mrf.mxu0
    %v5749 = vadd.f32 0.0, %v5748
    %5750 = vdwg.mxu0
    %v5752 = vsel %vm2014, %v5605, 0
    %5754 = vmatprep.subr.mxu0 0.0
    %5755 = vmatpush1.msra.mxu0 0.0
    %5756 = vmatprep.subr.mxu0 0.0
    %5757 = vmatpush1.msra.mxu0 0.0
    %5758 = vmatprep.subr.mxu0 0.0
    %5759 = vmatpush1.msra.mxu0 0.0
    %5760 = vmatprep.subr.mxu0 0.0
    %5761 = vmatpush1.msra.mxu0 0.0
    %5762 = vmatprep.subr.mxu0 0.0
    %5763 = vmatpush1.msra.mxu0 0.0
    %5764 = vmatprep.subr.mxu0 0.0
    %5765 = vmatpush1.msra.mxu0 0.0
    %5766 = vmatprep.subr.mxu0 0.0
    %5767 = vmatpush1.msra.mxu0 0.0
    %5768 = vmatprep.subr.mxu0 0.0
    %5769 = vmatpush1.msra.mxu0 0.0
    %5770 = vmatprep.subr.mxu0 0.0
    %5771 = vmatpush1.msra.mxu0 0.0
    %5772 = vmatprep.subr.mxu0 0.0
    %5773 = vmatpush1.msra.mxu0 0.0
    %5774 = vmatprep.subr.mxu0 0.0
    %5775 = vmatpush1.msra.mxu0 0.0
    %5776 = vmatprep.subr.mxu0 0.0
    %5777 = vmatpush1.msra.mxu0 0.0
    %5778 = vmatprep.subr.mxu0 0.0
    %5779 = vmatpush1.msra.mxu0 0.0
    %5780 = vmatprep.subr.mxu0 0.0
    %5781 = vmatpush1.msra.mxu0 0.0
    %5782 = vmatprep.subr.mxu0 0.0
    %5783 = vmatpush1.msra.mxu0 0.0
    %5784 = vmatprep.subr.mxu0 %v182
    %5785 = vmatpush1.msra.mxu0 %v181
    %5786 = vmatprep.subr.mxu0 0.0
    %5787 = vmatpush2.msra.mxu0 0.0
    %5788 = vmatprep.subr.mxu0 0.0
    %5789 = vmatpush2.msra.mxu0 0.0
    %5790 = vmatprep.subr.mxu0 0.0
    %5791 = vmatpush2.msra.mxu0 0.0
    %5792 = vmatprep.subr.mxu0 0.0
    %5793 = vmatpush2.msra.mxu0 0.0
    %5794 = vmatprep.subr.mxu0 0.0
    %5795 = vmatpush2.msra.mxu0 0.0
    %5796 = vmatprep.subr.mxu0 0.0
    %5797 = vmatpush2.msra.mxu0 0.0
    %5798 = vmatprep.subr.mxu0 0.0
    %5799 = vmatpush2.msra.mxu0 0.0
    %5800 = vmatprep.subr.mxu0 0.0
    %5801 = vmatpush2.msra.mxu0 0.0
    %5802 = vmatprep.subr.mxu0 0.0
    %5803 = vmatpush2.msra.mxu0 0.0
    %5804 = vmatprep.subr.mxu0 0.0
    %5805 = vmatpush2.msra.mxu0 0.0
    %5806 = vmatprep.subr.mxu0 0.0
    %5807 = vmatpush2.msra.mxu0 0.0
    %5808 = vmatprep.subr.mxu0 0.0
    %5809 = vmatpush2.msra.mxu0 0.0
    %5810 = vmatprep.subr.mxu0 0.0
    %5811 = vmatpush2.msra.mxu0 0.0
    %5812 = vmatprep.subr.mxu0 0.0
    %5813 = vmatpush2.msra.mxu0 0.0
    %5814 = vmatprep.subr.mxu0 0.0
    %5815 = vmatpush2.msra.mxu0 0.0
    %5816 = vmatprep.subr.mxu0 0.0
    %5817 = vmatpush2.msra.mxu0 0.0
    %5818 = vmatprep.mubr.f32.mxu0 0.0
    %5819 = vmatmul.mubr.f32.gmra.mxu0 %v5752
    %v5820 = vpop.f32.mrf.mxu0
    %v5821 = vadd.f32 0.0, %v5820
    %v5822 = vpop.f32.mrf.mxu0
    %v5823 = vadd.f32 0.0, %v5822
    %5824 = vdwg.mxu0
    %5825 = vmatprep.subr.mxu0 0.0
    %5826 = vmatpush1.msra.mxu0 0.0
    %5827 = vmatprep.subr.mxu0 0.0
    %5828 = vmatpush1.msra.mxu0 0.0
    %5829 = vmatprep.subr.mxu0 0.0
    %5830 = vmatpush1.msra.mxu0 0.0
    %5831 = vmatprep.subr.mxu0 0.0
    %5832 = vmatpush1.msra.mxu0 0.0
    %5833 = vmatprep.subr.mxu0 0.0
    %5834 = vmatpush1.msra.mxu0 0.0
    %5835 = vmatprep.subr.mxu0 0.0
    %5836 = vmatpush1.msra.mxu0 0.0
    %5837 = vmatprep.subr.mxu0 0.0
    %5838 = vmatpush1.msra.mxu0 0.0
    %5839 = vmatprep.subr.mxu0 0.0
    %5840 = vmatpush1.msra.mxu0 0.0
    %5841 = vmatprep.subr.mxu0 0.0
    %5842 = vmatpush1.msra.mxu0 0.0
    %5843 = vmatprep.subr.mxu0 0.0
    %5844 = vmatpush1.msra.mxu0 0.0
    %5845 = vmatprep.subr.mxu0 0.0
    %5846 = vmatpush1.msra.mxu0 0.0
    %5847 = vmatprep.subr.mxu0 0.0
    %5848 = vmatpush1.msra.mxu0 0.0
    %5849 = vmatprep.subr.mxu0 0.0
    %5850 = vmatpush1.msra.mxu0 0.0
    %5851 = vmatprep.subr.mxu0 0.0
    %5852 = vmatpush1.msra.mxu0 0.0
    %5853 = vmatprep.subr.mxu0 0.0
    %5854 = vmatpush1.msra.mxu0 0.0
    %5855 = vmatprep.subr.mxu0 %v184
    %5856 = vmatpush1.msra.mxu0 %v183
    %5857 = vmatprep.subr.mxu0 0.0
    %5858 = vmatpush2.msra.mxu0 0.0
    %5859 = vmatprep.subr.mxu0 0.0
    %5860 = vmatpush2.msra.mxu0 0.0
    %5861 = vmatprep.subr.mxu0 0.0
    %5862 = vmatpush2.msra.mxu0 0.0
    %5863 = vmatprep.subr.mxu0 0.0
    %5864 = vmatpush2.msra.mxu0 0.0
    %5865 = vmatprep.subr.mxu0 0.0
    %5866 = vmatpush2.msra.mxu0 0.0
    %5867 = vmatprep.subr.mxu0 0.0
    %5868 = vmatpush2.msra.mxu0 0.0
    %5869 = vmatprep.subr.mxu0 0.0
    %5870 = vmatpush2.msra.mxu0 0.0
    %5871 = vmatprep.subr.mxu0 0.0
    %5872 = vmatpush2.msra.mxu0 0.0
    %5873 = vmatprep.subr.mxu0 0.0
    %5874 = vmatpush2.msra.mxu0 0.0
    %5875 = vmatprep.subr.mxu0 0.0
    %5876 = vmatpush2.msra.mxu0 0.0
    %5877 = vmatprep.subr.mxu0 0.0
    %5878 = vmatpush2.msra.mxu0 0.0
    %5879 = vmatprep.subr.mxu0 0.0
    %5880 = vmatpush2.msra.mxu0 0.0
    %5881 = vmatprep.subr.mxu0 0.0
    %5882 = vmatpush2.msra.mxu0 0.0
    %5883 = vmatprep.subr.mxu0 0.0
    %5884 = vmatpush2.msra.mxu0 0.0
    %5885 = vmatprep.subr.mxu0 0.0
    %5886 = vmatpush2.msra.mxu0 0.0
    %5887 = vmatprep.subr.mxu0 0.0
    %5888 = vmatpush2.msra.mxu0 0.0
    %5889 = vmatprep.mubr.f32.mxu0 0.0
    %5890 = vmatmul.mubr.f32.gmra.mxu0 %v5752
    %v5891 = vpop.f32.mrf.mxu0
    %v5892 = vadd.f32 0.0, %v5891
    %v5893 = vpop.f32.mrf.mxu0
    %v5894 = vadd.f32 0.0, %v5893
    %5895 = vdwg.mxu0
    %v5896 = vlaneseq
    %v5897 = vshrl.u32 %v5896, 7
    %v5898 = vsub.s32 0, %v5897
    %v5899 = vrot.slane %v5676, %v5898
    %v5900 = vlaneseq
    %v5901 = vshrl.u32 %v5900, 7
    %v5902 = vsub.s32 0, %v5901
    %v5903 = vrot.slane %v5678, %v5902
    %v5904 = vlaneseq
    %v5905 = vshrl.u32 %v5904, 7
    %v5906 = vsub.s32 0, %v5905
    %v5907 = vrot.slane %v5747, %v5906
    %v5908 = vlaneseq
    %v5909 = vshrl.u32 %v5908, 7
    %v5910 = vsub.s32 0, %v5909
    %v5911 = vrot.slane %v5749, %v5910
    %v5912 = vmul.f32 %v5243, %v5899
    %v5913 = vmul.f32 %v5244, %v5903
    %v5914 = vmul.f32 %v5245, %v5907
    %v5915 = vmul.f32 %v5246, %v5911
    %v5916 = vmul.f32 %v5247, %v5899
    %v5917 = vmul.f32 %v5248, %v5903
    %v5918 = vmul.f32 %v5249, %v5907
    %v5919 = vmul.f32 %v5250, %v5911
    %v5920 = vlaneseq
    %v5921 = vshrl.u32 %v5920, 7
    %v5922 = vsub.s32 0, %v5921
    %v5923 = vrot.slane %v5821, %v5922
    %v5924 = vlaneseq
    %v5925 = vshrl.u32 %v5924, 7
    %v5926 = vsub.s32 0, %v5925
    %v5927 = vrot.slane %v5823, %v5926
    %v5928 = vlaneseq
    %v5929 = vshrl.u32 %v5928, 7
    %v5930 = vsub.s32 0, %v5929
    %v5931 = vrot.slane %v5892, %v5930
    %v5932 = vlaneseq
    %v5933 = vshrl.u32 %v5932, 7
    %v5934 = vsub.s32 0, %v5933
    %v5935 = vrot.slane %v5894, %v5934
    %v5936 = vadd.f32 %v5912, %v5923
    %v5937 = vadd.f32 %v5913, %v5927
    %v5938 = vadd.f32 %v5914, %v5931
    %v5939 = vadd.f32 %v5915, %v5935
    %v5940 = vadd.f32 %v5916, %v5923
    %v5941 = vadd.f32 %v5917, %v5927
    %v5942 = vadd.f32 %v5918, %v5931
    %v5943 = vadd.f32 %v5919, %v5935
    %v5944 = vmax.f32 %v5936, 0.0
    %v5945 = vmax.f32 %v5937, 0.0
    %v5946 = vmax.f32 %v5938, 0.0
    %v5947 = vmax.f32 %v5939, 0.0
    %v5948 = vmax.f32 %v5940, 0.0
    %v5949 = vmax.f32 %v5941, 0.0
    %v5950 = vmax.f32 %v5942, 0.0
    %v5951 = vmax.f32 %v5943, 0.0
    %v5952 = vld [vmem:[#allocation11 + $0x4] sm:$0x1]
    %v5954 = vsel %vm2014, %v5952, 0
    %5956 = vmatprep.subr.mxu0 0.0
    %5957 = vmatpush1.msra.mxu0 0.0
    %5958 = vmatprep.subr.mxu0 0.0
    %5959 = vmatpush1.msra.mxu0 0.0
    %5960 = vmatprep.subr.mxu0 0.0
    %5961 = vmatpush1.msra.mxu0 0.0
    %5962 = vmatprep.subr.mxu0 0.0
    %5963 = vmatpush1.msra.mxu0 0.0
    %5964 = vmatprep.subr.mxu0 0.0
    %5965 = vmatpush1.msra.mxu0 0.0
    %5966 = vmatprep.subr.mxu0 0.0
    %5967 = vmatpush1.msra.mxu0 0.0
    %5968 = vmatprep.subr.mxu0 0.0
    %5969 = vmatpush1.msra.mxu0 0.0
    %5970 = vmatprep.subr.mxu0 0.0
    %5971 = vmatpush1.msra.mxu0 0.0
    %5972 = vmatprep.subr.mxu0 0.0
    %5973 = vmatpush1.msra.mxu0 0.0
    %5974 = vmatprep.subr.mxu0 0.0
    %5975 = vmatpush1.msra.mxu0 0.0
    %5976 = vmatprep.subr.mxu0 0.0
    %5977 = vmatpush1.msra.mxu0 0.0
    %5978 = vmatprep.subr.mxu0 0.0
    %5979 = vmatpush1.msra.mxu0 0.0
    %5980 = vmatprep.subr.mxu0 0.0
    %5981 = vmatpush1.msra.mxu0 0.0
    %5982 = vmatprep.subr.mxu0 0.0
    %5983 = vmatpush1.msra.mxu0 0.0
    %5984 = vmatprep.subr.mxu0 0.0
    %5985 = vmatpush1.msra.mxu0 0.0
    %5986 = vmatprep.subr.mxu0 %v182
    %5987 = vmatpush1.msra.mxu0 %v181
    %5988 = vmatprep.subr.mxu0 0.0
    %5989 = vmatpush2.msra.mxu0 0.0
    %5990 = vmatprep.subr.mxu0 0.0
    %5991 = vmatpush2.msra.mxu0 0.0
    %5992 = vmatprep.subr.mxu0 0.0
    %5993 = vmatpush2.msra.mxu0 0.0
    %5994 = vmatprep.subr.mxu0 0.0
    %5995 = vmatpush2.msra.mxu0 0.0
    %5996 = vmatprep.subr.mxu0 0.0
    %5997 = vmatpush2.msra.mxu0 0.0
    %5998 = vmatprep.subr.mxu0 0.0
    %5999 = vmatpush2.msra.mxu0 0.0
    %6000 = vmatprep.subr.mxu0 0.0
    %6001 = vmatpush2.msra.mxu0 0.0
    %6002 = vmatprep.subr.mxu0 0.0
    %6003 = vmatpush2.msra.mxu0 0.0
    %6004 = vmatprep.subr.mxu0 0.0
    %6005 = vmatpush2.msra.mxu0 0.0
    %6006 = vmatprep.subr.mxu0 0.0
    %6007 = vmatpush2.msra.mxu0 0.0
    %6008 = vmatprep.subr.mxu0 0.0
    %6009 = vmatpush2.msra.mxu0 0.0
    %6010 = vmatprep.subr.mxu0 0.0
    %6011 = vmatpush2.msra.mxu0 0.0
    %6012 = vmatprep.subr.mxu0 0.0
    %6013 = vmatpush2.msra.mxu0 0.0
    %6014 = vmatprep.subr.mxu0 0.0
    %6015 = vmatpush2.msra.mxu0 0.0
    %6016 = vmatprep.subr.mxu0 0.0
    %6017 = vmatpush2.msra.mxu0 0.0
    %6018 = vmatprep.subr.mxu0 0.0
    %6019 = vmatpush2.msra.mxu0 0.0
    %6020 = vmatprep.mubr.f32.mxu0 0.0
    %6021 = vmatmul.mubr.f32.gmra.mxu0 %v5954
    %v6022 = vpop.f32.mrf.mxu0
    %v6023 = vadd.f32 0.0, %v6022
    %v6024 = vpop.f32.mrf.mxu0
    %v6025 = vadd.f32 0.0, %v6024
    %6026 = vdwg.mxu0
    %6027 = vmatprep.subr.mxu0 0.0
    %6028 = vmatpush1.msra.mxu0 0.0
    %6029 = vmatprep.subr.mxu0 0.0
    %6030 = vmatpush1.msra.mxu0 0.0
    %6031 = vmatprep.subr.mxu0 0.0
    %6032 = vmatpush1.msra.mxu0 0.0
    %6033 = vmatprep.subr.mxu0 0.0
    %6034 = vmatpush1.msra.mxu0 0.0
    %6035 = vmatprep.subr.mxu0 0.0
    %6036 = vmatpush1.msra.mxu0 0.0
    %6037 = vmatprep.subr.mxu0 0.0
    %6038 = vmatpush1.msra.mxu0 0.0
    %6039 = vmatprep.subr.mxu0 0.0
    %6040 = vmatpush1.msra.mxu0 0.0
    %6041 = vmatprep.subr.mxu0 0.0
    %6042 = vmatpush1.msra.mxu0 0.0
    %6043 = vmatprep.subr.mxu0 0.0
    %6044 = vmatpush1.msra.mxu0 0.0
    %6045 = vmatprep.subr.mxu0 0.0
    %6046 = vmatpush1.msra.mxu0 0.0
    %6047 = vmatprep.subr.mxu0 0.0
    %6048 = vmatpush1.msra.mxu0 0.0
    %6049 = vmatprep.subr.mxu0 0.0
    %6050 = vmatpush1.msra.mxu0 0.0
    %6051 = vmatprep.subr.mxu0 0.0
    %6052 = vmatpush1.msra.mxu0 0.0
    %6053 = vmatprep.subr.mxu0 0.0
    %6054 = vmatpush1.msra.mxu0 0.0
    %6055 = vmatprep.subr.mxu0 0.0
    %6056 = vmatpush1.msra.mxu0 0.0
    %6057 = vmatprep.subr.mxu0 %v184
    %6058 = vmatpush1.msra.mxu0 %v183
    %6059 = vmatprep.subr.mxu0 0.0
    %6060 = vmatpush2.msra.mxu0 0.0
    %6061 = vmatprep.subr.mxu0 0.0
    %6062 = vmatpush2.msra.mxu0 0.0
    %6063 = vmatprep.subr.mxu0 0.0
    %6064 = vmatpush2.msra.mxu0 0.0
    %6065 = vmatprep.subr.mxu0 0.0
    %6066 = vmatpush2.msra.mxu0 0.0
    %6067 = vmatprep.subr.mxu0 0.0
    %6068 = vmatpush2.msra.mxu0 0.0
    %6069 = vmatprep.subr.mxu0 0.0
    %6070 = vmatpush2.msra.mxu0 0.0
    %6071 = vmatprep.subr.mxu0 0.0
    %6072 = vmatpush2.msra.mxu0 0.0
    %6073 = vmatprep.subr.mxu0 0.0
    %6074 = vmatpush2.msra.mxu0 0.0
    %6075 = vmatprep.subr.mxu0 0.0
    %6076 = vmatpush2.msra.mxu0 0.0
    %6077 = vmatprep.subr.mxu0 0.0
    %6078 = vmatpush2.msra.mxu0 0.0
    %6079 = vmatprep.subr.mxu0 0.0
    %6080 = vmatpush2.msra.mxu0 0.0
    %6081 = vmatprep.subr.mxu0 0.0
    %6082 = vmatpush2.msra.mxu0 0.0
    %6083 = vmatprep.subr.mxu0 0.0
    %6084 = vmatpush2.msra.mxu0 0.0
    %6085 = vmatprep.subr.mxu0 0.0
    %6086 = vmatpush2.msra.mxu0 0.0
    %6087 = vmatprep.subr.mxu0 0.0
    %6088 = vmatpush2.msra.mxu0 0.0
    %6089 = vmatprep.subr.mxu0 0.0
    %6090 = vmatpush2.msra.mxu0 0.0
    %6091 = vmatprep.mubr.f32.mxu0 0.0
    %6092 = vmatmul.mubr.f32.gmra.mxu0 %v5954
    %v6093 = vpop.f32.mrf.mxu0
    %v6094 = vadd.f32 0.0, %v6093
    %v6095 = vpop.f32.mrf.mxu0
    %v6096 = vadd.f32 0.0, %v6095
    %6097 = vdwg.mxu0
    %v6098 = vld [vmem:[#allocation8] sm:$0xff]
    %v6099 = vld [vmem:[#allocation8 + $0x8] sm:$0xff]
    %v6100 = vld [vmem:[#allocation8 + $0x10] sm:$0xff]
    %v6101 = vld [vmem:[#allocation8 + $0x18] sm:$0xff]
    %v6102 = vld [vmem:[#allocation8 + $0x20] sm:$0xff]
    %v6103 = vld [vmem:[#allocation8 + $0x28] sm:$0xff]
    %v6104 = vld [vmem:[#allocation8 + $0x30] sm:$0xff]
    %v6105 = vld [vmem:[#allocation8 + $0x38] sm:$0xff]
    %v6106 = vld [vmem:[#allocation8 + $0x40] sm:$0xff]
    %v6107 = vld [vmem:[#allocation8 + $0x48] sm:$0xff]
    %v6108 = vld [vmem:[#allocation8 + $0x50] sm:$0xff]
    %v6109 = vld [vmem:[#allocation8 + $0x58] sm:$0xff]
    %v6110 = vld [vmem:[#allocation8 + $0x60] sm:$0xff]
    %v6111 = vld [vmem:[#allocation8 + $0x68] sm:$0xff]
    %v6112 = vld [vmem:[#allocation8 + $0x70] sm:$0xff]
    %v6113 = vld [vmem:[#allocation8 + $0x78] sm:$0xff]
    %v6114 = vld [vmem:[#allocation8 + $0x80] sm:$0xff]
    %v6115 = vld [vmem:[#allocation8 + $0x88] sm:$0xff]
    %v6116 = vld [vmem:[#allocation8 + $0x90] sm:$0xff]
    %v6117 = vld [vmem:[#allocation8 + $0x98] sm:$0xff]
    %v6118 = vld [vmem:[#allocation8 + $0xa0] sm:$0xff]
    %v6119 = vld [vmem:[#allocation8 + $0xa8] sm:$0xff]
    %v6120 = vld [vmem:[#allocation8 + $0xb0] sm:$0xff]
    %v6121 = vld [vmem:[#allocation8 + $0xb8] sm:$0xff]
    %v6122 = vld [vmem:[#allocation8 + $0xc0] sm:$0xff]
    %v6123 = vld [vmem:[#allocation8 + $0xc8] sm:$0xff]
    %v6124 = vld [vmem:[#allocation8 + $0xd0] sm:$0xff]
    %v6125 = vld [vmem:[#allocation8 + $0xd8] sm:$0xff]
    %v6126 = vld [vmem:[#allocation8 + $0xe0] sm:$0xff]
    %v6127 = vld [vmem:[#allocation8 + $0xe8] sm:$0xff]
    %v6128 = vld [vmem:[#allocation8 + $0xf0] sm:$0xff]
    %v6129 = vld [vmem:[#allocation8 + $0xf8] sm:$0xff]
    %v6130 = vld [vmem:[#allocation8 + $0x100] sm:$0xff]
    %v6131 = vld [vmem:[#allocation8 + $0x108] sm:$0xff]
    %v6132 = vld [vmem:[#allocation8 + $0x110] sm:$0xff]
    %v6133 = vld [vmem:[#allocation8 + $0x118] sm:$0xff]
    %v6134 = vld [vmem:[#allocation8 + $0x120] sm:$0xff]
    %v6135 = vld [vmem:[#allocation8 + $0x128] sm:$0xff]
    %v6136 = vld [vmem:[#allocation8 + $0x130] sm:$0xff]
    %v6137 = vld [vmem:[#allocation8 + $0x138] sm:$0xff]
    %v6138 = vld [vmem:[#allocation8 + $0x140] sm:$0xff]
    %v6139 = vld [vmem:[#allocation8 + $0x148] sm:$0xff]
    %v6140 = vld [vmem:[#allocation8 + $0x150] sm:$0xff]
    %v6141 = vld [vmem:[#allocation8 + $0x158] sm:$0xff]
    %v6142 = vld [vmem:[#allocation8 + $0x160] sm:$0xff]
    %v6143 = vld [vmem:[#allocation8 + $0x168] sm:$0xff]
    %v6144 = vld [vmem:[#allocation8 + $0x170] sm:$0xff]
    %v6145 = vld [vmem:[#allocation8 + $0x178] sm:$0xff]
    %v6146 = vld [vmem:[#allocation8 + $0x180] sm:$0xff]
    %v6147 = vld [vmem:[#allocation8 + $0x188] sm:$0xff]
    %v6148 = vld [vmem:[#allocation8 + $0x190] sm:$0xff]
    %v6149 = vld [vmem:[#allocation8 + $0x198] sm:$0xff]
    %v6150 = vld [vmem:[#allocation8 + $0x1a0] sm:$0xff]
    %v6151 = vld [vmem:[#allocation8 + $0x1a8] sm:$0xff]
    %v6152 = vld [vmem:[#allocation8 + $0x1b0] sm:$0xff]
    %v6153 = vld [vmem:[#allocation8 + $0x1b8] sm:$0xff]
    %v6154 = vld [vmem:[#allocation8 + $0x1c0] sm:$0xff]
    %v6155 = vld [vmem:[#allocation8 + $0x1c8] sm:$0xff]
    %v6156 = vld [vmem:[#allocation8 + $0x1d0] sm:$0xff]
    %v6157 = vld [vmem:[#allocation8 + $0x1d8] sm:$0xff]
    %v6158 = vld [vmem:[#allocation8 + $0x1e0] sm:$0xff]
    %v6159 = vld [vmem:[#allocation8 + $0x1e8] sm:$0xff]
    %v6160 = vld [vmem:[#allocation8 + $0x1f0] sm:$0xff]
    %v6161 = vld [vmem:[#allocation8 + $0x1f8] sm:$0xff]
    %v6162 = vlaneseq
    %v6163 = vshrl.u32 %v6162, 7
    %v6164 = vsub.s32 0, %v6163
    %v6165 = vrot.slane %v6023, %v6164
    %v6166 = vlaneseq
    %v6167 = vshrl.u32 %v6166, 7
    %v6168 = vsub.s32 0, %v6167
    %v6169 = vrot.slane %v6025, %v6168
    %v6170 = vlaneseq
    %v6171 = vshrl.u32 %v6170, 7
    %v6172 = vsub.s32 0, %v6171
    %v6173 = vrot.slane %v6094, %v6172
    %v6174 = vlaneseq
    %v6175 = vshrl.u32 %v6174, 7
    %v6176 = vsub.s32 0, %v6175
    %v6177 = vrot.slane %v6096, %v6176
    %v6242 = vunpack.c.l.b16 %v6098
    %v6243 = vunpack.c.h.b16 %v6098
    %v6244 = vunpack.c.l.b16 %v6099
    %v6245 = vunpack.c.h.b16 %v6099
    %v6246 = vunpack.c.l.b16 %v6100
    %v6247 = vunpack.c.h.b16 %v6100
    %v6248 = vunpack.c.l.b16 %v6101
    %v6249 = vunpack.c.h.b16 %v6101
    %v6250 = vunpack.c.l.b16 %v6102
    %v6251 = vunpack.c.h.b16 %v6102
    %v6252 = vunpack.c.l.b16 %v6103
    %v6253 = vunpack.c.h.b16 %v6103
    %v6254 = vunpack.c.l.b16 %v6104
    %v6255 = vunpack.c.h.b16 %v6104
    %v6256 = vunpack.c.l.b16 %v6105
    %v6257 = vunpack.c.h.b16 %v6105
    %v6258 = vunpack.c.l.b16 %v6106
    %v6259 = vunpack.c.h.b16 %v6106
    %v6260 = vunpack.c.l.b16 %v6107
    %v6261 = vunpack.c.h.b16 %v6107
    %v6262 = vunpack.c.l.b16 %v6108
    %v6263 = vunpack.c.h.b16 %v6108
    %v6264 = vunpack.c.l.b16 %v6109
    %v6265 = vunpack.c.h.b16 %v6109
    %v6266 = vunpack.c.l.b16 %v6110
    %v6267 = vunpack.c.h.b16 %v6110
    %v6268 = vunpack.c.l.b16 %v6111
    %v6269 = vunpack.c.h.b16 %v6111
    %v6270 = vunpack.c.l.b16 %v6112
    %v6271 = vunpack.c.h.b16 %v6112
    %v6272 = vunpack.c.l.b16 %v6113
    %v6273 = vunpack.c.h.b16 %v6113
    %v6274 = vunpack.c.l.b16 %v6114
    %v6275 = vunpack.c.h.b16 %v6114
    %v6276 = vunpack.c.l.b16 %v6115
    %v6277 = vunpack.c.h.b16 %v6115
    %v6278 = vunpack.c.l.b16 %v6116
    %v6279 = vunpack.c.h.b16 %v6116
    %v6280 = vunpack.c.l.b16 %v6117
    %v6281 = vunpack.c.h.b16 %v6117
    %v6282 = vunpack.c.l.b16 %v6118
    %v6283 = vunpack.c.h.b16 %v6118
    %v6284 = vunpack.c.l.b16 %v6119
    %v6285 = vunpack.c.h.b16 %v6119
    %v6286 = vunpack.c.l.b16 %v6120
    %v6287 = vunpack.c.h.b16 %v6120
    %v6288 = vunpack.c.l.b16 %v6121
    %v6289 = vunpack.c.h.b16 %v6121
    %v6290 = vunpack.c.l.b16 %v6122
    %v6291 = vunpack.c.h.b16 %v6122
    %v6292 = vunpack.c.l.b16 %v6123
    %v6293 = vunpack.c.h.b16 %v6123
    %v6294 = vunpack.c.l.b16 %v6124
    %v6295 = vunpack.c.h.b16 %v6124
    %v6296 = vunpack.c.l.b16 %v6125
    %v6297 = vunpack.c.h.b16 %v6125
    %v6298 = vunpack.c.l.b16 %v6126
    %v6299 = vunpack.c.h.b16 %v6126
    %v6300 = vunpack.c.l.b16 %v6127
    %v6301 = vunpack.c.h.b16 %v6127
    %v6302 = vunpack.c.l.b16 %v6128
    %v6303 = vunpack.c.h.b16 %v6128
    %v6304 = vunpack.c.l.b16 %v6129
    %v6305 = vunpack.c.h.b16 %v6129
    %v6306 = vunpack.c.l.b16 %v6130
    %v6307 = vunpack.c.h.b16 %v6130
    %v6308 = vunpack.c.l.b16 %v6131
    %v6309 = vunpack.c.h.b16 %v6131
    %v6310 = vunpack.c.l.b16 %v6132
    %v6311 = vunpack.c.h.b16 %v6132
    %v6312 = vunpack.c.l.b16 %v6133
    %v6313 = vunpack.c.h.b16 %v6133
    %v6314 = vunpack.c.l.b16 %v6134
    %v6315 = vunpack.c.h.b16 %v6134
    %v6316 = vunpack.c.l.b16 %v6135
    %v6317 = vunpack.c.h.b16 %v6135
    %v6318 = vunpack.c.l.b16 %v6136
    %v6319 = vunpack.c.h.b16 %v6136
    %v6320 = vunpack.c.l.b16 %v6137
    %v6321 = vunpack.c.h.b16 %v6137
    %v6322 = vunpack.c.l.b16 %v6138
    %v6323 = vunpack.c.h.b16 %v6138
    %v6324 = vunpack.c.l.b16 %v6139
    %v6325 = vunpack.c.h.b16 %v6139
    %v6326 = vunpack.c.l.b16 %v6140
    %v6327 = vunpack.c.h.b16 %v6140
    %v6328 = vunpack.c.l.b16 %v6141
    %v6329 = vunpack.c.h.b16 %v6141
    %v6330 = vunpack.c.l.b16 %v6142
    %v6331 = vunpack.c.h.b16 %v6142
    %v6332 = vunpack.c.l.b16 %v6143
    %v6333 = vunpack.c.h.b16 %v6143
    %v6334 = vunpack.c.l.b16 %v6144
    %v6335 = vunpack.c.h.b16 %v6144
    %v6336 = vunpack.c.l.b16 %v6145
    %v6337 = vunpack.c.h.b16 %v6145
    %v6338 = vunpack.c.l.b16 %v6146
    %v6339 = vunpack.c.h.b16 %v6146
    %v6340 = vunpack.c.l.b16 %v6147
    %v6341 = vunpack.c.h.b16 %v6147
    %v6342 = vunpack.c.l.b16 %v6148
    %v6343 = vunpack.c.h.b16 %v6148
    %v6344 = vunpack.c.l.b16 %v6149
    %v6345 = vunpack.c.h.b16 %v6149
    %v6346 = vunpack.c.l.b16 %v6150
    %v6347 = vunpack.c.h.b16 %v6150
    %v6348 = vunpack.c.l.b16 %v6151
    %v6349 = vunpack.c.h.b16 %v6151
    %v6350 = vunpack.c.l.b16 %v6152
    %v6351 = vunpack.c.h.b16 %v6152
    %v6352 = vunpack.c.l.b16 %v6153
    %v6353 = vunpack.c.h.b16 %v6153
    %v6354 = vunpack.c.l.b16 %v6154
    %v6355 = vunpack.c.h.b16 %v6154
    %v6356 = vunpack.c.l.b16 %v6155
    %v6357 = vunpack.c.h.b16 %v6155
    %v6358 = vunpack.c.l.b16 %v6156
    %v6359 = vunpack.c.h.b16 %v6156
    %v6360 = vunpack.c.l.b16 %v6157
    %v6361 = vunpack.c.h.b16 %v6157
    %v6362 = vunpack.c.l.b16 %v6158
    %v6363 = vunpack.c.h.b16 %v6158
    %v6364 = vunpack.c.l.b16 %v6159
    %v6365 = vunpack.c.h.b16 %v6159
    %v6366 = vunpack.c.l.b16 %v6160
    %v6367 = vunpack.c.h.b16 %v6160
    %v6368 = vunpack.c.l.b16 %v6161
    %v6369 = vunpack.c.h.b16 %v6161
    %v6370 = vpack.c.b16 %v6246, %v6242
    %v6371 = vpack.c.b16 %v6247, %v6243
    %v6372 = vpack.c.b16 %v6248, %v6244
    %v6373 = vpack.c.b16 %v6249, %v6245
    %v6374 = vpack.c.b16 %v6254, %v6250
    %v6375 = vpack.c.b16 %v6255, %v6251
    %v6376 = vpack.c.b16 %v6256, %v6252
    %v6377 = vpack.c.b16 %v6257, %v6253
    %v6378 = vpack.c.b16 %v6262, %v6258
    %v6379 = vpack.c.b16 %v6263, %v6259
    %v6380 = vpack.c.b16 %v6264, %v6260
    %v6381 = vpack.c.b16 %v6265, %v6261
    %v6382 = vpack.c.b16 %v6270, %v6266
    %v6383 = vpack.c.b16 %v6271, %v6267
    %v6384 = vpack.c.b16 %v6272, %v6268
    %v6385 = vpack.c.b16 %v6273, %v6269
    %v6386 = vpack.c.b16 %v6278, %v6274
    %v6387 = vpack.c.b16 %v6279, %v6275
    %v6388 = vpack.c.b16 %v6280, %v6276
    %v6389 = vpack.c.b16 %v6281, %v6277
    %v6390 = vpack.c.b16 %v6286, %v6282
    %v6391 = vpack.c.b16 %v6287, %v6283
    %v6392 = vpack.c.b16 %v6288, %v6284
    %v6393 = vpack.c.b16 %v6289, %v6285
    %v6394 = vpack.c.b16 %v6294, %v6290
    %v6395 = vpack.c.b16 %v6295, %v6291
    %v6396 = vpack.c.b16 %v6296, %v6292
    %v6397 = vpack.c.b16 %v6297, %v6293
    %v6398 = vpack.c.b16 %v6302, %v6298
    %v6399 = vpack.c.b16 %v6303, %v6299
    %v6400 = vpack.c.b16 %v6304, %v6300
    %v6401 = vpack.c.b16 %v6305, %v6301
    %v6402 = vpack.c.b16 %v6310, %v6306
    %v6403 = vpack.c.b16 %v6311, %v6307
    %v6404 = vpack.c.b16 %v6312, %v6308
    %v6405 = vpack.c.b16 %v6313, %v6309
    %v6406 = vpack.c.b16 %v6318, %v6314
    %v6407 = vpack.c.b16 %v6319, %v6315
    %v6408 = vpack.c.b16 %v6320, %v6316
    %v6409 = vpack.c.b16 %v6321, %v6317
    %v6410 = vpack.c.b16 %v6326, %v6322
    %v6411 = vpack.c.b16 %v6327, %v6323
    %v6412 = vpack.c.b16 %v6328, %v6324
    %v6413 = vpack.c.b16 %v6329, %v6325
    %v6414 = vpack.c.b16 %v6334, %v6330
    %v6415 = vpack.c.b16 %v6335, %v6331
    %v6416 = vpack.c.b16 %v6336, %v6332
    %v6417 = vpack.c.b16 %v6337, %v6333
    %v6418 = vpack.c.b16 %v6342, %v6338
    %v6419 = vpack.c.b16 %v6343, %v6339
    %v6420 = vpack.c.b16 %v6344, %v6340
    %v6421 = vpack.c.b16 %v6345, %v6341
    %v6422 = vpack.c.b16 %v6350, %v6346
    %v6423 = vpack.c.b16 %v6351, %v6347
    %v6424 = vpack.c.b16 %v6352, %v6348
    %v6425 = vpack.c.b16 %v6353, %v6349
    %v6426 = vpack.c.b16 %v6358, %v6354
    %v6427 = vpack.c.b16 %v6359, %v6355
    %v6428 = vpack.c.b16 %v6360, %v6356
    %v6429 = vpack.c.b16 %v6361, %v6357
    %v6430 = vpack.c.b16 %v6366, %v6362
    %v6431 = vpack.c.b16 %v6367, %v6363
    %v6432 = vpack.c.b16 %v6368, %v6364
    %v6433 = vpack.c.b16 %v6369, %v6365
    %6498 = vmatprep.subr.bf16.mxu0 %v6399
    %6499 = vmatpush1.bf16.msra.mxu0 %v6398
    %6500 = vmatprep.subr.bf16.mxu0 %v6395
    %6501 = vmatpush1.bf16.msra.mxu0 %v6394
    %6502 = vmatprep.subr.bf16.mxu0 %v6391
    %6503 = vmatpush1.bf16.msra.mxu0 %v6390
    %6504 = vmatprep.subr.bf16.mxu0 %v6387
    %6505 = vmatpush1.bf16.msra.mxu0 %v6386
    %6506 = vmatprep.subr.bf16.mxu0 %v6383
    %6507 = vmatpush1.bf16.msra.mxu0 %v6382
    %6508 = vmatprep.subr.bf16.mxu0 %v6379
    %6509 = vmatpush1.bf16.msra.mxu0 %v6378
    %6510 = vmatprep.subr.bf16.mxu0 %v6375
    %6511 = vmatpush1.bf16.msra.mxu0 %v6374
    %6512 = vmatprep.subr.bf16.mxu0 %v6371
    %6513 = vmatpush1.bf16.msra.mxu0 %v6370
    %6514 = vmatprep.subr.bf16.mxu0 %v6431
    %6515 = vmatpush2.bf16.msra.mxu0 %v6430
    %6516 = vmatprep.subr.bf16.mxu0 %v6427
    %6517 = vmatpush2.bf16.msra.mxu0 %v6426
    %6518 = vmatprep.subr.bf16.mxu0 %v6423
    %6519 = vmatpush2.bf16.msra.mxu0 %v6422
    %6520 = vmatprep.subr.bf16.mxu0 %v6419
    %6521 = vmatpush2.bf16.msra.mxu0 %v6418
    %6522 = vmatprep.subr.bf16.mxu0 %v6415
    %6523 = vmatpush2.bf16.msra.mxu0 %v6414
    %6524 = vmatprep.subr.bf16.mxu0 %v6411
    %6525 = vmatpush2.bf16.msra.mxu0 %v6410
    %6526 = vmatprep.subr.bf16.mxu0 %v6407
    %6527 = vmatpush2.bf16.msra.mxu0 %v6406
    %6528 = vmatprep.subr.bf16.mxu0 %v6403
    %6529 = vmatpush2.bf16.msra.mxu0 %v6402
    %6530 = vmatprep.mubr.bf16.mxu0 %v186
    %6531 = vmatmul.mubr.bf16.gmra.mxu0 %v185
    %v6532 = vpop.f32.mrf.mxu0
    %v6533 = vadd.f32 %v6165, %v6532
    %v6534 = vpop.f32.mrf.mxu0
    %v6535 = vadd.f32 %v6169, %v6534
    %v6536 = vpop.f32.mrf.mxu0
    %v6537 = vadd.f32 %v6165, %v6536
    %v6538 = vpop.f32.mrf.mxu0
    %v6539 = vadd.f32 %v6169, %v6538
    %6540 = vdwg.mxu0
    %6541 = vmatprep.subr.bf16.mxu0 %v6401
    %6542 = vmatpush1.bf16.msra.mxu0 %v6400
    %6543 = vmatprep.subr.bf16.mxu0 %v6397
    %6544 = vmatpush1.bf16.msra.mxu0 %v6396
    %6545 = vmatprep.subr.bf16.mxu0 %v6393
    %6546 = vmatpush1.bf16.msra.mxu0 %v6392
    %6547 = vmatprep.subr.bf16.mxu0 %v6389
    %6548 = vmatpush1.bf16.msra.mxu0 %v6388
    %6549 = vmatprep.subr.bf16.mxu0 %v6385
    %6550 = vmatpush1.bf16.msra.mxu0 %v6384
    %6551 = vmatprep.subr.bf16.mxu0 %v6381
    %6552 = vmatpush1.bf16.msra.mxu0 %v6380
    %6553 = vmatprep.subr.bf16.mxu0 %v6377
    %6554 = vmatpush1.bf16.msra.mxu0 %v6376
    %6555 = vmatprep.subr.bf16.mxu0 %v6373
    %6556 = vmatpush1.bf16.msra.mxu0 %v6372
    %6557 = vmatprep.subr.bf16.mxu0 %v6433
    %6558 = vmatpush2.bf16.msra.mxu0 %v6432
    %6559 = vmatprep.subr.bf16.mxu0 %v6429
    %6560 = vmatpush2.bf16.msra.mxu0 %v6428
    %6561 = vmatprep.subr.bf16.mxu0 %v6425
    %6562 = vmatpush2.bf16.msra.mxu0 %v6424
    %6563 = vmatprep.subr.bf16.mxu0 %v6421
    %6564 = vmatpush2.bf16.msra.mxu0 %v6420
    %6565 = vmatprep.subr.bf16.mxu0 %v6417
    %6566 = vmatpush2.bf16.msra.mxu0 %v6416
    %6567 = vmatprep.subr.bf16.mxu0 %v6413
    %6568 = vmatpush2.bf16.msra.mxu0 %v6412
    %6569 = vmatprep.subr.bf16.mxu0 %v6409
    %6570 = vmatpush2.bf16.msra.mxu0 %v6408
    %6571 = vmatprep.subr.bf16.mxu0 %v6405
    %6572 = vmatpush2.bf16.msra.mxu0 %v6404
    %6573 = vmatprep.mubr.bf16.mxu0 %v186
    %6574 = vmatmul.mubr.bf16.gmra.mxu0 %v185
    %v6575 = vpop.f32.mrf.mxu0
    %v6576 = vadd.f32 %v6173, %v6575
    %v6577 = vpop.f32.mrf.mxu0
    %v6578 = vadd.f32 %v6177, %v6577
    %v6579 = vpop.f32.mrf.mxu0
    %v6580 = vadd.f32 %v6173, %v6579
    %v6581 = vpop.f32.mrf.mxu0
    %v6582 = vadd.f32 %v6177, %v6581
    %6583 = vdwg.mxu0
    %v6584 = vadd.f32 %v5944, %v6533
    %v6585 = vadd.f32 %v5945, %v6535
    %v6586 = vadd.f32 %v5946, %v6576
    %v6587 = vadd.f32 %v5947, %v6578
    %v6588 = vadd.f32 %v5948, %v6537
    %v6589 = vadd.f32 %v5949, %v6539
    %v6590 = vadd.f32 %v5950, %v6580
    %v6591 = vadd.f32 %v5951, %v6582
    %v6592 = vmax.f32 %v6584, 0.0
    %v6593 = vmax.f32 %v6585, 0.0
    %v6594 = vmax.f32 %v6586, 0.0
    %v6595 = vmax.f32 %v6587, 0.0
    %v6596 = vmax.f32 %v6588, 0.0
    %v6597 = vmax.f32 %v6589, 0.0
    %v6598 = vmax.f32 %v6590, 0.0
    %v6599 = vmax.f32 %v6591, 0.0
    %6600 = vst [vmem:[#allocation13] sm:$0xff] %v6592
    %6601 = vst [vmem:[#allocation13 + $0x8] sm:$0xff] %v6593
    %6602 = vst [vmem:[#allocation13 + $0x10] sm:$0xff] %v6594
    %6603 = vst [vmem:[#allocation13 + $0x18] sm:$0xff] %v6595
    %6604 = vst [vmem:[#allocation13 + $0x20] sm:$0xff] %v6596
    %6605 = vst [vmem:[#allocation13 + $0x28] sm:$0xff] %v6597
    %6606 = vst [vmem:[#allocation13 + $0x30] sm:$0xff] %v6598
    %6607 = vst [vmem:[#allocation13 + $0x38] sm:$0xff] %v6599
    // Predicated region
    $region58: #{tpu_custom_call.1} parent=1 // pred_check
      _
    $region59: #{tpu_custom_call.1} parent=1 // pred_check_branch
      %6609 = sbr.rel (0) target = $region61
    $region60: #{tpu_custom_call.1} parent=1 // pred_region
      %s6611 = ssub.s32 1024, 1024
      %6612 = vsyncadd [#allocation4], %s6611
      %s6613 = sshll.u32 [#allocation13], 4
      %s6614 = int_to_ptr.vmem [resolvable:$true] %s6613
      %6619 = dma.vmem_to_hbm [thread:$0]  %s6614, 1024, %s8, [#allocation4], 512, 512, 32
    $region61: #{tpu_custom_call.1} parent=1 // pred_fallthru
      _
    // Predicated region
    $region62: #{tpu_custom_call.1} parent=1 // pred_check
      _
    $region63: #{tpu_custom_call.1} parent=1 // pred_check_branch
      %6621 = sbr.rel (0) target = $region65
    $region64: #{tpu_custom_call.1} parent=1 // pred_region
      %6622 = dma.done [#allocation4], 1024
    $region65: #{tpu_custom_call.1} parent=1 // pred_fallthru
      _
    %6623 = vsyncpa [#allocation3], 1
    %6624 = vsyncpa [#allocation6], 1
    %6625 = vsyncpa [#allocation9], 1
    %6626 = vsyncpa [#allocation12], 1
    %6627 = vsyncpa [#allocation4], 1

</llo_original>
